<compile_context>
chip_gen: v7x
topology: tpu7x:2x2x1
jax: 0.10.0
libtpu: 0.0.40
codegen_flags: <defaults>
</compile_context>

<pallas_src>
import functools
import math

import jax
import jax.numpy as jnp
from jax import lax
from jax.experimental import pallas as pl
from jax.experimental.pallas import tpu as pltpu


# ----------------------------- helpers -------------------------------------

def _cparams(n_grid_axes):
    return pltpu.CompilerParams(
        dimension_semantics=("parallel",) * n_grid_axes,
        vmem_limit_bytes=48 * 1024 * 1024,   # fits v7x's 64 MiB physical VMEM
    )


def _round_up(x, m):
    return ((x + m - 1) // m) * m


def _gelu(y):
    # TODO(synk): nn.GELU() default is exact erf-GELU; tanh approximation is
    # used for guaranteed Mosaic lowering (max abs err ~1e-3).
    c = math.sqrt(2.0 / math.pi)
    return 0.5 * y * (1.0 + jnp.tanh(c * (y + 0.044715 * y * y * y)))


def _layernorm(x, gamma, beta, eps=1e-5):
    mu = jnp.mean(x, axis=-1, keepdims=True)
    var = jnp.mean(jnp.square(x - mu), axis=-1, keepdims=True)
    return (x - mu) * lax.rsqrt(var + eps) * gamma + beta


# ----------------------------- Pallas kernels ------------------------------

def _linear_kernel(x_ref, w_ref, b_ref, o_ref):
    y = jnp.dot(x_ref[...], w_ref[...],
                preferred_element_type=jnp.float32) + b_ref[...]
    o_ref[...] = y.astype(o_ref.dtype)


def linear_bf16(x, w, b, *, out_dtype=jnp.float32, tile_m=256):
    """y = x @ w + b, x/w in bf16, f32 accumulation.

    Tiled over the row (token) axis with dense 256-row tiles; rows are
    zero-padded up to a tile multiple so the MXU never sees tiny tiles.
    """
    M, K = x.shape
    N = w.shape[1]
    tm = min(tile_m, _round_up(M, 16))
    M_pad = _round_up(M, tm)
    if M_pad != M:
        x = jnp.pad(x, ((0, M_pad - M), (0, 0)))
    out = pl.pallas_call(
        _linear_kernel,
        grid=(M_pad // tm,),
        in_specs=[
            pl.BlockSpec((tm, K), lambda i: (i, 0)),
            pl.BlockSpec((K, N), lambda i: (0, 0)),
            pl.BlockSpec((1, N), lambda i: (0, 0)),
        ],
        out_specs=pl.BlockSpec((tm, N), lambda i: (i, 0)),
        out_shape=jax.ShapeDtypeStruct((M_pad, N), out_dtype),
        compiler_params=_cparams(1),
    )(x, w, b.reshape(1, N))
    return out[:M] if M_pad != M else out


def _block_kernel(x_ref, win_ref, bin_ref, wo_ref, bo_ref, g1_ref, be1_ref,
                  w1_ref, b1_ref, w2_ref, b2_ref, g2_ref, be2_ref, o_ref,
                  *, n_head, s_valid):
    """Fused transformer block for one batch element.

    QKV proj -> per-head softmax(QK^T)V accumulated into the output proj ->
    residual + LN1 -> linear/GELU/linear -> residual + LN2.
    q is pre-scaled by 1/sqrt(Dh) via weight folding in the wrapper.
    """
    S = x_ref.shape[1]
    D = x_ref.shape[2]
    Dh = D // n_head

    x_bf = x_ref[0]                                       # [S, D] bf16
    x32 = x_bf.astype(jnp.float32)

    # QKV projection (weights resident in VMEM, bf16 MXU, f32 acc).
    qkv = jnp.dot(x_bf, win_ref[...],
                  preferred_element_type=jnp.float32) + bin_ref[...]   # [S, 3D]

    # Additive key-padding bias (pad keys -> -1e30 before softmax).
    if s_valid < S:
        col = lax.broadcasted_iota(jnp.int32, (1, S), 1)
        kbias = jnp.where(col < s_valid, 0.0, -1e30).astype(jnp.float32)
    else:
        kbias = None

    acc = jnp.zeros((S, D), jnp.float32)
    for h in range(n_head):                                # static unroll
        q = qkv[:, h * Dh:(h + 1) * Dh].astype(jnp.bfloat16)
        k = qkv[:, D + h * Dh:D + (h + 1) * Dh].astype(jnp.bfloat16)
        v = qkv[:, 2 * D + h * Dh:2 * D + (h + 1) * Dh].astype(jnp.bfloat16)
        s = lax.dot_general(q, k, (((1,), (1,)), ((), ())),
                            preferred_element_type=jnp.float32)        # [S, S]
        if kbias is not None:
            s = s + kbias
        s = s - jnp.max(s, axis=-1, keepdims=True)
        p = jnp.exp(s)
        p = p * pl.reciprocal(jnp.sum(p, axis=-1, keepdims=True), approx=True)
        ctx = jnp.dot(p.astype(jnp.bfloat16), v,
                      preferred_element_type=jnp.float32)              # [S, Dh]
        # Accumulate directly into the output projection (wo: [H, Dh, D]).
        acc = acc + jnp.dot(ctx.astype(jnp.bfloat16), wo_ref[h],
                            preferred_element_type=jnp.float32)

    # TODO(synk): AttentionBlock.forward is `pass` in the reference; using the
    # standard post-norm transformer block: LN1(x+MHA(x)); LN2(h+FFN(h)).
    h1 = _layernorm(x32 + acc + bo_ref[...], g1_ref[...], be1_ref[...])

    y = jnp.dot(h1.astype(jnp.bfloat16), w1_ref[...],
                preferred_element_type=jnp.float32) + b1_ref[...]
    y = _gelu(y)
    y = jnp.dot(y.astype(jnp.bfloat16), w2_ref[...],
                preferred_element_type=jnp.float32) + b2_ref[...]
    o_ref[0] = _layernorm(h1 + y, g2_ref[...], be2_ref[...]).astype(o_ref.dtype)


def attention_block(x, blk, n_head, s_valid):
    """x: [B, S_pad, D] bf16 -> [B, S_pad, D] bf16 (one fused pallas_call)."""
    B, S, D = x.shape
    Dh = D // n_head
    return pl.pallas_call(
        functools.partial(_block_kernel, n_head=n_head, s_valid=s_valid),
        grid=(B,),
        in_specs=[
            pl.BlockSpec((1, S, D), lambda b: (b, 0, 0)),
            pl.BlockSpec((D, 3 * D), lambda b: (0, 0)),
            pl.BlockSpec((1, 3 * D), lambda b: (0, 0)),
            pl.BlockSpec((n_head, Dh, D), lambda b: (0, 0, 0)),
            pl.BlockSpec((1, D), lambda b: (0, 0)),
            pl.BlockSpec((1, D), lambda b: (0, 0)),
            pl.BlockSpec((1, D), lambda b: (0, 0)),
            pl.BlockSpec((D, D), lambda b: (0, 0)),
            pl.BlockSpec((1, D), lambda b: (0, 0)),
            pl.BlockSpec((D, D), lambda b: (0, 0)),
            pl.BlockSpec((1, D), lambda b: (0, 0)),
            pl.BlockSpec((1, D), lambda b: (0, 0)),
            pl.BlockSpec((1, D), lambda b: (0, 0)),
        ],
        out_specs=pl.BlockSpec((1, S, D), lambda b: (b, 0, 0)),
        out_shape=jax.ShapeDtypeStruct((B, S, D), jnp.bfloat16),
        compiler_params=_cparams(1),
    )(x, blk["w_in"], blk["b_in"], blk["w_out"], blk["b_out"],
      blk["ln1_g"], blk["ln1_b"],
      blk["ffn_w1"], blk["ffn_b1"], blk["ffn_w2"], blk["ffn_b2"],
      blk["ln2_g"], blk["ln2_b"])


# ------------------------------ model pieces -------------------------------

def slice_image(x, patch):
    """[B, C, H, W] -> [B, C, n_patch, patch*patch]."""
    B, C, H, W = x.shape
    nh, nw = H // patch, W // patch
    x = x.reshape(B, C, nh, patch, nw, patch)
    x = x.transpose(0, 1, 2, 4, 3, 5)
    return x.reshape(B, C, nh * nw, patch * patch)


def positional_encoding_table(S, D):
    pos = jnp.arange(S, dtype=jnp.float32)[:, None]
    div_term = jnp.exp(jnp.arange(0, D, 2, dtype=jnp.float32)
                       * (-math.log(10000.0) / D))
    pe = jnp.zeros((S, D), jnp.float32)
    pe = pe.at[:, 0::2].set(jnp.sin(pos * div_term))
    pe = pe.at[:, 1::2].set(jnp.cos(pos * div_term))
    return pe


def petnet_forward(params, x, *, n_head, patch=16):
    if x.ndim == 3:                       # [C, H, W] -> add batch dim
        x = x[None]
    B = x.shape[0]

    # 1. slice_image: [B, 3, H, W] -> [B, 3, P, patch*patch]
    patches = slice_image(x, patch)
    _, C, P, pp = patches.shape

    # 2. image_embedding: [B, 3, P, pp] -> [B, P, d_model]
    # TODO(synk): image_embedding Sequential contents unspecified in the
    # reference; implemented as a single Linear(3*patch*patch -> d_model).
    flat = patches.transpose(0, 2, 1, 3).reshape(B * P, C * pp)
    emb = linear_bf16(flat.astype(jnp.bfloat16),
                      params["embed_w"], params["embed_b"])
    D = emb.shape[-1]
    emb = emb.reshape(B, P, D)

    # 3. concat_cls_token: prepend a token of ones
    cls = jnp.ones((B, 1, D), jnp.float32)
    xs = jnp.concatenate([cls, emb], axis=1)             # [B, P+1, D] f32
    S = xs.shape[1]

    # 4. positional_encoding (sin/cos)
    xs = xs + positional_encoding_table(S, D)[None]

    # Pad the token axis to a multiple of 128 (lane/sublane-dense tiles);
    # pad keys are masked inside the attention kernel.
    S_pad = _round_up(S, 128)
    xs = jnp.pad(xs, ((0, 0), (0, S_pad - S), (0, 0))).astype(jnp.bfloat16)

    # 5. attention blocks (one fused pallas_call each)
    for blk in params["blocks"]:
        xs = attention_block(xs, blk, n_head, S)

    # 6. get_cls_token
    cls_tok = xs[:, 0, :].astype(jnp.float32)            # [B, D]

    # 7. cls_mlp — plain JAX (tiny [B,D]x[D,n_class]; a kernel is pure launch
    # overhead here).
    logits = cls_tok @ params["cls_w"] + params["cls_b"]
    return logits


# ------------------------------ param init / prep --------------------------

def init_params(key, d_model, n_att, n_class, patch_dim):
    def lin(k, fan_in, fan_out):
        kw, kb = jax.random.split(k)
        bound = 1.0 / math.sqrt(fan_in)
        w = jax.random.uniform(kw, (fan_in, fan_out), jnp.float32, -bound, bound)
        b = jax.random.uniform(kb, (fan_out,), jnp.float32, -bound, bound)
        return w, b

    keys = jax.random.split(key, 2 + n_att)
    params = {}
    params["embed_w"], params["embed_b"] = lin(keys[0], patch_dim, d_model)
    params["cls_w"], params["cls_b"] = lin(keys[1], d_model, n_class)
    blocks = []
    for i in range(n_att):
        ks = jax.random.split(keys[2 + i], 4)
        w_in, b_in = lin(ks[0], d_model, 3 * d_model)    # packed [q|k|v]
        w_out, b_out = lin(ks[1], d_model, d_model)
        w1, b1 = lin(ks[2], d_model, d_model)            # FeedForwardBlock: n_dim->n_dim
        w2, b2 = lin(ks[3], d_model, d_model)
        blocks.append(dict(
            w_in=w_in, b_in=b_in, w_out=w_out, b_out=b_out,
            ffn_w1=w1, ffn_b1=b1, ffn_w2=w2, ffn_b2=b2,
            ln1_g=jnp.ones((d_model,), jnp.float32),
            ln1_b=jnp.zeros((d_model,), jnp.float32),
            ln2_g=jnp.ones((d_model,), jnp.float32),
            ln2_b=jnp.zeros((d_model,), jnp.float32),
        ))
    params["blocks"] = blocks
    return params


def prepare_params(params, n_head):
    """One-time prep: bf16 weights, per-head W_out layout, folded q-scale."""
    D = params["embed_w"].shape[1]
    Dh = D // n_head
    scale = 1.0 / math.sqrt(Dh)
    out = {
        "embed_w": params["embed_w"].astype(jnp.bfloat16),
        "embed_b": params["embed_b"].astype(jnp.float32),
        "cls_w": params["cls_w"].astype(jnp.float32),
        "cls_b": params["cls_b"].astype(jnp.float32),
        "blocks": [],
    }
    for blk in params["blocks"]:
        # Fold the 1/sqrt(Dh) attention scale into the q projection.
        w_in = blk["w_in"].at[:, :D].multiply(scale)
        b_in = blk["b_in"].at[:D].multiply(scale)
        out["blocks"].append(dict(
            w_in=w_in.astype(jnp.bfloat16),
            b_in=b_in.reshape(1, 3 * D).astype(jnp.float32),
            w_out=blk["w_out"].reshape(n_head, Dh, D).astype(jnp.bfloat16),
            b_out=blk["b_out"].reshape(1, D).astype(jnp.float32),
            ffn_w1=blk["ffn_w1"].astype(jnp.bfloat16),
            ffn_b1=blk["ffn_b1"].reshape(1, D).astype(jnp.float32),
            ffn_w2=blk["ffn_w2"].astype(jnp.bfloat16),
            ffn_b2=blk["ffn_b2"].reshape(1, D).astype(jnp.float32),
            ln1_g=blk["ln1_g"].reshape(1, D).astype(jnp.float32),
            ln1_b=blk["ln1_b"].reshape(1, D).astype(jnp.float32),
            ln2_g=blk["ln2_g"].reshape(1, D).astype(jnp.float32),
            ln2_b=blk["ln2_b"].reshape(1, D).astype(jnp.float32),
        ))
    return out


# --------------------------------- main -------------------------------------

if __name__ == "__main__":
    # Small shapes consistent with the forward pass (reference uses
    # 3x224x224 / d_model=512 / 6 blocks; scaled down for a quick run).
    B, C, H, W = 2, 3, 32, 32           # 16x16 patches -> 4 patches + cls = 5 tokens
    d_model, n_head, n_att, n_class = 128, 4, 2, 2
    patch = 16

    key = jax.random.PRNGKey(0)
    pk, xk = jax.random.split(key)
    raw_params = init_params(pk, d_model, n_att, n_class, C * patch * patch)
    params = prepare_params(raw_params, n_head)
    x = jax.random.normal(xk, (B, C, H, W), jnp.float32)

    fwd = jax.jit(functools.partial(petnet_forward, n_head=n_head, patch=patch))
    logits = fwd(params, x)
    jax.block_until_ready(logits)
    assert logits.shape == (B, n_class), logits.shape
    assert bool(jnp.all(jnp.isfinite(logits)))
    print("KERNEL_OK")
</pallas_src>

<mosaic_0001>
module attributes {stable_mosaic.version = 11 : i64} {
  func.func @_linear_kernel(%arg0: i32, %arg1: memref<16x768xbf16, #tpu.memory_space<vmem>>, %arg2: memref<768x128xbf16, #tpu.memory_space<vmem>>, %arg3: memref<1x128xf32, #tpu.memory_space<vmem>>, %arg4: memref<16x128xf32, #tpu.memory_space<vmem>>) attributes {dimension_semantics = [#tpu.dimension_semantics<parallel>], iteration_bounds = array<i64: 1>, scalar_prefetch = 0 : i64, scratch_operands = 0 : i64, tpu.core_type = #tpu.core_type<tc>, window_params = [{transform_indices = @transform_0, window_bounds = array<i64: 16, 768>}, {pipeline_mode = #tpu.pipeline_mode<synchronous>, transform_indices = @transform_1, window_bounds = array<i64: 768, 128>}, {pipeline_mode = #tpu.pipeline_mode<synchronous>, transform_indices = @transform_2, window_bounds = array<i64: 1, 128>}, {transform_indices = @transform_3, window_bounds = array<i64: 16, 128>}]} {
    %c0 = arith.constant 0 : index
    %c0_0 = arith.constant 0 : index
    %0 = vector.load %arg1[%c0, %c0_0] : memref<16x768xbf16, #tpu.memory_space<vmem>>, vector<16x768xbf16>
    %c0_1 = arith.constant 0 : index
    %c0_2 = arith.constant 0 : index
    %1 = vector.load %arg2[%c0_1, %c0_2] : memref<768x128xbf16, #tpu.memory_space<vmem>>, vector<768x128xbf16>
    %cst = arith.constant dense<0.000000e+00> : vector<16x128xf32>
    %2 = tpu.matmul %0, %1, %cst {dimension_numbers = #tpu.dot_dimension_numbers<[1], [0], [0], [1], [0, 0, 1, 1], [], []>} : vector<16x768xbf16>, vector<768x128xbf16>, vector<16x128xf32> -> vector<16x128xf32>
    %c0_3 = arith.constant 0 : index
    %c0_4 = arith.constant 0 : index
    %3 = vector.load %arg3[%c0_3, %c0_4] : memref<1x128xf32, #tpu.memory_space<vmem>>, vector<1x128xf32>
    %4 = vector.broadcast %3 : vector<1x128xf32> to vector<16x128xf32>
    %5 = arith.addf %2, %4 : vector<16x128xf32>
    %c0_5 = arith.constant 0 : index
    %c0_6 = arith.constant 0 : index
    %6 = vector.load %arg4[%c0_5, %c0_6] : memref<16x128xf32, #tpu.memory_space<vmem>>, vector<16x128xf32>
    tpu.vector_store %arg4[%c0_5, %c0_6], %5 {strides = array<i32>} : memref<16x128xf32, #tpu.memory_space<vmem>>, vector<16x128xf32>,
    return
  }
  func.func @transform_0(%arg0: i32) -> (i32, i32) {
    %c0_i32 = arith.constant 0 : i32
    %c0_i32_0 = arith.constant 0 : i32
    return %arg0, %c0_i32 : i32, i32
  }
  func.func @transform_1(%arg0: i32) -> (i32, i32) {
    %c0_i32 = arith.constant 0 : i32
    %c0_i32_0 = arith.constant 0 : i32
    %c0_i32_1 = arith.constant 0 : i32
    return %c0_i32, %c0_i32_0 : i32, i32
  }
  func.func @transform_2(%arg0: i32) -> (i32, i32) {
    %c0_i32 = arith.constant 0 : i32
    %c0_i32_0 = arith.constant 0 : i32
    %c0_i32_1 = arith.constant 0 : i32
    return %c0_i32, %c0_i32_0 : i32, i32
  }
  func.func @transform_3(%arg0: i32) -> (i32, i32) {
    %c0_i32 = arith.constant 0 : i32
    %c0_i32_0 = arith.constant 0 : i32
    return %arg0, %c0_i32 : i32, i32
  }
}

module attributes {stable_mosaic.version = 11 : i64} {
  func.func @_block_kernel(%arg0: i32, %arg1: memref<1x128x128xbf16, #tpu.memory_space<vmem>>, %arg2: memref<128x384xbf16, #tpu.memory_space<vmem>>, %arg3: memref<1x384xf32, #tpu.memory_space<vmem>>, %arg4: memref<4x32x128xbf16, #tpu.memory_space<vmem>>, %arg5: memref<1x128xf32, #tpu.memory_space<vmem>>, %arg6: memref<1x128xf32, #tpu.memory_space<vmem>>, %arg7: memref<1x128xf32, #tpu.memory_space<vmem>>, %arg8: memref<128x128xbf16, #tpu.memory_space<vmem>>, %arg9: memref<1x128xf32, #tpu.memory_space<vmem>>, %arg10: memref<128x128xbf16, #tpu.memory_space<vmem>>, %arg11: memref<1x128xf32, #tpu.memory_space<vmem>>, %arg12: memref<1x128xf32, #tpu.memory_space<vmem>>, %arg13: memref<1x128xf32, #tpu.memory_space<vmem>>, %arg14: memref<1x128x128xbf16, #tpu.memory_space<vmem>>) attributes {dimension_semantics = [#tpu.dimension_semantics<parallel>], iteration_bounds = array<i64: 2>, scalar_prefetch = 0 : i64, scratch_operands = 0 : i64, tpu.core_type = #tpu.core_type<tc>, window_params = [{transform_indices = @transform_0, window_bounds = array<i64: 1, 128, 128>}, {pipeline_mode = #tpu.pipeline_mode<synchronous>, transform_indices = @transform_1, window_bounds = array<i64: 128, 384>}, {pipeline_mode = #tpu.pipeline_mode<synchronous>, transform_indices = @transform_2, window_bounds = array<i64: 1, 384>}, {pipeline_mode = #tpu.pipeline_mode<synchronous>, transform_indices = @transform_3, window_bounds = array<i64: 4, 32, 128>}, {pipeline_mode = #tpu.pipeline_mode<synchronous>, transform_indices = @transform_4, window_bounds = array<i64: 1, 128>}, {pipeline_mode = #tpu.pipeline_mode<synchronous>, transform_indices = @transform_5, window_bounds = array<i64: 1, 128>}, {pipeline_mode = #tpu.pipeline_mode<synchronous>, transform_indices = @transform_6, window_bounds = array<i64: 1, 128>}, {pipeline_mode = #tpu.pipeline_mode<synchronous>, transform_indices = @transform_7, window_bounds = array<i64: 128, 128>}, {pipeline_mode = #tpu.pipeline_mode<synchronous>, transform_indices = @transform_8, window_bounds = array<i64: 1, 128>}, {pipeline_mode = #tpu.pipeline_mode<synchronous>, transform_indices = @transform_9, window_bounds = array<i64: 128, 128>}, {pipeline_mode = #tpu.pipeline_mode<synchronous>, transform_indices = @transform_10, window_bounds = array<i64: 1, 128>}, {pipeline_mode = #tpu.pipeline_mode<synchronous>, transform_indices = @transform_11, window_bounds = array<i64: 1, 128>}, {pipeline_mode = #tpu.pipeline_mode<synchronous>, transform_indices = @transform_12, window_bounds = array<i64: 1, 128>}, {transform_indices = @transform_13, window_bounds = array<i64: 1, 128, 128>}]} {
    %c0 = arith.constant 0 : index
    %c0_0 = arith.constant 0 : index
    %c0_1 = arith.constant 0 : index
    %0 = vector.load %arg1[%c0, %c0_0, %c0_1] : memref<1x128x128xbf16, #tpu.memory_space<vmem>>, vector<1x128x128xbf16>
    %1 = vector.shape_cast %0 : vector<1x128x128xbf16> to vector<128x128xbf16>
    %2 = arith.extf %1 : vector<128x128xbf16> to vector<128x128xf32>
    %c0_2 = arith.constant 0 : index
    %c0_3 = arith.constant 0 : index
    %3 = vector.load %arg2[%c0_2, %c0_3] : memref<128x384xbf16, #tpu.memory_space<vmem>>, vector<128x384xbf16>
    %cst = arith.constant dense<0.000000e+00> : vector<128x384xf32>
    %4 = tpu.matmul %1, %3, %cst {dimension_numbers = #tpu.dot_dimension_numbers<[1], [0], [0], [1], [0, 0, 1, 1], [], []>} : vector<128x128xbf16>, vector<128x384xbf16>, vector<128x384xf32> -> vector<128x384xf32>
    %c0_4 = arith.constant 0 : index
    %c0_5 = arith.constant 0 : index
    %5 = vector.load %arg3[%c0_4, %c0_5] : memref<1x384xf32, #tpu.memory_space<vmem>>, vector<1x384xf32>
    %6 = vector.broadcast %5 : vector<1x384xf32> to vector<128x384xf32>
    %7 = arith.addf %4, %6 : vector<128x384xf32>
    %8 = tpu.iota {dimensions = array<i32: 1>} : vector<1x128xi32>
    %c5_i32 = arith.constant 5 : i32
    %9 = vector.broadcast %c5_i32 : i32 to vector<1x128xi32>
    %10 = arith.cmpi slt, %8, %9 : vector<1x128xi32>
    %cst_6 = arith.constant 0.000000e+00 : f32
    %cst_7 = arith.constant -1.000000e+30 : f32
    %11 = vector.broadcast %cst_6 : f32 to vector<1x128xf32>
    %12 = vector.broadcast %cst_7 : f32 to vector<1x128xf32>
    %13 = arith.select %10, %11, %12 : vector<1x128xi1>, vector<1x128xf32>
    %cst_8 = arith.constant 0.000000e+00 : f32
    %14 = vector.broadcast %cst_8 : f32 to vector<128x128xf32>
    %15 = vector.extract_strided_slice %7 {offsets = [0, 0], sizes = [128, 32], strides = [1, 1]} : vector<128x384xf32> to vector<128x32xf32>
    %16 = arith.truncf %15 : vector<128x32xf32> to vector<128x32xbf16>
    %17 = vector.extract_strided_slice %7 {offsets = [0, 128], sizes = [128, 32], strides = [1, 1]} : vector<128x384xf32> to vector<128x32xf32>
    %18 = arith.truncf %17 : vector<128x32xf32> to vector<128x32xbf16>
    %19 = vector.extract_strided_slice %7 {offsets = [0, 256], sizes = [128, 32], strides = [1, 1]} : vector<128x384xf32> to vector<128x32xf32>
    %20 = arith.truncf %19 : vector<128x32xf32> to vector<128x32xbf16>
    %cst_9 = arith.constant dense<0.000000e+00> : vector<128x128xf32>
    %21 = tpu.matmul %16, %18, %cst_9 {dimension_numbers = #tpu.dot_dimension_numbers<[1], [1], [0], [0], [0, 0, 1, 0], [], []>} : vector<128x32xbf16>, vector<128x32xbf16>, vector<128x128xf32> -> vector<128x128xf32>
    %22 = vector.broadcast %13 : vector<1x128xf32> to vector<128x128xf32>
    %23 = arith.addf %21, %22 : vector<128x128xf32>
    %cst_10 = arith.constant dense<0xFF800000> : vector<128xf32>
    %24 = vector.multi_reduction <maximumf>, %23, %cst_10 [1] : vector<128x128xf32> to vector<128xf32>
    %25 = vector.shape_cast %24 : vector<128xf32> to vector<128x1xf32>
    %26 = vector.broadcast %25 : vector<128x1xf32> to vector<128x128xf32>
    %27 = arith.subf %23, %26 : vector<128x128xf32>
    %28 = math.exp %27 : vector<128x128xf32>
    %cst_11 = arith.constant dense<0.000000e+00> : vector<128xf32>
    %29 = vector.multi_reduction <add>, %28, %cst_11 [1] : vector<128x128xf32> to vector<128xf32>
    %30 = vector.shape_cast %29 : vector<128xf32> to vector<128x1xf32>
    %31 = tpu.reciprocal %30 {approx = true} : vector<128x1xf32> -> vector<128x1xf32>
    %32 = vector.broadcast %31 : vector<128x1xf32> to vector<128x128xf32>
    %33 = arith.mulf %28, %32 : vector<128x128xf32>
    %34 = arith.truncf %33 : vector<128x128xf32> to vector<128x128xbf16>
    %cst_12 = arith.constant dense<0.000000e+00> : vector<128x32xf32>
    %35 = tpu.matmul %34, %20, %cst_12 {dimension_numbers = #tpu.dot_dimension_numbers<[1], [0], [0], [1], [0, 0, 1, 1], [], []>} : vector<128x128xbf16>, vector<128x32xbf16>, vector<128x32xf32> -> vector<128x32xf32>
    %36 = arith.truncf %35 : vector<128x32xf32> to vector<128x32xbf16>
    %c0_13 = arith.constant 0 : index
    %c0_14 = arith.constant 0 : index
    %c0_15 = arith.constant 0 : index
    %37 = vector.load %arg4[%c0_13, %c0_14, %c0_15] : memref<4x32x128xbf16, #tpu.memory_space<vmem>>, vector<1x32x128xbf16>
    %38 = vector.shape_cast %37 : vector<1x32x128xbf16> to vector<32x128xbf16>
    %cst_16 = arith.constant dense<0.000000e+00> : vector<128x128xf32>
    %39 = tpu.matmul %36, %38, %cst_16 {dimension_numbers = #tpu.dot_dimension_numbers<[1], [0], [0], [1], [0, 0, 1, 1], [], []>} : vector<128x32xbf16>, vector<32x128xbf16>, vector<128x128xf32> -> vector<128x128xf32>
    %40 = arith.addf %14, %39 : vector<128x128xf32>
    %41 = vector.extract_strided_slice %7 {offsets = [0, 32], sizes = [128, 32], strides = [1, 1]} : vector<128x384xf32> to vector<128x32xf32>
    %42 = arith.truncf %41 : vector<128x32xf32> to vector<128x32xbf16>
    %43 = vector.extract_strided_slice %7 {offsets = [0, 160], sizes = [128, 32], strides = [1, 1]} : vector<128x384xf32> to vector<128x32xf32>
    %44 = arith.truncf %43 : vector<128x32xf32> to vector<128x32xbf16>
    %45 = vector.extract_strided_slice %7 {offsets = [0, 288], sizes = [128, 32], strides = [1, 1]} : vector<128x384xf32> to vector<128x32xf32>
    %46 = arith.truncf %45 : vector<128x32xf32> to vector<128x32xbf16>
    %cst_17 = arith.constant dense<0.000000e+00> : vector<128x128xf32>
    %47 = tpu.matmul %42, %44, %cst_17 {dimension_numbers = #tpu.dot_dimension_numbers<[1], [1], [0], [0], [0, 0, 1, 0], [], []>} : vector<128x32xbf16>, vector<128x32xbf16>, vector<128x128xf32> -> vector<128x128xf32>
    %48 = vector.broadcast %13 : vector<1x128xf32> to vector<128x128xf32>
    %49 = arith.addf %47, %48 : vector<128x128xf32>
    %cst_18 = arith.constant dense<0xFF800000> : vector<128xf32>
    %50 = vector.multi_reduction <maximumf>, %49, %cst_18 [1] : vector<128x128xf32> to vector<128xf32>
    %51 = vector.shape_cast %50 : vector<128xf32> to vector<128x1xf32>
    %52 = vector.broadcast %51 : vector<128x1xf32> to vector<128x128xf32>
    %53 = arith.subf %49, %52 : vector<128x128xf32>
    %54 = math.exp %53 : vector<128x128xf32>
    %cst_19 = arith.constant dense<0.000000e+00> : vector<128xf32>
    %55 = vector.multi_reduction <add>, %54, %cst_19 [1] : vector<128x128xf32> to vector<128xf32>
    %56 = vector.shape_cast %55 : vector<128xf32> to vector<128x1xf32>
    %57 = tpu.reciprocal %56 {approx = true} : vector<128x1xf32> -> vector<128x1xf32>
    %58 = vector.broadcast %57 : vector<128x1xf32> to vector<128x128xf32>
    %59 = arith.mulf %54, %58 : vector<128x128xf32>
    %60 = arith.truncf %59 : vector<128x128xf32> to vector<128x128xbf16>
    %cst_20 = arith.constant dense<0.000000e+00> : vector<128x32xf32>
    %61 = tpu.matmul %60, %46, %cst_20 {dimension_numbers = #tpu.dot_dimension_numbers<[1], [0], [0], [1], [0, 0, 1, 1], [], []>} : vector<128x128xbf16>, vector<128x32xbf16>, vector<128x32xf32> -> vector<128x32xf32>
    %62 = arith.truncf %61 : vector<128x32xf32> to vector<128x32xbf16>
    %c1 = arith.constant 1 : index
    %c0_21 = arith.constant 0 : index
    %c0_22 = arith.constant 0 : index
    %63 = vector.load %arg4[%c1, %c0_21, %c0_22] : memref<4x32x128xbf16, #tpu.memory_space<vmem>>, vector<1x32x128xbf16>
    %64 = vector.shape_cast %63 : vector<1x32x128xbf16> to vector<32x128xbf16>
    %cst_23 = arith.constant dense<0.000000e+00> : vector<128x128xf32>
    %65 = tpu.matmul %62, %64, %cst_23 {dimension_numbers = #tpu.dot_dimension_numbers<[1], [0], [0], [1], [0, 0, 1, 1], [], []>} : vector<128x32xbf16>, vector<32x128xbf16>, vector<128x128xf32> -> vector<128x128xf32>
    %66 = arith.addf %40, %65 : vector<128x128xf32>
    %67 = vector.extract_strided_slice %7 {offsets = [0, 64], sizes = [128, 32], strides = [1, 1]} : vector<128x384xf32> to vector<128x32xf32>
    %68 = arith.truncf %67 : vector<128x32xf32> to vector<128x32xbf16>
    %69 = vector.extract_strided_slice %7 {offsets = [0, 192], sizes = [128, 32], strides = [1, 1]} : vector<128x384xf32> to vector<128x32xf32>
    %70 = arith.truncf %69 : vector<128x32xf32> to vector<128x32xbf16>
    %71 = vector.extract_strided_slice %7 {offsets = [0, 320], sizes = [128, 32], strides = [1, 1]} : vector<128x384xf32> to vector<128x32xf32>
    %72 = arith.truncf %71 : vector<128x32xf32> to vector<128x32xbf16>
    %cst_24 = arith.constant dense<0.000000e+00> : vector<128x128xf32>
    %73 = tpu.matmul %68, %70, %cst_24 {dimension_numbers = #tpu.dot_dimension_numbers<[1], [1], [0], [0], [0, 0, 1, 0], [], []>} : vector<128x32xbf16>, vector<128x32xbf16>, vector<128x128xf32> -> vector<128x128xf32>
    %74 = vector.broadcast %13 : vector<1x128xf32> to vector<128x128xf32>
    %75 = arith.addf %73, %74 : vector<128x128xf32>
    %cst_25 = arith.constant dense<0xFF800000> : vector<128xf32>
    %76 = vector.multi_reduction <maximumf>, %75, %cst_25 [1] : vector<128x128xf32> to vector<128xf32>
    %77 = vector.shape_cast %76 : vector<128xf32> to vector<128x1xf32>
    %78 = vector.broadcast %77 : vector<128x1xf32> to vector<128x128xf32>
    %79 = arith.subf %75, %78 : vector<128x128xf32>
    %80 = math.exp %79 : vector<128x128xf32>
    %cst_26 = arith.constant dense<0.000000e+00> : vector<128xf32>
    %81 = vector.multi_reduction <add>, %80, %cst_26 [1] : vector<128x128xf32> to vector<128xf32>
    %82 = vector.shape_cast %81 : vector<128xf32> to vector<128x1xf32>
    %83 = tpu.reciprocal %82 {approx = true} : vector<128x1xf32> -> vector<128x1xf32>
    %84 = vector.broadcast %83 : vector<128x1xf32> to vector<128x128xf32>
    %85 = arith.mulf %80, %84 : vector<128x128xf32>
    %86 = arith.truncf %85 : vector<128x128xf32> to vector<128x128xbf16>
    %cst_27 = arith.constant dense<0.000000e+00> : vector<128x32xf32>
    %87 = tpu.matmul %86, %72, %cst_27 {dimension_numbers = #tpu.dot_dimension_numbers<[1], [0], [0], [1], [0, 0, 1, 1], [], []>} : vector<128x128xbf16>, vector<128x32xbf16>, vector<128x32xf32> -> vector<128x32xf32>
    %88 = arith.truncf %87 : vector<128x32xf32> to vector<128x32xbf16>
    %c2 = arith.constant 2 : index
    %c0_28 = arith.constant 0 : index
    %c0_29 = arith.constant 0 : index
    %89 = vector.load %arg4[%c2, %c0_28, %c0_29] : memref<4x32x128xbf16, #tpu.memory_space<vmem>>, vector<1x32x128xbf16>
    %90 = vector.shape_cast %89 : vector<1x32x128xbf16> to vector<32x128xbf16>
    %cst_30 = arith.constant dense<0.000000e+00> : vector<128x128xf32>
    %91 = tpu.matmul %88, %90, %cst_30 {dimension_numbers = #tpu.dot_dimension_numbers<[1], [0], [0], [1], [0, 0, 1, 1], [], []>} : vector<128x32xbf16>, vector<32x128xbf16>, vector<128x128xf32> -> vector<128x128xf32>
    %92 = arith.addf %66, %91 : vector<128x128xf32>
    %93 = vector.extract_strided_slice %7 {offsets = [0, 96], sizes = [128, 32], strides = [1, 1]} : vector<128x384xf32> to vector<128x32xf32>
    %94 = arith.truncf %93 : vector<128x32xf32> to vector<128x32xbf16>
    %95 = vector.extract_strided_slice %7 {offsets = [0, 224], sizes = [128, 32], strides = [1, 1]} : vector<128x384xf32> to vector<128x32xf32>
    %96 = arith.truncf %95 : vector<128x32xf32> to vector<128x32xbf16>
    %97 = vector.extract_strided_slice %7 {offsets = [0, 352], sizes = [128, 32], strides = [1, 1]} : vector<128x384xf32> to vector<128x32xf32>
    %98 = arith.truncf %97 : vector<128x32xf32> to vector<128x32xbf16>
    %cst_31 = arith.constant dense<0.000000e+00> : vector<128x128xf32>
    %99 = tpu.matmul %94, %96, %cst_31 {dimension_numbers = #tpu.dot_dimension_numbers<[1], [1], [0], [0], [0, 0, 1, 0], [], []>} : vector<128x32xbf16>, vector<128x32xbf16>, vector<128x128xf32> -> vector<128x128xf32>
    %100 = vector.broadcast %13 : vector<1x128xf32> to vector<128x128xf32>
    %101 = arith.addf %99, %100 : vector<128x128xf32>
    %cst_32 = arith.constant dense<0xFF800000> : vector<128xf32>
    %102 = vector.multi_reduction <maximumf>, %101, %cst_32 [1] : vector<128x128xf32> to vector<128xf32>
    %103 = vector.shape_cast %102 : vector<128xf32> to vector<128x1xf32>
    %104 = vector.broadcast %103 : vector<128x1xf32> to vector<128x128xf32>
    %105 = arith.subf %101, %104 : vector<128x128xf32>
    %106 = math.exp %105 : vector<128x128xf32>
    %cst_33 = arith.constant dense<0.000000e+00> : vector<128xf32>
    %107 = vector.multi_reduction <add>, %106, %cst_33 [1] : vector<128x128xf32> to vector<128xf32>
    %108 = vector.shape_cast %107 : vector<128xf32> to vector<128x1xf32>
    %109 = tpu.reciprocal %108 {approx = true} : vector<128x1xf32> -> vector<128x1xf32>
    %110 = vector.broadcast %109 : vector<128x1xf32> to vector<128x128xf32>
    %111 = arith.mulf %106, %110 : vector<128x128xf32>
    %112 = arith.truncf %111 : vector<128x128xf32> to vector<128x128xbf16>
    %cst_34 = arith.constant dense<0.000000e+00> : vector<128x32xf32>
    %113 = tpu.matmul %112, %98, %cst_34 {dimension_numbers = #tpu.dot_dimension_numbers<[1], [0], [0], [1], [0, 0, 1, 1], [], []>} : vector<128x128xbf16>, vector<128x32xbf16>, vector<128x32xf32> -> vector<128x32xf32>
    %114 = arith.truncf %113 : vector<128x32xf32> to vector<128x32xbf16>
    %c3 = arith.constant 3 : index
    %c0_35 = arith.constant 0 : index
    %c0_36 = arith.constant 0 : index
    %115 = vector.load %arg4[%c3, %c0_35, %c0_36] : memref<4x32x128xbf16, #tpu.memory_space<vmem>>, vector<1x32x128xbf16>
    %116 = vector.shape_cast %115 : vector<1x32x128xbf16> to vector<32x128xbf16>
    %cst_37 = arith.constant dense<0.000000e+00> : vector<128x128xf32>
    %117 = tpu.matmul %114, %116, %cst_37 {dimension_numbers = #tpu.dot_dimension_numbers<[1], [0], [0], [1], [0, 0, 1, 1], [], []>} : vector<128x32xbf16>, vector<32x128xbf16>, vector<128x128xf32> -> vector<128x128xf32>
    %118 = arith.addf %92, %117 : vector<128x128xf32>
    %119 = arith.addf %2, %118 : vector<128x128xf32>
    %c0_38 = arith.constant 0 : index
    %c0_39 = arith.constant 0 : index
    %120 = vector.load %arg5[%c0_38, %c0_39] : memref<1x128xf32, #tpu.memory_space<vmem>>, vector<1x128xf32>
    %121 = vector.broadcast %120 : vector<1x128xf32> to vector<128x128xf32>
    %122 = arith.addf %119, %121 : vector<128x128xf32>
    %c0_40 = arith.constant 0 : index
    %c0_41 = arith.constant 0 : index
    %123 = vector.load %arg6[%c0_40, %c0_41] : memref<1x128xf32, #tpu.memory_space<vmem>>, vector<1x128xf32>
    %c0_42 = arith.constant 0 : index
    %c0_43 = arith.constant 0 : index
    %124 = vector.load %arg7[%c0_42, %c0_43] : memref<1x128xf32, #tpu.memory_space<vmem>>, vector<1x128xf32>
    %cst_44 = arith.constant dense<0.000000e+00> : vector<128xf32>
    %125 = vector.multi_reduction <add>, %122, %cst_44 [1] : vector<128x128xf32> to vector<128xf32>
    %126 = vector.shape_cast %125 : vector<128xf32> to vector<128x1xf32>
    %cst_45 = arith.constant 1.280000e+02 : f32
    %127 = vector.broadcast %cst_45 : f32 to vector<128x1xf32>
    %128 = arith.divf %126, %127 : vector<128x1xf32>
    %129 = vector.broadcast %128 : vector<128x1xf32> to vector<128x128xf32>
    %130 = arith.subf %122, %129 : vector<128x128xf32>
    %131 = arith.mulf %130, %130 : vector<128x128xf32>
    %cst_46 = arith.constant dense<0.000000e+00> : vector<128xf32>
    %132 = vector.multi_reduction <add>, %131, %cst_46 [1] : vector<128x128xf32> to vector<128xf32>
    %133 = vector.shape_cast %132 : vector<128xf32> to vector<128x1xf32>
    %cst_47 = arith.constant 1.280000e+02 : f32
    %134 = vector.broadcast %cst_47 : f32 to vector<128x1xf32>
    %135 = arith.divf %133, %134 : vector<128x1xf32>
    %136 = vector.broadcast %128 : vector<128x1xf32> to vector<128x128xf32>
    %137 = arith.subf %122, %136 : vector<128x128xf32>
    %cst_48 = arith.constant 9.99999974E-6 : f32
    %138 = vector.broadcast %cst_48 : f32 to vector<128x1xf32>
    %139 = arith.addf %135, %138 : vector<128x1xf32>
    %140 = math.rsqrt %139 : vector<128x1xf32>
    %141 = vector.broadcast %140 : vector<128x1xf32> to vector<128x128xf32>
    %142 = arith.mulf %137, %141 : vector<128x128xf32>
    %143 = vector.broadcast %123 : vector<1x128xf32> to vector<128x128xf32>
    %144 = arith.mulf %142, %143 : vector<128x128xf32>
    %145 = vector.broadcast %124 : vector<1x128xf32> to vector<128x128xf32>
    %146 = arith.addf %144, %145 : vector<128x128xf32>
    %147 = arith.truncf %146 : vector<128x128xf32> to vector<128x128xbf16>
    %c0_49 = arith.constant 0 : index
    %c0_50 = arith.constant 0 : index
    %148 = vector.load %arg8[%c0_49, %c0_50] : memref<128x128xbf16, #tpu.memory_space<vmem>>, vector<128x128xbf16>
    %cst_51 = arith.constant dense<0.000000e+00> : vector<128x128xf32>
    %149 = tpu.matmul %147, %148, %cst_51 {dimension_numbers = #tpu.dot_dimension_numbers<[1], [0], [0], [1], [0, 0, 1, 1], [], []>} : vector<128x128xbf16>, vector<128x128xbf16>, vector<128x128xf32> -> vector<128x128xf32>
    %c0_52 = arith.constant 0 : index
    %c0_53 = arith.constant 0 : index
    %150 = vector.load %arg9[%c0_52, %c0_53] : memref<1x128xf32, #tpu.memory_space<vmem>>, vector<1x128xf32>
    %151 = vector.broadcast %150 : vector<1x128xf32> to vector<128x128xf32>
    %152 = arith.addf %149, %151 : vector<128x128xf32>
    %cst_54 = arith.constant 5.000000e-01 : f32
    %153 = vector.broadcast %cst_54 : f32 to vector<128x128xf32>
    %154 = arith.mulf %153, %152 : vector<128x128xf32>
    %cst_55 = arith.constant 4.471500e-02 : f32
    %155 = vector.broadcast %cst_55 : f32 to vector<128x128xf32>
    %156 = arith.mulf %155, %152 : vector<128x128xf32>
    %157 = arith.mulf %156, %152 : vector<128x128xf32>
    %158 = arith.mulf %157, %152 : vector<128x128xf32>
    %159 = arith.addf %152, %158 : vector<128x128xf32>
    %cst_56 = arith.constant 0.797884583 : f32
    %160 = vector.broadcast %cst_56 : f32 to vector<128x128xf32>
    %161 = arith.mulf %160, %159 : vector<128x128xf32>
    %162 = math.tanh %161 : vector<128x128xf32>
    %cst_57 = arith.constant 1.000000e+00 : f32
    %163 = vector.broadcast %cst_57 : f32 to vector<128x128xf32>
    %164 = arith.addf %163, %162 : vector<128x128xf32>
    %165 = arith.mulf %154, %164 : vector<128x128xf32>
    %166 = arith.truncf %165 : vector<128x128xf32> to vector<128x128xbf16>
    %c0_58 = arith.constant 0 : index
    %c0_59 = arith.constant 0 : index
    %167 = vector.load %arg10[%c0_58, %c0_59] : memref<128x128xbf16, #tpu.memory_space<vmem>>, vector<128x128xbf16>
    %cst_60 = arith.constant dense<0.000000e+00> : vector<128x128xf32>
    %168 = tpu.matmul %166, %167, %cst_60 {dimension_numbers = #tpu.dot_dimension_numbers<[1], [0], [0], [1], [0, 0, 1, 1], [], []>} : vector<128x128xbf16>, vector<128x128xbf16>, vector<128x128xf32> -> vector<128x128xf32>
    %c0_61 = arith.constant 0 : index
    %c0_62 = arith.constant 0 : index
    %169 = vector.load %arg11[%c0_61, %c0_62] : memref<1x128xf32, #tpu.memory_space<vmem>>, vector<1x128xf32>
    %170 = vector.broadcast %169 : vector<1x128xf32> to vector<128x128xf32>
    %171 = arith.addf %168, %170 : vector<128x128xf32>
    %172 = arith.addf %146, %171 : vector<128x128xf32>
    %c0_63 = arith.constant 0 : index
    %c0_64 = arith.constant 0 : index
    %173 = vector.load %arg12[%c0_63, %c0_64] : memref<1x128xf32, #tpu.memory_space<vmem>>, vector<1x128xf32>
    %c0_65 = arith.constant 0 : index
    %c0_66 = arith.constant 0 : index
    %174 = vector.load %arg13[%c0_65, %c0_66] : memref<1x128xf32, #tpu.memory_space<vmem>>, vector<1x128xf32>
    %cst_67 = arith.constant dense<0.000000e+00> : vector<128xf32>
    %175 = vector.multi_reduction <add>, %172, %cst_67 [1] : vector<128x128xf32> to vector<128xf32>
    %176 = vector.shape_cast %175 : vector<128xf32> to vector<128x1xf32>
    %cst_68 = arith.constant 1.280000e+02 : f32
    %177 = vector.broadcast %cst_68 : f32 to vector<128x1xf32>
    %178 = arith.divf %176, %177 : vector<128x1xf32>
    %179 = vector.broadcast %178 : vector<128x1xf32> to vector<128x128xf32>
    %180 = arith.subf %172, %179 : vector<128x128xf32>
    %181 = arith.mulf %180, %180 : vector<128x128xf32>
    %cst_69 = arith.constant dense<0.000000e+00> : vector<128xf32>
    %182 = vector.multi_reduction <add>, %181, %cst_69 [1] : vector<128x128xf32> to vector<128xf32>
    %183 = vector.shape_cast %182 : vector<128xf32> to vector<128x1xf32>
    %cst_70 = arith.constant 1.280000e+02 : f32
    %184 = vector.broadcast %cst_70 : f32 to vector<128x1xf32>
    %185 = arith.divf %183, %184 : vector<128x1xf32>
    %186 = vector.broadcast %178 : vector<128x1xf32> to vector<128x128xf32>
    %187 = arith.subf %172, %186 : vector<128x128xf32>
    %cst_71 = arith.constant 9.99999974E-6 : f32
    %188 = vector.broadcast %cst_71 : f32 to vector<128x1xf32>
    %189 = arith.addf %185, %188 : vector<128x1xf32>
    %190 = math.rsqrt %189 : vector<128x1xf32>
    %191 = vector.broadcast %190 : vector<128x1xf32> to vector<128x128xf32>
    %192 = arith.mulf %187, %191 : vector<128x128xf32>
    %193 = vector.broadcast %173 : vector<1x128xf32> to vector<128x128xf32>
    %194 = arith.mulf %192, %193 : vector<128x128xf32>
    %195 = vector.broadcast %174 : vector<1x128xf32> to vector<128x128xf32>
    %196 = arith.addf %194, %195 : vector<128x128xf32>
    %197 = arith.truncf %196 : vector<128x128xf32> to vector<128x128xbf16>
    %c0_72 = arith.constant 0 : index
    %c0_73 = arith.constant 0 : index
    %c0_74 = arith.constant 0 : index
    %198 = vector.load %arg14[%c0_72, %c0_73, %c0_74] : memref<1x128x128xbf16, #tpu.memory_space<vmem>>, vector<1x128x128xbf16>
    %199 = vector.shape_cast %198 : vector<1x128x128xbf16> to vector<128x128xbf16>
    %200 = vector.shape_cast %197 : vector<128x128xbf16> to vector<1x128x128xbf16>
    tpu.vector_store %arg14[%c0_72, %c0_73, %c0_74], %200 {strides = array<i32>} : memref<1x128x128xbf16, #tpu.memory_space<vmem>>, vector<1x128x128xbf16>,
    return
  }
  func.func @transform_0(%arg0: i32) -> (i32, i32, i32) {
    %c0_i32 = arith.constant 0 : i32
    %c0_i32_0 = arith.constant 0 : i32
    %c0_i32_1 = arith.constant 0 : i32
    return %arg0, %c0_i32, %c0_i32_0 : i32, i32, i32
  }
  func.func @transform_1(%arg0: i32) -> (i32, i32) {
    %c0_i32 = arith.constant 0 : i32
    %c0_i32_0 = arith.constant 0 : i32
    %c0_i32_1 = arith.constant 0 : i32
    return %c0_i32, %c0_i32_0 : i32, i32
  }
  func.func @transform_2(%arg0: i32) -> (i32, i32) {
    %c0_i32 = arith.constant 0 : i32
    %c0_i32_0 = arith.constant 0 : i32
    %c0_i32_1 = arith.constant 0 : i32
    return %c0_i32, %c0_i32_0 : i32, i32
  }
  func.func @transform_3(%arg0: i32) -> (i32, i32, i32) {
    %c0_i32 = arith.constant 0 : i32
    %c0_i32_0 = arith.constant 0 : i32
    %c0_i32_1 = arith.constant 0 : i32
    %c0_i32_2 = arith.constant 0 : i32
    return %c0_i32, %c0_i32_0, %c0_i32_1 : i32, i32, i32
  }
  func.func @transform_4(%arg0: i32) -> (i32, i32) {
    %c0_i32 = arith.constant 0 : i32
    %c0_i32_0 = arith.constant 0 : i32
    %c0_i32_1 = arith.constant 0 : i32
    return %c0_i32, %c0_i32_0 : i32, i32
  }
  func.func @transform_5(%arg0: i32) -> (i32, i32) {
    %c0_i32 = arith.constant 0 : i32
    %c0_i32_0 = arith.constant 0 : i32
    %c0_i32_1 = arith.constant 0 : i32
    return %c0_i32, %c0_i32_0 : i32, i32
  }
  func.func @transform_6(%arg0: i32) -> (i32, i32) {
    %c0_i32 = arith.constant 0 : i32
    %c0_i32_0 = arith.constant 0 : i32
    %c0_i32_1 = arith.constant 0 : i32
    return %c0_i32, %c0_i32_0 : i32, i32
  }
  func.func @transform_7(%arg0: i32) -> (i32, i32) {
    %c0_i32 = arith.constant 0 : i32
    %c0_i32_0 = arith.constant 0 : i32
    %c0_i32_1 = arith.constant 0 : i32
    return %c0_i32, %c0_i32_0 : i32, i32
  }
  func.func @transform_8(%arg0: i32) -> (i32, i32) {
    %c0_i32 = arith.constant 0 : i32
    %c0_i32_0 = arith.constant 0 : i32
    %c0_i32_1 = arith.constant 0 : i32
    return %c0_i32, %c0_i32_0 : i32, i32
  }
  func.func @transform_9(%arg0: i32) -> (i32, i32) {
    %c0_i32 = arith.constant 0 : i32
    %c0_i32_0 = arith.constant 0 : i32
    %c0_i32_1 = arith.constant 0 : i32
    return %c0_i32, %c0_i32_0 : i32, i32
  }
  func.func @transform_10(%arg0: i32) -> (i32, i32) {
    %c0_i32 = arith.constant 0 : i32
    %c0_i32_0 = arith.constant 0 : i32
    %c0_i32_1 = arith.constant 0 : i32
    return %c0_i32, %c0_i32_0 : i32, i32
  }
  func.func @transform_11(%arg0: i32) -> (i32, i32) {
    %c0_i32 = arith.constant 0 : i32
    %c0_i32_0 = arith.constant 0 : i32
    %c0_i32_1 = arith.constant 0 : i32
    return %c0_i32, %c0_i32_0 : i32, i32
  }
  func.func @transform_12(%arg0: i32) -> (i32, i32) {
    %c0_i32 = arith.constant 0 : i32
    %c0_i32_0 = arith.constant 0 : i32
    %c0_i32_1 = arith.constant 0 : i32
    return %c0_i32, %c0_i32_0 : i32, i32
  }
  func.func @transform_13(%arg0: i32) -> (i32, i32, i32) {
    %c0_i32 = arith.constant 0 : i32
    %c0_i32_0 = arith.constant 0 : i32
    %c0_i32_1 = arith.constant 0 : i32
    return %arg0, %c0_i32, %c0_i32_0 : i32, i32, i32
  }
}

</mosaic_0001>

<llo_original>
// kernel: petnet_forward.3
$region0: #{petnet_forward.3}
  #allocation0 [shape = 'u32[]', space=smem, size = 0x4, offset = 0x4, fixed_abs, tag = 'smem constant byte address 0x4 - core index']
  #allocation1 [shape = 'u32[144,128]{1,0:T(1,128)}', space=vmem, size = 0x12000, scoped, tag = 'internal scratch']
  %s0 = inlined_call_operand.vmem [shape: bf16[16,768], index: 0, kind: input, shape index: {}]
  %s1 = inlined_call_operand.vmem [shape: bf16[768,128], index: 1, kind: input, shape index: {}]
  %s2 = inlined_call_operand.vmem [shape: f32[1,128], index: 2, kind: input, shape index: {}]
  %s3 = inlined_call_operand.vmem [shape: f32[16,128], index: 3, kind: output, shape index: {}]
  %s4 = sld [smem:[#allocation0]]
  $region22: #{petnet_forward.3} parent=0
    _
  %s6 = ssub.s32 1, %s4
  %s7 = scalar_select 0, %s6, %s4
  // Predicated region
  $region2: #{petnet_forward.3} parent=0 // pred_check
    _
  $region3: #{petnet_forward.3} parent=0 // pred_check_branch
    %9 = sbr.rel (0) target = $region5
  $region4: #{petnet_forward.3} parent=0 // pred_region
    _
  $region5: #{petnet_forward.3} parent=0 // pred_fallthru
    _
  // Predicated region
  $region6: #{petnet_forward.3} parent=0 // pred_check
    _
  $region7: #{petnet_forward.3} parent=0 // pred_check_branch
    %11 = sbr.rel (0) target = $region9
  $region8: #{petnet_forward.3} parent=0 // pred_region
    _
  $region9: #{petnet_forward.3} parent=0 // pred_fallthru
    _
  // Predicated region
  $region10: #{petnet_forward.3} parent=0 // pred_check
    _
  $region11: #{petnet_forward.3} parent=0 // pred_check_branch
    %13 = sbr.rel (0) target = $region13
  $region12: #{petnet_forward.3} parent=0 // pred_region
    _
  $region13: #{petnet_forward.3} parent=0 // pred_fallthru
    _
  %v15 = vld [vmem:[%s0] sm:$0xff]
  %v16 = vld [vmem:[%s0 + $0x8] sm:$0xff]
  %v17 = vld [vmem:[%s0 + $0x10] sm:$0xff]
  %v18 = vld [vmem:[%s0 + $0x18] sm:$0xff]
  %v19 = vld [vmem:[%s0 + $0x20] sm:$0xff]
  %v20 = vld [vmem:[%s0 + $0x28] sm:$0xff]
  %v21 = vld [vmem:[%s1] sm:$0xf]
  %v22 = vld [vmem:[%s1 + $0x4] sm:$0xf]
  %v23 = vld [vmem:[%s1 + $0x8] sm:$0xf]
  %v24 = vld [vmem:[%s1 + $0xc] sm:$0xf]
  %v25 = vld [vmem:[%s1 + $0x10] sm:$0xf]
  %v26 = vld [vmem:[%s1 + $0x14] sm:$0xf]
  %v27 = vld [vmem:[%s1 + $0x18] sm:$0xf]
  %v28 = vld [vmem:[%s1 + $0x1c] sm:$0xf]
  %v29 = vld [vmem:[%s1 + $0x20] sm:$0xf]
  %v30 = vld [vmem:[%s1 + $0x24] sm:$0xf]
  %v31 = vld [vmem:[%s1 + $0x28] sm:$0xf]
  %v32 = vld [vmem:[%s1 + $0x2c] sm:$0xf]
  %v33 = vld [vmem:[%s1 + $0x30] sm:$0xf]
  %v34 = vld [vmem:[%s1 + $0x34] sm:$0xf]
  %v35 = vld [vmem:[%s1 + $0x38] sm:$0xf]
  %v36 = vld [vmem:[%s1 + $0x3c] sm:$0xf]
  %v37 = vld [vmem:[%s1 + $0x40] sm:$0xf]
  %v38 = vld [vmem:[%s1 + $0x44] sm:$0xf]
  %v39 = vld [vmem:[%s1 + $0x48] sm:$0xf]
  %v40 = vld [vmem:[%s1 + $0x4c] sm:$0xf]
  %v41 = vld [vmem:[%s1 + $0x50] sm:$0xf]
  %v42 = vld [vmem:[%s1 + $0x54] sm:$0xf]
  %v43 = vld [vmem:[%s1 + $0x58] sm:$0xf]
  %v44 = vld [vmem:[%s1 + $0x5c] sm:$0xf]
  %v45 = vld [vmem:[%s1 + $0x60] sm:$0xf]
  %v46 = vld [vmem:[%s1 + $0x64] sm:$0xf]
  %v47 = vld [vmem:[%s1 + $0x68] sm:$0xf]
  %v48 = vld [vmem:[%s1 + $0x6c] sm:$0xf]
  %v49 = vld [vmem:[%s1 + $0x70] sm:$0xf]
  %v50 = vld [vmem:[%s1 + $0x74] sm:$0xf]
  %v51 = vld [vmem:[%s1 + $0x78] sm:$0xf]
  %v52 = vld [vmem:[%s1 + $0x7c] sm:$0xf]
  %v53 = vld [vmem:[%s1 + $0x80] sm:$0xf]
  %v54 = vld [vmem:[%s1 + $0x84] sm:$0xf]
  %v55 = vld [vmem:[%s1 + $0x88] sm:$0xf]
  %v56 = vld [vmem:[%s1 + $0x8c] sm:$0xf]
  %v57 = vld [vmem:[%s1 + $0x90] sm:$0xf]
  %v58 = vld [vmem:[%s1 + $0x94] sm:$0xf]
  %v59 = vld [vmem:[%s1 + $0x98] sm:$0xf]
  %v60 = vld [vmem:[%s1 + $0x9c] sm:$0xf]
  %v61 = vld [vmem:[%s1 + $0xa0] sm:$0xf]
  %v62 = vld [vmem:[%s1 + $0xa4] sm:$0xf]
  %v63 = vld [vmem:[%s1 + $0xa8] sm:$0xf]
  %v64 = vld [vmem:[%s1 + $0xac] sm:$0xf]
  %v65 = vld [vmem:[%s1 + $0xb0] sm:$0xf]
  %v66 = vld [vmem:[%s1 + $0xb4] sm:$0xf]
  %v67 = vld [vmem:[%s1 + $0xb8] sm:$0xf]
  %v68 = vld [vmem:[%s1 + $0xbc] sm:$0xf]
  %v69 = vld [vmem:[%s1 + $0xc0] sm:$0xf]
  %v70 = vld [vmem:[%s1 + $0xc4] sm:$0xf]
  %v71 = vld [vmem:[%s1 + $0xc8] sm:$0xf]
  %v72 = vld [vmem:[%s1 + $0xcc] sm:$0xf]
  %v73 = vld [vmem:[%s1 + $0xd0] sm:$0xf]
  %v74 = vld [vmem:[%s1 + $0xd4] sm:$0xf]
  %v75 = vld [vmem:[%s1 + $0xd8] sm:$0xf]
  %v76 = vld [vmem:[%s1 + $0xdc] sm:$0xf]
  %v77 = vld [vmem:[%s1 + $0xe0] sm:$0xf]
  %v78 = vld [vmem:[%s1 + $0xe4] sm:$0xf]
  %v79 = vld [vmem:[%s1 + $0xe8] sm:$0xf]
  %v80 = vld [vmem:[%s1 + $0xec] sm:$0xf]
  %v81 = vld [vmem:[%s1 + $0xf0] sm:$0xf]
  %v82 = vld [vmem:[%s1 + $0xf4] sm:$0xf]
  %v83 = vld [vmem:[%s1 + $0xf8] sm:$0xf]
  %v84 = vld [vmem:[%s1 + $0xfc] sm:$0xf]
  %v85 = vld [vmem:[%s1 + $0x100] sm:$0xf]
  %v86 = vld [vmem:[%s1 + $0x104] sm:$0xf]
  %v87 = vld [vmem:[%s1 + $0x108] sm:$0xf]
  %v88 = vld [vmem:[%s1 + $0x10c] sm:$0xf]
  %v89 = vld [vmem:[%s1 + $0x110] sm:$0xf]
  %v90 = vld [vmem:[%s1 + $0x114] sm:$0xf]
  %v91 = vld [vmem:[%s1 + $0x118] sm:$0xf]
  %v92 = vld [vmem:[%s1 + $0x11c] sm:$0xf]
  %v93 = vld [vmem:[%s1 + $0x120] sm:$0xf]
  %v94 = vld [vmem:[%s1 + $0x124] sm:$0xf]
  %v95 = vld [vmem:[%s1 + $0x128] sm:$0xf]
  %v96 = vld [vmem:[%s1 + $0x12c] sm:$0xf]
  %v97 = vld [vmem:[%s1 + $0x130] sm:$0xf]
  %v98 = vld [vmem:[%s1 + $0x134] sm:$0xf]
  %v99 = vld [vmem:[%s1 + $0x138] sm:$0xf]
  %v100 = vld [vmem:[%s1 + $0x13c] sm:$0xf]
  %v101 = vld [vmem:[%s1 + $0x140] sm:$0xf]
  %v102 = vld [vmem:[%s1 + $0x144] sm:$0xf]
  %v103 = vld [vmem:[%s1 + $0x148] sm:$0xf]
  %v104 = vld [vmem:[%s1 + $0x14c] sm:$0xf]
  %v105 = vld [vmem:[%s1 + $0x150] sm:$0xf]
  %v106 = vld [vmem:[%s1 + $0x154] sm:$0xf]
  %v107 = vld [vmem:[%s1 + $0x158] sm:$0xf]
  %v108 = vld [vmem:[%s1 + $0x15c] sm:$0xf]
  %v109 = vld [vmem:[%s1 + $0x160] sm:$0xf]
  %v110 = vld [vmem:[%s1 + $0x164] sm:$0xf]
  %v111 = vld [vmem:[%s1 + $0x168] sm:$0xf]
  %v112 = vld [vmem:[%s1 + $0x16c] sm:$0xf]
  %v113 = vld [vmem:[%s1 + $0x170] sm:$0xf]
  %v114 = vld [vmem:[%s1 + $0x174] sm:$0xf]
  %v115 = vld [vmem:[%s1 + $0x178] sm:$0xf]
  %v116 = vld [vmem:[%s1 + $0x17c] sm:$0xf]
  %v117 = vld [vmem:[%s2] sm:$0x1]
  %v119 = vlaneseq
  %v120 = vshrl.u32 %v119, 7
  %v121 = vsub.s32 0, %v120
  %v122 = vrot.slane %v117, %v121
  %v130 = vunpack.c.l.b16 %v15
  %v131 = vunpack.c.h.b16 %v15
  %v132 = vunpack.c.l.b16 %v16
  %v133 = vunpack.c.h.b16 %v16
  %v134 = vunpack.c.l.b16 %v17
  %v135 = vunpack.c.h.b16 %v17
  %v136 = vunpack.c.l.b16 %v18
  %v137 = vunpack.c.h.b16 %v18
  %v138 = vunpack.c.l.b16 %v19
  %v139 = vunpack.c.h.b16 %v19
  %v140 = vunpack.c.l.b16 %v20
  %v141 = vunpack.c.h.b16 %v20
  %v142 = vpack.c.b16 %v136, %v130
  %v143 = vpack.c.b16 %v137, %v131
  %v144 = vpack.c.b16 %v138, %v132
  %v145 = vpack.c.b16 %v139, %v133
  %v146 = vpack.c.b16 %v140, %v134
  %v147 = vpack.c.b16 %v141, %v135
  %v250 = vunpack.c.l.b16 %v21
  %v251 = vunpack.c.l.b16 %v22
  %v252 = vunpack.c.l.b16 %v23
  %v253 = vunpack.c.l.b16 %v24
  %v254 = vunpack.c.l.b16 %v25
  %v255 = vunpack.c.l.b16 %v26
  %v256 = vunpack.c.l.b16 %v27
  %v257 = vunpack.c.l.b16 %v28
  %v258 = vunpack.c.l.b16 %v29
  %v259 = vunpack.c.l.b16 %v30
  %v260 = vunpack.c.l.b16 %v31
  %v261 = vunpack.c.l.b16 %v32
  %v262 = vunpack.c.l.b16 %v33
  %v263 = vunpack.c.l.b16 %v34
  %v264 = vunpack.c.l.b16 %v35
  %v265 = vunpack.c.l.b16 %v36
  %v266 = vunpack.c.l.b16 %v37
  %v267 = vunpack.c.l.b16 %v38
  %v268 = vunpack.c.l.b16 %v39
  %v269 = vunpack.c.l.b16 %v40
  %v270 = vunpack.c.l.b16 %v41
  %v271 = vunpack.c.l.b16 %v42
  %v272 = vunpack.c.l.b16 %v43
  %v273 = vunpack.c.l.b16 %v44
  %v274 = vunpack.c.l.b16 %v45
  %v275 = vunpack.c.l.b16 %v46
  %v276 = vunpack.c.l.b16 %v47
  %v277 = vunpack.c.l.b16 %v48
  %v278 = vunpack.c.l.b16 %v49
  %v279 = vunpack.c.l.b16 %v50
  %v280 = vunpack.c.l.b16 %v51
  %v281 = vunpack.c.l.b16 %v52
  %v282 = vunpack.c.l.b16 %v53
  %v283 = vunpack.c.l.b16 %v54
  %v284 = vunpack.c.l.b16 %v55
  %v285 = vunpack.c.l.b16 %v56
  %v286 = vunpack.c.l.b16 %v57
  %v287 = vunpack.c.l.b16 %v58
  %v288 = vunpack.c.l.b16 %v59
  %v289 = vunpack.c.l.b16 %v60
  %v290 = vunpack.c.l.b16 %v61
  %v291 = vunpack.c.l.b16 %v62
  %v292 = vunpack.c.l.b16 %v63
  %v293 = vunpack.c.l.b16 %v64
  %v294 = vunpack.c.l.b16 %v65
  %v295 = vunpack.c.l.b16 %v66
  %v296 = vunpack.c.l.b16 %v67
  %v297 = vunpack.c.l.b16 %v68
  %v298 = vunpack.c.l.b16 %v69
  %v299 = vunpack.c.l.b16 %v70
  %v300 = vunpack.c.l.b16 %v71
  %v301 = vunpack.c.l.b16 %v72
  %v302 = vunpack.c.l.b16 %v73
  %v303 = vunpack.c.l.b16 %v74
  %v304 = vunpack.c.l.b16 %v75
  %v305 = vunpack.c.l.b16 %v76
  %v306 = vunpack.c.l.b16 %v77
  %v307 = vunpack.c.l.b16 %v78
  %v308 = vunpack.c.l.b16 %v79
  %v309 = vunpack.c.l.b16 %v80
  %v310 = vunpack.c.l.b16 %v81
  %v311 = vunpack.c.l.b16 %v82
  %v312 = vunpack.c.l.b16 %v83
  %v313 = vunpack.c.l.b16 %v84
  %v314 = vunpack.c.l.b16 %v85
  %v315 = vunpack.c.l.b16 %v86
  %v316 = vunpack.c.l.b16 %v87
  %v317 = vunpack.c.l.b16 %v88
  %v318 = vunpack.c.l.b16 %v89
  %v319 = vunpack.c.l.b16 %v90
  %v320 = vunpack.c.l.b16 %v91
  %v321 = vunpack.c.l.b16 %v92
  %v322 = vunpack.c.l.b16 %v93
  %v323 = vunpack.c.l.b16 %v94
  %v324 = vunpack.c.l.b16 %v95
  %v325 = vunpack.c.l.b16 %v96
  %v326 = vunpack.c.l.b16 %v97
  %v327 = vunpack.c.l.b16 %v98
  %v328 = vunpack.c.l.b16 %v99
  %v329 = vunpack.c.l.b16 %v100
  %v330 = vunpack.c.l.b16 %v101
  %v331 = vunpack.c.l.b16 %v102
  %v332 = vunpack.c.l.b16 %v103
  %v333 = vunpack.c.l.b16 %v104
  %v334 = vunpack.c.l.b16 %v105
  %v335 = vunpack.c.l.b16 %v106
  %v336 = vunpack.c.l.b16 %v107
  %v337 = vunpack.c.l.b16 %v108
  %v338 = vunpack.c.l.b16 %v109
  %v339 = vunpack.c.l.b16 %v110
  %v340 = vunpack.c.l.b16 %v111
  %v341 = vunpack.c.l.b16 %v112
  %v342 = vunpack.c.l.b16 %v113
  %v343 = vunpack.c.l.b16 %v114
  %v344 = vunpack.c.l.b16 %v115
  %v345 = vunpack.c.l.b16 %v116
  %v346 = vpack.c.b16 %v251, %v250
  %v347 = vpack.c.b16 %v253, %v252
  %v348 = vpack.c.b16 %v255, %v254
  %v349 = vpack.c.b16 %v257, %v256
  %v350 = vpack.c.b16 %v259, %v258
  %v351 = vpack.c.b16 %v261, %v260
  %v352 = vpack.c.b16 %v263, %v262
  %v353 = vpack.c.b16 %v265, %v264
  %v354 = vpack.c.b16 %v267, %v266
  %v355 = vpack.c.b16 %v269, %v268
  %v356 = vpack.c.b16 %v271, %v270
  %v357 = vpack.c.b16 %v273, %v272
  %v358 = vpack.c.b16 %v275, %v274
  %v359 = vpack.c.b16 %v277, %v276
  %v360 = vpack.c.b16 %v279, %v278
  %v361 = vpack.c.b16 %v281, %v280
  %v362 = vpack.c.b16 %v283, %v282
  %v363 = vpack.c.b16 %v285, %v284
  %v364 = vpack.c.b16 %v287, %v286
  %v365 = vpack.c.b16 %v289, %v288
  %v366 = vpack.c.b16 %v291, %v290
  %v367 = vpack.c.b16 %v293, %v292
  %v368 = vpack.c.b16 %v295, %v294
  %v369 = vpack.c.b16 %v297, %v296
  %v370 = vpack.c.b16 %v299, %v298
  %v371 = vpack.c.b16 %v301, %v300
  %v372 = vpack.c.b16 %v303, %v302
  %v373 = vpack.c.b16 %v305, %v304
  %v374 = vpack.c.b16 %v307, %v306
  %v375 = vpack.c.b16 %v309, %v308
  %v376 = vpack.c.b16 %v311, %v310
  %v377 = vpack.c.b16 %v313, %v312
  %v378 = vpack.c.b16 %v315, %v314
  %v379 = vpack.c.b16 %v317, %v316
  %v380 = vpack.c.b16 %v319, %v318
  %v381 = vpack.c.b16 %v321, %v320
  %v382 = vpack.c.b16 %v323, %v322
  %v383 = vpack.c.b16 %v325, %v324
  %v384 = vpack.c.b16 %v327, %v326
  %v385 = vpack.c.b16 %v329, %v328
  %v386 = vpack.c.b16 %v331, %v330
  %v387 = vpack.c.b16 %v333, %v332
  %v388 = vpack.c.b16 %v335, %v334
  %v389 = vpack.c.b16 %v337, %v336
  %v390 = vpack.c.b16 %v339, %v338
  %v391 = vpack.c.b16 %v341, %v340
  %v392 = vpack.c.b16 %v343, %v342
  %v393 = vpack.c.b16 %v345, %v344
  %442 = vmatprep.subr.bf16.mxu0 0
  %443 = vmatpush1.bf16.msra.mxu0 %v346
  %444 = vmatprep.subr.bf16.mxu0 0
  %445 = vmatpush1.bf16.msra.mxu0 %v347
  %446 = vmatprep.subr.bf16.mxu0 0
  %447 = vmatpush1.bf16.msra.mxu0 %v348
  %448 = vmatprep.subr.bf16.mxu0 0
  %449 = vmatpush1.bf16.msra.mxu0 %v349
  %450 = vmatprep.subr.bf16.mxu0 0
  %451 = vmatpush1.bf16.msra.mxu0 %v350
  %452 = vmatprep.subr.bf16.mxu0 0
  %453 = vmatpush1.bf16.msra.mxu0 %v351
  %454 = vmatprep.subr.bf16.mxu0 0
  %455 = vmatpush1.bf16.msra.mxu0 %v352
  %456 = vmatprep.subr.bf16.mxu0 0
  %457 = vmatpush1.bf16.msra.mxu0 %v353
  %458 = vmatprep.subr.bf16.mxu0 0
  %459 = vmatpush1.bf16.msra.mxu0 %v354
  %460 = vmatprep.subr.bf16.mxu0 0
  %461 = vmatpush1.bf16.msra.mxu0 %v355
  %462 = vmatprep.subr.bf16.mxu0 0
  %463 = vmatpush1.bf16.msra.mxu0 %v356
  %464 = vmatprep.subr.bf16.mxu0 0
  %465 = vmatpush1.bf16.msra.mxu0 %v357
  %466 = vmatprep.subr.bf16.mxu0 0
  %467 = vmatpush1.bf16.msra.mxu0 %v358
  %468 = vmatprep.subr.bf16.mxu0 0
  %469 = vmatpush1.bf16.msra.mxu0 %v359
  %470 = vmatprep.subr.bf16.mxu0 0
  %471 = vmatpush1.bf16.msra.mxu0 %v360
  %472 = vmatprep.subr.bf16.mxu0 0
  %473 = vmatpush1.bf16.msra.mxu0 %v361
  %474 = vmatprep.mubr.bf16.mxu0 %v143
  %475 = vmatmul.mubr.bf16.gmra.mrb[0].mxu0 %v142
  %v476 = vpop.f32.mrb[0].mxu0
  %v477 = vadd.f32 %v122, %v476
  %v478 = vpop.f32.mrb[0].mxu0
  %v479 = vpop.f32.mrb[0].mxu0
  %v480 = vadd.f32 %v122, %v479
  %v481 = vpop.f32.mrb[0].mxu0
  %482 = vdwg.mxu0
  %483 = vmatprep.subr.bf16.mxu0 0
  %484 = vmatpush1.bf16.msra.mxu0 %v362
  %485 = vmatprep.subr.bf16.mxu0 0
  %486 = vmatpush1.bf16.msra.mxu0 %v363
  %487 = vmatprep.subr.bf16.mxu0 0
  %488 = vmatpush1.bf16.msra.mxu0 %v364
  %489 = vmatprep.subr.bf16.mxu0 0
  %490 = vmatpush1.bf16.msra.mxu0 %v365
  %491 = vmatprep.subr.bf16.mxu0 0
  %492 = vmatpush1.bf16.msra.mxu0 %v366
  %493 = vmatprep.subr.bf16.mxu0 0
  %494 = vmatpush1.bf16.msra.mxu0 %v367
  %495 = vmatprep.subr.bf16.mxu0 0
  %496 = vmatpush1.bf16.msra.mxu0 %v368
  %497 = vmatprep.subr.bf16.mxu0 0
  %498 = vmatpush1.bf16.msra.mxu0 %v369
  %499 = vmatprep.subr.bf16.mxu0 0
  %500 = vmatpush1.bf16.msra.mxu0 %v370
  %501 = vmatprep.subr.bf16.mxu0 0
  %502 = vmatpush1.bf16.msra.mxu0 %v371
  %503 = vmatprep.subr.bf16.mxu0 0
  %504 = vmatpush1.bf16.msra.mxu0 %v372
  %505 = vmatprep.subr.bf16.mxu0 0
  %506 = vmatpush1.bf16.msra.mxu0 %v373
  %507 = vmatprep.subr.bf16.mxu0 0
  %508 = vmatpush1.bf16.msra.mxu0 %v374
  %509 = vmatprep.subr.bf16.mxu0 0
  %510 = vmatpush1.bf16.msra.mxu0 %v375
  %511 = vmatprep.subr.bf16.mxu0 0
  %512 = vmatpush1.bf16.msra.mxu0 %v376
  %513 = vmatprep.subr.bf16.mxu0 0
  %514 = vmatpush1.bf16.msra.mxu0 %v377
  %515 = vmatprep.mubr.bf16.mxu0 %v145
  %516 = vmatmul.mubr.bf16.gmra.mrb[0].mxu0 %v144
  %v517 = vpop.f32.mrb[0].mxu0
  %v518 = vadd.f32 %v477, %v517
  %v519 = vpop.f32.mrb[0].mxu0
  %v520 = vpop.f32.mrb[0].mxu0
  %v521 = vadd.f32 %v480, %v520
  %v522 = vpop.f32.mrb[0].mxu0
  %523 = vdwg.mxu0
  %524 = vmatprep.subr.bf16.mxu0 0
  %525 = vmatpush1.bf16.msra.mxu0 %v378
  %526 = vmatprep.subr.bf16.mxu0 0
  %527 = vmatpush1.bf16.msra.mxu0 %v379
  %528 = vmatprep.subr.bf16.mxu0 0
  %529 = vmatpush1.bf16.msra.mxu0 %v380
  %530 = vmatprep.subr.bf16.mxu0 0
  %531 = vmatpush1.bf16.msra.mxu0 %v381
  %532 = vmatprep.subr.bf16.mxu0 0
  %533 = vmatpush1.bf16.msra.mxu0 %v382
  %534 = vmatprep.subr.bf16.mxu0 0
  %535 = vmatpush1.bf16.msra.mxu0 %v383
  %536 = vmatprep.subr.bf16.mxu0 0
  %537 = vmatpush1.bf16.msra.mxu0 %v384
  %538 = vmatprep.subr.bf16.mxu0 0
  %539 = vmatpush1.bf16.msra.mxu0 %v385
  %540 = vmatprep.subr.bf16.mxu0 0
  %541 = vmatpush1.bf16.msra.mxu0 %v386
  %542 = vmatprep.subr.bf16.mxu0 0
  %543 = vmatpush1.bf16.msra.mxu0 %v387
  %544 = vmatprep.subr.bf16.mxu0 0
  %545 = vmatpush1.bf16.msra.mxu0 %v388
  %546 = vmatprep.subr.bf16.mxu0 0
  %547 = vmatpush1.bf16.msra.mxu0 %v389
  %548 = vmatprep.subr.bf16.mxu0 0
  %549 = vmatpush1.bf16.msra.mxu0 %v390
  %550 = vmatprep.subr.bf16.mxu0 0
  %551 = vmatpush1.bf16.msra.mxu0 %v391
  %552 = vmatprep.subr.bf16.mxu0 0
  %553 = vmatpush1.bf16.msra.mxu0 %v392
  %554 = vmatprep.subr.bf16.mxu0 0
  %555 = vmatpush1.bf16.msra.mxu0 %v393
  %556 = vmatprep.mubr.bf16.mxu0 %v147
  %557 = vmatmul.mubr.bf16.gmra.mrb[0].mxu0 %v146
  %v558 = vpop.f32.mrb[0].mxu0
  %v559 = vadd.f32 %v518, %v558
  %v560 = vpop.f32.mrb[0].mxu0
  %v561 = vpop.f32.mrb[0].mxu0
  %v562 = vadd.f32 %v521, %v561
  %v563 = vpop.f32.mrb[0].mxu0
  %564 = vdwg.mxu0
  %565 = vst [vmem:[%s3] sm:$0xff] %v559
  %566 = vst [vmem:[%s3 + $0x8] sm:$0xff] %v562
  // Predicated region
  $region14: #{petnet_forward.3} parent=0 // pred_check
    _
  $region15: #{petnet_forward.3} parent=0 // pred_check_branch
    %568 = sbr.rel (0) target = $region17
  $region16: #{petnet_forward.3} parent=0 // pred_region
    _
  $region17: #{petnet_forward.3} parent=0 // pred_fallthru
    _
  // Predicated region
  $region18: #{petnet_forward.3} parent=0 // pred_check
    _
  $region19: #{petnet_forward.3} parent=0 // pred_check_branch
    %570 = sbr.rel (0) target = $region21
  $region20: #{petnet_forward.3} parent=0 // pred_region
    _
  $region21: #{petnet_forward.3} parent=0 // pred_fallthru
    _

// kernel: petnet_forward.4
$region0: #{petnet_forward.4}
  #allocation0 [shape = 'u32[]', space=smem, size = 0x4, offset = 0x4, fixed_abs, tag = 'smem constant byte address 0x4 - core index']
  #allocation1 [shape = 'u32[144,128]{1,0:T(1,128)}', space=vmem, size = 0x12000, scoped, tag = 'internal scratch']
  %s0 = inlined_call_operand.vmem [shape: bf16[2,128,128], index: 0, kind: input, shape index: {}]
  %s1 = inlined_call_operand.vmem [shape: bf16[128,384], index: 1, kind: input, shape index: {}]
  %s2 = inlined_call_operand.vmem [shape: f32[1,384], index: 2, kind: input, shape index: {}]
  %s3 = inlined_call_operand.vmem [shape: bf16[4,32,128], index: 3, kind: input, shape index: {}]
  %s4 = inlined_call_operand.vmem [shape: f32[1,128], index: 4, kind: input, shape index: {}]
  %s5 = inlined_call_operand.vmem [shape: f32[1,128], index: 5, kind: input, shape index: {}]
  %s6 = inlined_call_operand.vmem [shape: f32[1,128], index: 6, kind: input, shape index: {}]
  %s7 = inlined_call_operand.vmem [shape: bf16[128,128], index: 7, kind: input, shape index: {}]
  %s8 = inlined_call_operand.vmem [shape: f32[1,128], index: 8, kind: input, shape index: {}]
  %s9 = inlined_call_operand.vmem [shape: bf16[128,128], index: 9, kind: input, shape index: {}]
  %s10 = inlined_call_operand.vmem [shape: f32[1,128], index: 10, kind: input, shape index: {}]
  %s11 = inlined_call_operand.vmem [shape: f32[1,128], index: 11, kind: input, shape index: {}]
  %s12 = inlined_call_operand.vmem [shape: f32[1,128], index: 12, kind: input, shape index: {}]
  %s13 = inlined_call_operand.vmem [shape: bf16[2,128,128], index: 13, kind: output, shape index: {}]
  %s14 = sld [smem:[#allocation0]]
  $region85: #{petnet_forward.4} parent=0
    _
  %s16 = ssub.s32 1, %s14
  %s17 = scalar_select 0, %s16, %s14
  loop: start=0, step=1, limit=4
  $region2: #{petnet_forward.4} parent=0 // loop_pre_header
    _
  $region3: #{petnet_forward.4} parent=0 // loop_header
    %s19 = sphi 0, %s23
    %p20 = scmp.ge.s32.totalorder %s19, 4
    %s29 = sphi 0, %s31
    %s32 = sphi 0, %s29
    %s33 = sphi 0, %s32
    %s49 = sphi 0, %s33
    %s53 = sphi 0, %s53
    %s55 = sphi 0, %s53
    %s56 = sphi 0, %s55
    %s70 = sphi 0, %s56
    %s74 = sphi 0, %s74
    %s76 = sphi 0, %s74
    %s77 = sphi 0, %s76
    %s91 = sphi 0, %s77
    %s95 = sphi 0, %s95
    %s97 = sphi 0, %s95
    %s98 = sphi 0, %s97
    %s112 = sphi 0, %s98
    %s116 = sphi 0, %s116
    %s118 = sphi 0, %s116
    %s119 = sphi 0, %s118
    %s133 = sphi 0, %s119
    %s137 = sphi 0, %s137
    %s139 = sphi 0, %s137
    %s140 = sphi 0, %s139
    %s154 = sphi 0, %s140
    %s158 = sphi 0, %s158
    %s160 = sphi 0, %s158
    %s161 = sphi 0, %s160
    %s175 = sphi 0, %s161
    %s179 = sphi 0, %s179
    %s181 = sphi 0, %s179
    %s182 = sphi 0, %s181
    %s196 = sphi 0, %s182
    %s200 = sphi 0, %s200
    %s202 = sphi 0, %s200
    %s203 = sphi 0, %s202
    %s217 = sphi 0, %s203
    %s221 = sphi 0, %s221
    %s223 = sphi 0, %s221
    %s224 = sphi 0, %s223
    %s238 = sphi 0, %s224
    %s242 = sphi 0, %s242
    %s244 = sphi 0, %s242
    %s245 = sphi 0, %s244
    %s259 = sphi 0, %s245
    %s263 = sphi 0, %s263
    %s265 = sphi 0, %s263
    %s266 = sphi 0, %s265
    %s280 = sphi 0, %s266
    %s284 = sphi 0, %s284
    %s286 = sphi 0, %s284
    %s287 = sphi 0, %s286
    %s301 = sphi 0, %s287
    %s307 = sphi 0, %s309
    %s310 = sphi 0, %s307
    %s311 = sphi 0, %s310
    %s327 = sphi 0, %s311
  $region4: #{petnet_forward.4} parent=0 // loop_header_branch
    %22 = sbr.rel (%p20) target = $region8
  $region5: #{petnet_forward.4} parent=0 // loop_body
    %s24 = ssub.s32 %s19, 1
    %s25 = ssub.s32 %s19, 2
    %s26 = sadd.s32 %s19, 1
    %s27 = ssub.s32 %s19, %s26
    %p28 = scmp.eq.s32.totalorder %s27, 0
    %s30 = sadd.s32 %s29, 1
    %s31 = scalar_select %p28, %s29, %s30
    %p34 = pneg %p28
    %p35 = scmp.eq.s32.totalorder %s19, 1
    %p36 = por %p34, %p35
    %p37 = scmp.ne.s32.totalorder %s29, %s32
    %p38 = scmp.eq.s32.totalorder %s19, 0
    %p39 = por %p37, %p38
    %p40 = scmp.ne.s32.totalorder %s29, %s32
    %p41 = scmp.eq.s32.totalorder %s24, 1
    %p42 = por %p40, %p41
    %p43 = scmp.ne.s32.totalorder %s32, %s33
    %p44 = scmp.eq.s32.totalorder %s24, 0
    %p45 = por %p43, %p44
    %p46 = scmp.ne.s32.totalorder %s32, %s33
    %p47 = scmp.eq.s32.totalorder %s25, 1
    %p48 = por %p46, %p47
    %p50 = scmp.ne.s32.totalorder %s33, %s49
    %p51 = scmp.eq.s32.totalorder %s25, 0
    %p52 = por %p50, %p51
    %s54 = sadd.s32 %s53, 1
    %p57 = scmp.eq.s32.totalorder %s19, 1
    %p58 = scmp.ne.s32.totalorder %s53, %s55
    %p59 = scmp.eq.s32.totalorder %s19, 0
    %p60 = por %p58, %p59
    %p61 = scmp.ne.s32.totalorder %s53, %s55
    %p62 = scmp.eq.s32.totalorder %s24, 1
    %p63 = por %p61, %p62
    %p64 = scmp.ne.s32.totalorder %s55, %s56
    %p65 = scmp.eq.s32.totalorder %s24, 0
    %p66 = por %p64, %p65
    %p67 = scmp.ne.s32.totalorder %s55, %s56
    %p68 = scmp.eq.s32.totalorder %s25, 1
    %p69 = por %p67, %p68
    %p71 = scmp.ne.s32.totalorder %s56, %s70
    %p72 = scmp.eq.s32.totalorder %s25, 0
    %p73 = por %p71, %p72
    %s75 = sadd.s32 %s74, 1
    %p78 = scmp.eq.s32.totalorder %s19, 1
    %p79 = scmp.ne.s32.totalorder %s74, %s76
    %p80 = scmp.eq.s32.totalorder %s19, 0
    %p81 = por %p79, %p80
    %p82 = scmp.ne.s32.totalorder %s74, %s76
    %p83 = scmp.eq.s32.totalorder %s24, 1
    %p84 = por %p82, %p83
    %p85 = scmp.ne.s32.totalorder %s76, %s77
    %p86 = scmp.eq.s32.totalorder %s24, 0
    %p87 = por %p85, %p86
    %p88 = scmp.ne.s32.totalorder %s76, %s77
    %p89 = scmp.eq.s32.totalorder %s25, 1
    %p90 = por %p88, %p89
    %p92 = scmp.ne.s32.totalorder %s77, %s91
    %p93 = scmp.eq.s32.totalorder %s25, 0
    %p94 = por %p92, %p93
    %s96 = sadd.s32 %s95, 1
    %p99 = scmp.eq.s32.totalorder %s19, 1
    %p100 = scmp.ne.s32.totalorder %s95, %s97
    %p101 = scmp.eq.s32.totalorder %s19, 0
    %p102 = por %p100, %p101
    %p103 = scmp.ne.s32.totalorder %s95, %s97
    %p104 = scmp.eq.s32.totalorder %s24, 1
    %p105 = por %p103, %p104
    %p106 = scmp.ne.s32.totalorder %s97, %s98
    %p107 = scmp.eq.s32.totalorder %s24, 0
    %p108 = por %p106, %p107
    %p109 = scmp.ne.s32.totalorder %s97, %s98
    %p110 = scmp.eq.s32.totalorder %s25, 1
    %p111 = por %p109, %p110
    %p113 = scmp.ne.s32.totalorder %s98, %s112
    %p114 = scmp.eq.s32.totalorder %s25, 0
    %p115 = por %p113, %p114
    %s117 = sadd.s32 %s116, 1
    %p120 = scmp.eq.s32.totalorder %s19, 1
    %p121 = scmp.ne.s32.totalorder %s116, %s118
    %p122 = scmp.eq.s32.totalorder %s19, 0
    %p123 = por %p121, %p122
    %p124 = scmp.ne.s32.totalorder %s116, %s118
    %p125 = scmp.eq.s32.totalorder %s24, 1
    %p126 = por %p124, %p125
    %p127 = scmp.ne.s32.totalorder %s118, %s119
    %p128 = scmp.eq.s32.totalorder %s24, 0
    %p129 = por %p127, %p128
    %p130 = scmp.ne.s32.totalorder %s118, %s119
    %p131 = scmp.eq.s32.totalorder %s25, 1
    %p132 = por %p130, %p131
    %p134 = scmp.ne.s32.totalorder %s119, %s133
    %p135 = scmp.eq.s32.totalorder %s25, 0
    %p136 = por %p134, %p135
    %s138 = sadd.s32 %s137, 1
    %p141 = scmp.eq.s32.totalorder %s19, 1
    %p142 = scmp.ne.s32.totalorder %s137, %s139
    %p143 = scmp.eq.s32.totalorder %s19, 0
    %p144 = por %p142, %p143
    %p145 = scmp.ne.s32.totalorder %s137, %s139
    %p146 = scmp.eq.s32.totalorder %s24, 1
    %p147 = por %p145, %p146
    %p148 = scmp.ne.s32.totalorder %s139, %s140
    %p149 = scmp.eq.s32.totalorder %s24, 0
    %p150 = por %p148, %p149
    %p151 = scmp.ne.s32.totalorder %s139, %s140
    %p152 = scmp.eq.s32.totalorder %s25, 1
    %p153 = por %p151, %p152
    %p155 = scmp.ne.s32.totalorder %s140, %s154
    %p156 = scmp.eq.s32.totalorder %s25, 0
    %p157 = por %p155, %p156
    %s159 = sadd.s32 %s158, 1
    %p162 = scmp.eq.s32.totalorder %s19, 1
    %p163 = scmp.ne.s32.totalorder %s158, %s160
    %p164 = scmp.eq.s32.totalorder %s19, 0
    %p165 = por %p163, %p164
    %p166 = scmp.ne.s32.totalorder %s158, %s160
    %p167 = scmp.eq.s32.totalorder %s24, 1
    %p168 = por %p166, %p167
    %p169 = scmp.ne.s32.totalorder %s160, %s161
    %p170 = scmp.eq.s32.totalorder %s24, 0
    %p171 = por %p169, %p170
    %p172 = scmp.ne.s32.totalorder %s160, %s161
    %p173 = scmp.eq.s32.totalorder %s25, 1
    %p174 = por %p172, %p173
    %p176 = scmp.ne.s32.totalorder %s161, %s175
    %p177 = scmp.eq.s32.totalorder %s25, 0
    %p178 = por %p176, %p177
    %s180 = sadd.s32 %s179, 1
    %p183 = scmp.eq.s32.totalorder %s19, 1
    %p184 = scmp.ne.s32.totalorder %s179, %s181
    %p185 = scmp.eq.s32.totalorder %s19, 0
    %p186 = por %p184, %p185
    %p187 = scmp.ne.s32.totalorder %s179, %s181
    %p188 = scmp.eq.s32.totalorder %s24, 1
    %p189 = por %p187, %p188
    %p190 = scmp.ne.s32.totalorder %s181, %s182
    %p191 = scmp.eq.s32.totalorder %s24, 0
    %p192 = por %p190, %p191
    %p193 = scmp.ne.s32.totalorder %s181, %s182
    %p194 = scmp.eq.s32.totalorder %s25, 1
    %p195 = por %p193, %p194
    %p197 = scmp.ne.s32.totalorder %s182, %s196
    %p198 = scmp.eq.s32.totalorder %s25, 0
    %p199 = por %p197, %p198
    %s201 = sadd.s32 %s200, 1
    %p204 = scmp.eq.s32.totalorder %s19, 1
    %p205 = scmp.ne.s32.totalorder %s200, %s202
    %p206 = scmp.eq.s32.totalorder %s19, 0
    %p207 = por %p205, %p206
    %p208 = scmp.ne.s32.totalorder %s200, %s202
    %p209 = scmp.eq.s32.totalorder %s24, 1
    %p210 = por %p208, %p209
    %p211 = scmp.ne.s32.totalorder %s202, %s203
    %p212 = scmp.eq.s32.totalorder %s24, 0
    %p213 = por %p211, %p212
    %p214 = scmp.ne.s32.totalorder %s202, %s203
    %p215 = scmp.eq.s32.totalorder %s25, 1
    %p216 = por %p214, %p215
    %p218 = scmp.ne.s32.totalorder %s203, %s217
    %p219 = scmp.eq.s32.totalorder %s25, 0
    %p220 = por %p218, %p219
    %s222 = sadd.s32 %s221, 1
    %p225 = scmp.eq.s32.totalorder %s19, 1
    %p226 = scmp.ne.s32.totalorder %s221, %s223
    %p227 = scmp.eq.s32.totalorder %s19, 0
    %p228 = por %p226, %p227
    %p229 = scmp.ne.s32.totalorder %s221, %s223
    %p230 = scmp.eq.s32.totalorder %s24, 1
    %p231 = por %p229, %p230
    %p232 = scmp.ne.s32.totalorder %s223, %s224
    %p233 = scmp.eq.s32.totalorder %s24, 0
    %p234 = por %p232, %p233
    %p235 = scmp.ne.s32.totalorder %s223, %s224
    %p236 = scmp.eq.s32.totalorder %s25, 1
    %p237 = por %p235, %p236
    %p239 = scmp.ne.s32.totalorder %s224, %s238
    %p240 = scmp.eq.s32.totalorder %s25, 0
    %p241 = por %p239, %p240
    %s243 = sadd.s32 %s242, 1
    %p246 = scmp.eq.s32.totalorder %s19, 1
    %p247 = scmp.ne.s32.totalorder %s242, %s244
    %p248 = scmp.eq.s32.totalorder %s19, 0
    %p249 = por %p247, %p248
    %p250 = scmp.ne.s32.totalorder %s242, %s244
    %p251 = scmp.eq.s32.totalorder %s24, 1
    %p252 = por %p250, %p251
    %p253 = scmp.ne.s32.totalorder %s244, %s245
    %p254 = scmp.eq.s32.totalorder %s24, 0
    %p255 = por %p253, %p254
    %p256 = scmp.ne.s32.totalorder %s244, %s245
    %p257 = scmp.eq.s32.totalorder %s25, 1
    %p258 = por %p256, %p257
    %p260 = scmp.ne.s32.totalorder %s245, %s259
    %p261 = scmp.eq.s32.totalorder %s25, 0
    %p262 = por %p260, %p261
    %s264 = sadd.s32 %s263, 1
    %p267 = scmp.eq.s32.totalorder %s19, 1
    %p268 = scmp.ne.s32.totalorder %s263, %s265
    %p269 = scmp.eq.s32.totalorder %s19, 0
    %p270 = por %p268, %p269
    %p271 = scmp.ne.s32.totalorder %s263, %s265
    %p272 = scmp.eq.s32.totalorder %s24, 1
    %p273 = por %p271, %p272
    %p274 = scmp.ne.s32.totalorder %s265, %s266
    %p275 = scmp.eq.s32.totalorder %s24, 0
    %p276 = por %p274, %p275
    %p277 = scmp.ne.s32.totalorder %s265, %s266
    %p278 = scmp.eq.s32.totalorder %s25, 1
    %p279 = por %p277, %p278
    %p281 = scmp.ne.s32.totalorder %s266, %s280
    %p282 = scmp.eq.s32.totalorder %s25, 0
    %p283 = por %p281, %p282
    %s285 = sadd.s32 %s284, 1
    %p288 = scmp.eq.s32.totalorder %s19, 1
    %p289 = scmp.ne.s32.totalorder %s284, %s286
    %p290 = scmp.eq.s32.totalorder %s19, 0
    %p291 = por %p289, %p290
    %p292 = scmp.ne.s32.totalorder %s284, %s286
    %p293 = scmp.eq.s32.totalorder %s24, 1
    %p294 = por %p292, %p293
    %p295 = scmp.ne.s32.totalorder %s286, %s287
    %p296 = scmp.eq.s32.totalorder %s24, 0
    %p297 = por %p295, %p296
    %p298 = scmp.ne.s32.totalorder %s286, %s287
    %p299 = scmp.eq.s32.totalorder %s25, 1
    %p300 = por %p298, %p299
    %p302 = scmp.ne.s32.totalorder %s287, %s301
    %p303 = scmp.eq.s32.totalorder %s25, 0
    %p304 = por %p302, %p303
    %s305 = ssub.s32 %s19, %s26
    %p306 = scmp.eq.s32.totalorder %s305, 0
    %s308 = sadd.s32 %s307, 1
    %s309 = scalar_select %p306, %s307, %s308
    %p312 = pneg %p306
    %p313 = scmp.eq.s32.totalorder %s19, 1
    %p314 = por %p312, %p313
    %p315 = scmp.ne.s32.totalorder %s307, %s310
    %p316 = scmp.eq.s32.totalorder %s19, 0
    %p317 = por %p315, %p316
    %p318 = scmp.ne.s32.totalorder %s307, %s310
    %p319 = scmp.eq.s32.totalorder %s24, 1
    %p320 = por %p318, %p319
    %p321 = scmp.ne.s32.totalorder %s310, %s311
    %p322 = scmp.eq.s32.totalorder %s24, 0
    %p323 = por %p321, %p322
    %p324 = scmp.ne.s32.totalorder %s310, %s311
    %p325 = scmp.eq.s32.totalorder %s25, 1
    %p326 = por %p324, %p325
    %p328 = scmp.ne.s32.totalorder %s311, %s327
    %p329 = scmp.eq.s32.totalorder %s25, 0
    %p330 = por %p328, %p329
    %p331 = scmp.le.s32.totalorder 1, %s19
    %p332 = scmp.lt.s32.totalorder %s19, 3
    %p333 = pnand %p331, %p332
    %p334 = pneg %p333
    // Predicated region
    $region9: #{petnet_forward.4} parent=5 // pred_check
      _
    $region10: #{petnet_forward.4} parent=5 // pred_check_branch
      %336 = sbr.rel (%p333) target = $region12
    $region11: #{petnet_forward.4} parent=5 // pred_region
      %s337 = ssub.s32 %s19, 1
      // Predicated region
      $region13: #{petnet_forward.4} parent=11 // pred_check
        %p338 = pneg %p66
      $region14: #{petnet_forward.4} parent=11 // pred_check_branch
        %340 = sbr.rel (%p338) target = $region16
      $region15: #{petnet_forward.4} parent=11 // pred_region
        _
      $region16: #{petnet_forward.4} parent=11 // pred_fallthru
        _
      // Predicated region
      $region17: #{petnet_forward.4} parent=11 // pred_check
        %p341 = pneg %p87
      $region18: #{petnet_forward.4} parent=11 // pred_check_branch
        %343 = sbr.rel (%p341) target = $region20
      $region19: #{petnet_forward.4} parent=11 // pred_region
        _
      $region20: #{petnet_forward.4} parent=11 // pred_fallthru
        _
      // Predicated region
      $region21: #{petnet_forward.4} parent=11 // pred_check
        %p344 = pneg %p108
      $region22: #{petnet_forward.4} parent=11 // pred_check_branch
        %346 = sbr.rel (%p344) target = $region24
      $region23: #{petnet_forward.4} parent=11 // pred_region
        _
      $region24: #{petnet_forward.4} parent=11 // pred_fallthru
        _
      // Predicated region
      $region25: #{petnet_forward.4} parent=11 // pred_check
        %p347 = pneg %p129
      $region26: #{petnet_forward.4} parent=11 // pred_check_branch
        %349 = sbr.rel (%p347) target = $region28
      $region27: #{petnet_forward.4} parent=11 // pred_region
        _
      $region28: #{petnet_forward.4} parent=11 // pred_fallthru
        _
      // Predicated region
      $region29: #{petnet_forward.4} parent=11 // pred_check
        %p350 = pneg %p150
      $region30: #{petnet_forward.4} parent=11 // pred_check_branch
        %352 = sbr.rel (%p350) target = $region32
      $region31: #{petnet_forward.4} parent=11 // pred_region
        _
      $region32: #{petnet_forward.4} parent=11 // pred_fallthru
        _
      // Predicated region
      $region33: #{petnet_forward.4} parent=11 // pred_check
        %p353 = pneg %p171
      $region34: #{petnet_forward.4} parent=11 // pred_check_branch
        %355 = sbr.rel (%p353) target = $region36
      $region35: #{petnet_forward.4} parent=11 // pred_region
        _
      $region36: #{petnet_forward.4} parent=11 // pred_fallthru
        _
      // Predicated region
      $region37: #{petnet_forward.4} parent=11 // pred_check
        %p356 = pneg %p192
      $region38: #{petnet_forward.4} parent=11 // pred_check_branch
        %358 = sbr.rel (%p356) target = $region40
      $region39: #{petnet_forward.4} parent=11 // pred_region
        _
      $region40: #{petnet_forward.4} parent=11 // pred_fallthru
        _
      // Predicated region
      $region41: #{petnet_forward.4} parent=11 // pred_check
        %p359 = pneg %p213
      $region42: #{petnet_forward.4} parent=11 // pred_check_branch
        %361 = sbr.rel (%p359) target = $region44
      $region43: #{petnet_forward.4} parent=11 // pred_region
        _
      $region44: #{petnet_forward.4} parent=11 // pred_fallthru
        _
      // Predicated region
      $region45: #{petnet_forward.4} parent=11 // pred_check
        %p362 = pneg %p234
      $region46: #{petnet_forward.4} parent=11 // pred_check_branch
        %364 = sbr.rel (%p362) target = $region48
      $region47: #{petnet_forward.4} parent=11 // pred_region
        _
      $region48: #{petnet_forward.4} parent=11 // pred_fallthru
        _
      // Predicated region
      $region49: #{petnet_forward.4} parent=11 // pred_check
        %p365 = pneg %p255
      $region50: #{petnet_forward.4} parent=11 // pred_check_branch
        %367 = sbr.rel (%p365) target = $region52
      $region51: #{petnet_forward.4} parent=11 // pred_region
        _
      $region52: #{petnet_forward.4} parent=11 // pred_fallthru
        _
      // Predicated region
      $region53: #{petnet_forward.4} parent=11 // pred_check
        %p368 = pneg %p276
      $region54: #{petnet_forward.4} parent=11 // pred_check_branch
        %370 = sbr.rel (%p368) target = $region56
      $region55: #{petnet_forward.4} parent=11 // pred_region
        _
      $region56: #{petnet_forward.4} parent=11 // pred_fallthru
        _
      // Predicated region
      $region57: #{petnet_forward.4} parent=11 // pred_check
        %p371 = pneg %p297
      $region58: #{petnet_forward.4} parent=11 // pred_check_branch
        %373 = sbr.rel (%p371) target = $region60
      $region59: #{petnet_forward.4} parent=11 // pred_region
        _
      $region60: #{petnet_forward.4} parent=11 // pred_fallthru
        _
    $region12: #{petnet_forward.4} parent=5 // pred_fallthru
      _
    %p374 = scmp.lt.s32.totalorder %s19, 2
    // Predicated region
    $region61: #{petnet_forward.4} parent=5 // pred_check
      %p375 = pneg %p374
    $region62: #{petnet_forward.4} parent=5 // pred_check_branch
      %377 = sbr.rel (%p375) target = $region64
    $region63: #{petnet_forward.4} parent=5 // pred_region
      // Predicated region
      $region65: #{petnet_forward.4} parent=63 // pred_check
        %p378 = pneg %p39
      $region66: #{petnet_forward.4} parent=63 // pred_check_branch
        %380 = sbr.rel (%p378) target = $region68
      $region67: #{petnet_forward.4} parent=63 // pred_region
        %p381 = scmp.lt.s32.totalorder %s19, 1
        %s382 = scalar_select %p381, %s19, 1
        %s383 = smul.addr %s382, 16
        %s384 = smul.addr %s383, 4
        %s385 = scalar_lea.vmem %s0, %s384
      $region68: #{petnet_forward.4} parent=63 // pred_fallthru
        _
    $region64: #{petnet_forward.4} parent=5 // pred_fallthru
      _
    %p386 = scmp.le.s32.totalorder 1, %s19
    %p387 = scmp.lt.s32.totalorder %s19, 3
    %p388 = pnand %p386, %p387
    %p389 = pneg %p388
    // Predicated region
    $region69: #{petnet_forward.4} parent=5 // pred_check
      _
    $region70: #{petnet_forward.4} parent=5 // pred_check_branch
      %391 = sbr.rel (%p388) target = $region72
    $region71: #{petnet_forward.4} parent=5 // pred_region
      %s392 = ssub.s32 %s19, 1
      %p393 = scmp.lt.s32.totalorder %s24, 1
      %s394 = scalar_select %p393, %s24, 1
      %s395 = smul.addr %s394, 16
      %s396 = smul.addr %s395, 4
      %s397 = scalar_lea.vmem %s0, %s396
      %p398 = pneg %p45
      %p399 = pneg %p42
      %p400 = pneg %p66
      %p401 = pneg %p63
      %p402 = pneg %p87
      %p403 = pneg %p84
      %p404 = pneg %p108
      %p405 = pneg %p105
      %p406 = pneg %p129
      %p407 = pneg %p126
      %p408 = pneg %p150
      %p409 = pneg %p147
      %p410 = pneg %p171
      %p411 = pneg %p168
      %p412 = pneg %p192
      %p413 = pneg %p189
      %p414 = pneg %p213
      %p415 = pneg %p210
      %p416 = pneg %p234
      %p417 = pneg %p231
      %p418 = pneg %p255
      %p419 = pneg %p252
      %p420 = pneg %p276
      %p421 = pneg %p273
      %p422 = pneg %p297
      %p423 = pneg %p294
      %p424 = pneg %p323
      %p425 = pneg %p320
      %p426 = scmp.lt.s32.totalorder %s24, 1
      %s427 = scalar_select %p426, %s24, 1
      %s428 = smul.addr %s427, 16
      %s429 = smul.addr %s428, 4
      %s430 = scalar_lea.vmem %s13, %s429
      %p431 = scmp.lt.s32.totalorder %s24, 1
      %s432 = scalar_select %p431, %s24, 1
      %s433 = smul.addr %s432, 16
      %s434 = smul.addr %s433, 4
      %s435 = scalar_lea.vmem %s0, %s434
      %p436 = scmp.lt.s32.totalorder %s24, 1
      %s437 = scalar_select %p436, %s24, 1
      %s438 = smul.addr %s437, 16
      %s439 = smul.addr %s438, 4
      %s440 = scalar_lea.vmem %s13, %s439
      %v442 = vld [vmem:[%s435] sm:$0xf]
      %v443 = vld [vmem:[%s435 + $0x4] sm:$0xf]
      %v444 = vld [vmem:[%s435 + $0x8] sm:$0xf]
      %v445 = vld [vmem:[%s435 + $0xc] sm:$0xf]
      %v446 = vld [vmem:[%s435 + $0x10] sm:$0xf]
      %v447 = vld [vmem:[%s435 + $0x14] sm:$0xf]
      %v448 = vld [vmem:[%s435 + $0x18] sm:$0xf]
      %v449 = vld [vmem:[%s435 + $0x1c] sm:$0xf]
      %v450 = vld [vmem:[%s435 + $0x20] sm:$0xf]
      %v451 = vld [vmem:[%s435 + $0x24] sm:$0xf]
      %v452 = vld [vmem:[%s435 + $0x28] sm:$0xf]
      %v453 = vld [vmem:[%s435 + $0x2c] sm:$0xf]
      %v454 = vld [vmem:[%s435 + $0x30] sm:$0xf]
      %v455 = vld [vmem:[%s435 + $0x34] sm:$0xf]
      %v456 = vld [vmem:[%s435 + $0x38] sm:$0xf]
      %v457 = vld [vmem:[%s435 + $0x3c] sm:$0xf]
      %v458 = vunpack.c.l.bf16 %v442
      %v459 = vunpack.c.l.bf16 %v443
      %v460 = vunpack.c.l.bf16 %v444
      %v461 = vunpack.c.l.bf16 %v445
      %v462 = vunpack.c.l.bf16 %v446
      %v463 = vunpack.c.l.bf16 %v447
      %v464 = vunpack.c.l.bf16 %v448
      %v465 = vunpack.c.l.bf16 %v449
      %v466 = vunpack.c.l.bf16 %v450
      %v467 = vunpack.c.l.bf16 %v451
      %v468 = vunpack.c.l.bf16 %v452
      %v469 = vunpack.c.l.bf16 %v453
      %v470 = vunpack.c.l.bf16 %v454
      %v471 = vunpack.c.l.bf16 %v455
      %v472 = vunpack.c.l.bf16 %v456
      %v473 = vunpack.c.l.bf16 %v457
      %v474 = vld [vmem:[%s1] sm:$0xff]
      %v475 = vld [vmem:[%s1 + $0x8] sm:$0xf]
      %v476 = vld [vmem:[%s1 + $0xc] sm:$0xff]
      %v477 = vld [vmem:[%s1 + $0x14] sm:$0xf]
      %v478 = vld [vmem:[%s1 + $0x18] sm:$0xff]
      %v479 = vld [vmem:[%s1 + $0x20] sm:$0xf]
      %v480 = vld [vmem:[%s1 + $0x24] sm:$0xff]
      %v481 = vld [vmem:[%s1 + $0x2c] sm:$0xf]
      %v482 = vld [vmem:[%s1 + $0x30] sm:$0xff]
      %v483 = vld [vmem:[%s1 + $0x38] sm:$0xf]
      %v484 = vld [vmem:[%s1 + $0x3c] sm:$0xff]
      %v485 = vld [vmem:[%s1 + $0x44] sm:$0xf]
      %v486 = vld [vmem:[%s1 + $0x48] sm:$0xff]
      %v487 = vld [vmem:[%s1 + $0x50] sm:$0xf]
      %v488 = vld [vmem:[%s1 + $0x54] sm:$0xff]
      %v489 = vld [vmem:[%s1 + $0x5c] sm:$0xf]
      %v490 = vld [vmem:[%s1 + $0x60] sm:$0xff]
      %v491 = vld [vmem:[%s1 + $0x68] sm:$0xf]
      %v492 = vld [vmem:[%s1 + $0x6c] sm:$0xff]
      %v493 = vld [vmem:[%s1 + $0x74] sm:$0xf]
      %v494 = vld [vmem:[%s1 + $0x78] sm:$0xff]
      %v495 = vld [vmem:[%s1 + $0x80] sm:$0xf]
      %v496 = vld [vmem:[%s1 + $0x84] sm:$0xff]
      %v497 = vld [vmem:[%s1 + $0x8c] sm:$0xf]
      %v498 = vld [vmem:[%s1 + $0x90] sm:$0xff]
      %v499 = vld [vmem:[%s1 + $0x98] sm:$0xf]
      %v500 = vld [vmem:[%s1 + $0x9c] sm:$0xff]
      %v501 = vld [vmem:[%s1 + $0xa4] sm:$0xf]
      %v502 = vld [vmem:[%s1 + $0xa8] sm:$0xff]
      %v503 = vld [vmem:[%s1 + $0xb0] sm:$0xf]
      %v504 = vld [vmem:[%s1 + $0xb4] sm:$0xff]
      %v505 = vld [vmem:[%s1 + $0xbc] sm:$0xf]
      %v506 = vld [vmem:[%s2] sm:$0x7]
      %v508 = vlaneseq
      %v509 = vshrl.u32 %v508, 7
      %v510 = vsub.s32 0, %v509
      %v511 = vrot.slane %v506, %v510
      %v512 = vlaneseq
      %v513 = vshrl.u32 %v512, 7
      %v514 = vsub.s32 1, %v513
      %v515 = vrot.slane %v506, %v514
      %v516 = vlaneseq
      %v517 = vshrl.u32 %v516, 7
      %v518 = vsub.s32 2, %v517
      %v519 = vrot.slane %v506, %v518
      %v539 = vunpack.c.l.b16 %v442
      %v540 = vunpack.c.l.b16 %v443
      %v541 = vunpack.c.l.b16 %v444
      %v542 = vunpack.c.l.b16 %v445
      %v543 = vunpack.c.l.b16 %v446
      %v544 = vunpack.c.l.b16 %v447
      %v545 = vunpack.c.l.b16 %v448
      %v546 = vunpack.c.l.b16 %v449
      %v547 = vunpack.c.l.b16 %v450
      %v548 = vunpack.c.l.b16 %v451
      %v549 = vunpack.c.l.b16 %v452
      %v550 = vunpack.c.l.b16 %v453
      %v551 = vunpack.c.l.b16 %v454
      %v552 = vunpack.c.l.b16 %v455
      %v553 = vunpack.c.l.b16 %v456
      %v554 = vunpack.c.l.b16 %v457
      %v555 = vpack.c.b16 %v540, %v539
      %v556 = vpack.c.b16 %v542, %v541
      %v557 = vpack.c.b16 %v544, %v543
      %v558 = vpack.c.b16 %v546, %v545
      %v559 = vpack.c.b16 %v548, %v547
      %v560 = vpack.c.b16 %v550, %v549
      %v561 = vpack.c.b16 %v552, %v551
      %v562 = vpack.c.b16 %v554, %v553
      %v603 = vunpack.c.l.b16 %v474
      %v604 = vunpack.c.h.b16 %v474
      %v605 = vunpack.c.l.b16 %v475
      %v606 = vunpack.c.l.b16 %v476
      %v607 = vunpack.c.h.b16 %v476
      %v608 = vunpack.c.l.b16 %v477
      %v609 = vunpack.c.l.b16 %v478
      %v610 = vunpack.c.h.b16 %v478
      %v611 = vunpack.c.l.b16 %v479
      %v612 = vunpack.c.l.b16 %v480
      %v613 = vunpack.c.h.b16 %v480
      %v614 = vunpack.c.l.b16 %v481
      %v615 = vunpack.c.l.b16 %v482
      %v616 = vunpack.c.h.b16 %v482
      %v617 = vunpack.c.l.b16 %v483
      %v618 = vunpack.c.l.b16 %v484
      %v619 = vunpack.c.h.b16 %v484
      %v620 = vunpack.c.l.b16 %v485
      %v621 = vunpack.c.l.b16 %v486
      %v622 = vunpack.c.h.b16 %v486
      %v623 = vunpack.c.l.b16 %v487
      %v624 = vunpack.c.l.b16 %v488
      %v625 = vunpack.c.h.b16 %v488
      %v626 = vunpack.c.l.b16 %v489
      %v627 = vunpack.c.l.b16 %v490
      %v628 = vunpack.c.h.b16 %v490
      %v629 = vunpack.c.l.b16 %v491
      %v630 = vunpack.c.l.b16 %v492
      %v631 = vunpack.c.h.b16 %v492
      %v632 = vunpack.c.l.b16 %v493
      %v633 = vunpack.c.l.b16 %v494
      %v634 = vunpack.c.h.b16 %v494
      %v635 = vunpack.c.l.b16 %v495
      %v636 = vunpack.c.l.b16 %v496
      %v637 = vunpack.c.h.b16 %v496
      %v638 = vunpack.c.l.b16 %v497
      %v639 = vunpack.c.l.b16 %v498
      %v640 = vunpack.c.h.b16 %v498
      %v641 = vunpack.c.l.b16 %v499
      %v642 = vunpack.c.l.b16 %v500
      %v643 = vunpack.c.h.b16 %v500
      %v644 = vunpack.c.l.b16 %v501
      %v645 = vunpack.c.l.b16 %v502
      %v646 = vunpack.c.h.b16 %v502
      %v647 = vunpack.c.l.b16 %v503
      %v648 = vunpack.c.l.b16 %v504
      %v649 = vunpack.c.h.b16 %v504
      %v650 = vunpack.c.l.b16 %v505
      %v651 = vpack.c.b16 %v606, %v603
      %v652 = vpack.c.b16 %v607, %v604
      %v653 = vpack.c.b16 %v608, %v605
      %v654 = vpack.c.b16 %v612, %v609
      %v655 = vpack.c.b16 %v613, %v610
      %v656 = vpack.c.b16 %v614, %v611
      %v657 = vpack.c.b16 %v618, %v615
      %v658 = vpack.c.b16 %v619, %v616
      %v659 = vpack.c.b16 %v620, %v617
      %v660 = vpack.c.b16 %v624, %v621
      %v661 = vpack.c.b16 %v625, %v622
      %v662 = vpack.c.b16 %v626, %v623
      %v663 = vpack.c.b16 %v630, %v627
      %v664 = vpack.c.b16 %v631, %v628
      %v665 = vpack.c.b16 %v632, %v629
      %v666 = vpack.c.b16 %v636, %v633
      %v667 = vpack.c.b16 %v637, %v634
      %v668 = vpack.c.b16 %v638, %v635
      %v669 = vpack.c.b16 %v642, %v639
      %v670 = vpack.c.b16 %v643, %v640
      %v671 = vpack.c.b16 %v644, %v641
      %v672 = vpack.c.b16 %v648, %v645
      %v673 = vpack.c.b16 %v649, %v646
      %v674 = vpack.c.b16 %v650, %v647
      %699 = vmatprep.subr.bf16.mxu0 %v652
      %700 = vmatpush1.bf16.msra.mxu0 %v651
      %701 = vmatprep.subr.bf16.mxu0 %v655
      %702 = vmatpush1.bf16.msra.mxu0 %v654
      %703 = vmatprep.subr.bf16.mxu0 %v658
      %704 = vmatpush1.bf16.msra.mxu0 %v657
      %705 = vmatprep.subr.bf16.mxu0 %v661
      %706 = vmatpush1.bf16.msra.mxu0 %v660
      %707 = vmatprep.subr.bf16.mxu0 %v664
      %708 = vmatpush1.bf16.msra.mxu0 %v663
      %709 = vmatprep.subr.bf16.mxu0 %v667
      %710 = vmatpush1.bf16.msra.mxu0 %v666
      %711 = vmatprep.subr.bf16.mxu0 %v670
      %712 = vmatpush1.bf16.msra.mxu0 %v669
      %713 = vmatprep.subr.bf16.mxu0 %v673
      %714 = vmatpush1.bf16.msra.mxu0 %v672
      %715 = vmatprep.subr.bf16.mxu0 0
      %716 = vmatpush1.bf16.msra.mxu0 0
      %717 = vmatprep.subr.bf16.mxu0 0
      %718 = vmatpush1.bf16.msra.mxu0 0
      %719 = vmatprep.subr.bf16.mxu0 0
      %720 = vmatpush1.bf16.msra.mxu0 0
      %721 = vmatprep.subr.bf16.mxu0 0
      %722 = vmatpush1.bf16.msra.mxu0 0
      %723 = vmatprep.subr.bf16.mxu0 0
      %724 = vmatpush1.bf16.msra.mxu0 0
      %725 = vmatprep.subr.bf16.mxu0 0
      %726 = vmatpush1.bf16.msra.mxu0 0
      %727 = vmatprep.subr.bf16.mxu0 0
      %728 = vmatpush1.bf16.msra.mxu0 0
      %729 = vmatprep.subr.bf16.mxu0 0
      %730 = vmatpush1.bf16.msra.mxu0 0
      %731 = vmatprep.mubr.bf16.mxu0 0
      %732 = vmatmul.mubr.bf16.gmra.mrb[0].mxu0 %v555
      %v733 = vpop.f32.mrb[0].mxu0
      %v734 = vadd.f32 %v511, %v733
      %v735 = vpop.f32.mrb[0].mxu0
      %v736 = vadd.f32 %v515, %v735
      %v737 = vpop.f32.mrb[0].mxu0
      %v738 = vadd.f32 %v511, %v737
      %v739 = vpop.f32.mrb[0].mxu0
      %v740 = vadd.f32 %v515, %v739
      %741 = vmatprep.mubr.bf16.mxu0 0
      %742 = vmatmul.mubr.bf16.gmra.mrb[0].mxu0 %v556
      %v743 = vpop.f32.mrb[0].mxu0
      %v744 = vadd.f32 %v511, %v743
      %v745 = vpop.f32.mrb[0].mxu0
      %v746 = vadd.f32 %v515, %v745
      %v747 = vpop.f32.mrb[0].mxu0
      %v748 = vadd.f32 %v511, %v747
      %v749 = vpop.f32.mrb[0].mxu0
      %v750 = vadd.f32 %v515, %v749
      %751 = vmatprep.mubr.bf16.mxu0 0
      %752 = vmatmul.mubr.bf16.gmra.mrb[0].mxu0 %v557
      %v753 = vpop.f32.mrb[0].mxu0
      %v754 = vadd.f32 %v511, %v753
      %v755 = vpop.f32.mrb[0].mxu0
      %v756 = vadd.f32 %v515, %v755
      %v757 = vpop.f32.mrb[0].mxu0
      %v758 = vadd.f32 %v511, %v757
      %v759 = vpop.f32.mrb[0].mxu0
      %v760 = vadd.f32 %v515, %v759
      %761 = vmatprep.mubr.bf16.mxu0 0
      %762 = vmatmul.mubr.bf16.gmra.mrb[0].mxu0 %v558
      %v763 = vpop.f32.mrb[0].mxu0
      %v764 = vadd.f32 %v511, %v763
      %v765 = vpop.f32.mrb[0].mxu0
      %v766 = vadd.f32 %v515, %v765
      %v767 = vpop.f32.mrb[0].mxu0
      %v768 = vadd.f32 %v511, %v767
      %v769 = vpop.f32.mrb[0].mxu0
      %v770 = vadd.f32 %v515, %v769
      %771 = vmatprep.mubr.bf16.mxu0 0
      %772 = vmatmul.mubr.bf16.gmra.mrb[0].mxu0 %v559
      %v773 = vpop.f32.mrb[0].mxu0
      %v774 = vadd.f32 %v511, %v773
      %v775 = vpop.f32.mrb[0].mxu0
      %v776 = vadd.f32 %v515, %v775
      %v777 = vpop.f32.mrb[0].mxu0
      %v778 = vadd.f32 %v511, %v777
      %v779 = vpop.f32.mrb[0].mxu0
      %v780 = vadd.f32 %v515, %v779
      %781 = vmatprep.mubr.bf16.mxu0 0
      %782 = vmatmul.mubr.bf16.gmra.mrb[0].mxu0 %v560
      %v783 = vpop.f32.mrb[0].mxu0
      %v784 = vadd.f32 %v511, %v783
      %v785 = vpop.f32.mrb[0].mxu0
      %v786 = vadd.f32 %v515, %v785
      %v787 = vpop.f32.mrb[0].mxu0
      %v788 = vadd.f32 %v511, %v787
      %v789 = vpop.f32.mrb[0].mxu0
      %v790 = vadd.f32 %v515, %v789
      %791 = vmatprep.mubr.bf16.mxu0 0
      %792 = vmatmul.mubr.bf16.gmra.mrb[0].mxu0 %v561
      %v793 = vpop.f32.mrb[0].mxu0
      %v794 = vadd.f32 %v511, %v793
      %v795 = vpop.f32.mrb[0].mxu0
      %v796 = vadd.f32 %v515, %v795
      %v797 = vpop.f32.mrb[0].mxu0
      %v798 = vadd.f32 %v511, %v797
      %v799 = vpop.f32.mrb[0].mxu0
      %v800 = vadd.f32 %v515, %v799
      %801 = vmatprep.mubr.bf16.mxu0 0
      %802 = vmatmul.mubr.bf16.gmra.mrb[0].mxu0 %v562
      %v803 = vpop.f32.mrb[0].mxu0
      %v804 = vadd.f32 %v511, %v803
      %v805 = vpop.f32.mrb[0].mxu0
      %v806 = vadd.f32 %v515, %v805
      %v807 = vpop.f32.mrb[0].mxu0
      %v808 = vadd.f32 %v511, %v807
      %v809 = vpop.f32.mrb[0].mxu0
      %v810 = vadd.f32 %v515, %v809
      %811 = vdwg.mxu0
      %812 = vmatprep.subr.bf16.mxu0 0
      %813 = vmatpush1.bf16.msra.mxu0 %v653
      %814 = vmatprep.subr.bf16.mxu0 0
      %815 = vmatpush1.bf16.msra.mxu0 %v656
      %816 = vmatprep.subr.bf16.mxu0 0
      %817 = vmatpush1.bf16.msra.mxu0 %v659
      %818 = vmatprep.subr.bf16.mxu0 0
      %819 = vmatpush1.bf16.msra.mxu0 %v662
      %820 = vmatprep.subr.bf16.mxu0 0
      %821 = vmatpush1.bf16.msra.mxu0 %v665
      %822 = vmatprep.subr.bf16.mxu0 0
      %823 = vmatpush1.bf16.msra.mxu0 %v668
      %824 = vmatprep.subr.bf16.mxu0 0
      %825 = vmatpush1.bf16.msra.mxu0 %v671
      %826 = vmatprep.subr.bf16.mxu0 0
      %827 = vmatpush1.bf16.msra.mxu0 %v674
      %828 = vmatprep.subr.bf16.mxu0 0
      %829 = vmatpush1.bf16.msra.mxu0 0
      %830 = vmatprep.subr.bf16.mxu0 0
      %831 = vmatpush1.bf16.msra.mxu0 0
      %832 = vmatprep.subr.bf16.mxu0 0
      %833 = vmatpush1.bf16.msra.mxu0 0
      %834 = vmatprep.subr.bf16.mxu0 0
      %835 = vmatpush1.bf16.msra.mxu0 0
      %836 = vmatprep.subr.bf16.mxu0 0
      %837 = vmatpush1.bf16.msra.mxu0 0
      %838 = vmatprep.subr.bf16.mxu0 0
      %839 = vmatpush1.bf16.msra.mxu0 0
      %840 = vmatprep.subr.bf16.mxu0 0
      %841 = vmatpush1.bf16.msra.mxu0 0
      %842 = vmatprep.subr.bf16.mxu0 0
      %843 = vmatpush1.bf16.msra.mxu0 0
      %844 = vmatprep.mubr.bf16.mxu0 0
      %845 = vmatmul.mubr.bf16.gmra.mrb[0].mxu0 %v555
      %v846 = vpop.f32.mrb[0].mxu0
      %v847 = vadd.f32 %v519, %v846
      %v848 = vpop.f32.mrb[0].mxu0
      %v849 = vpop.f32.mrb[0].mxu0
      %v850 = vadd.f32 %v519, %v849
      %v851 = vpop.f32.mrb[0].mxu0
      %852 = vmatprep.mubr.bf16.mxu0 0
      %853 = vmatmul.mubr.bf16.gmra.mrb[0].mxu0 %v556
      %v854 = vpop.f32.mrb[0].mxu0
      %v855 = vadd.f32 %v519, %v854
      %v856 = vpop.f32.mrb[0].mxu0
      %v857 = vpop.f32.mrb[0].mxu0
      %v858 = vadd.f32 %v519, %v857
      %v859 = vpop.f32.mrb[0].mxu0
      %860 = vmatprep.mubr.bf16.mxu0 0
      %861 = vmatmul.mubr.bf16.gmra.mrb[0].mxu0 %v557
      %v862 = vpop.f32.mrb[0].mxu0
      %v863 = vadd.f32 %v519, %v862
      %v864 = vpop.f32.mrb[0].mxu0
      %v865 = vpop.f32.mrb[0].mxu0
      %v866 = vadd.f32 %v519, %v865
      %v867 = vpop.f32.mrb[0].mxu0
      %868 = vmatprep.mubr.bf16.mxu0 0
      %869 = vmatmul.mubr.bf16.gmra.mrb[0].mxu0 %v558
      %v870 = vpop.f32.mrb[0].mxu0
      %v871 = vadd.f32 %v519, %v870
      %v872 = vpop.f32.mrb[0].mxu0
      %v873 = vpop.f32.mrb[0].mxu0
      %v874 = vadd.f32 %v519, %v873
      %v875 = vpop.f32.mrb[0].mxu0
      %876 = vmatprep.mubr.bf16.mxu0 0
      %877 = vmatmul.mubr.bf16.gmra.mrb[0].mxu0 %v559
      %v878 = vpop.f32.mrb[0].mxu0
      %v879 = vadd.f32 %v519, %v878
      %v880 = vpop.f32.mrb[0].mxu0
      %v881 = vpop.f32.mrb[0].mxu0
      %v882 = vadd.f32 %v519, %v881
      %v883 = vpop.f32.mrb[0].mxu0
      %884 = vmatprep.mubr.bf16.mxu0 0
      %885 = vmatmul.mubr.bf16.gmra.mrb[0].mxu0 %v560
      %v886 = vpop.f32.mrb[0].mxu0
      %v887 = vadd.f32 %v519, %v886
      %v888 = vpop.f32.mrb[0].mxu0
      %v889 = vpop.f32.mrb[0].mxu0
      %v890 = vadd.f32 %v519, %v889
      %v891 = vpop.f32.mrb[0].mxu0
      %892 = vmatprep.mubr.bf16.mxu0 0
      %893 = vmatmul.mubr.bf16.gmra.mrb[0].mxu0 %v561
      %v894 = vpop.f32.mrb[0].mxu0
      %v895 = vadd.f32 %v519, %v894
      %v896 = vpop.f32.mrb[0].mxu0
      %v897 = vpop.f32.mrb[0].mxu0
      %v898 = vadd.f32 %v519, %v897
      %v899 = vpop.f32.mrb[0].mxu0
      %900 = vmatprep.mubr.bf16.mxu0 0
      %901 = vmatmul.mubr.bf16.gmra.mrb[0].mxu0 %v562
      %v902 = vpop.f32.mrb[0].mxu0
      %v903 = vadd.f32 %v519, %v902
      %v904 = vpop.f32.mrb[0].mxu0
      %v905 = vpop.f32.mrb[0].mxu0
      %v906 = vadd.f32 %v519, %v905
      %v907 = vpop.f32.mrb[0].mxu0
      %908 = vdwg.mxu0
      %v909 = vlaneseq
      %v910 = vand.u32 %v909, 127
      %vm911 = vcmp.lt.s32.totalorder %v910, 5
      %v912 = vsel %vm911, 0.0, -1e+30
      %v913 = vpack.c.bf16 %v738, %v734
      %v914 = vpack.c.bf16 %v748, %v744
      %v915 = vpack.c.bf16 %v758, %v754
      %v916 = vpack.c.bf16 %v768, %v764
      %v917 = vpack.c.bf16 %v778, %v774
      %v918 = vpack.c.bf16 %v788, %v784
      %v919 = vpack.c.bf16 %v798, %v794
      %v920 = vpack.c.bf16 %v808, %v804
      %v921 = vpack.c.bf16 %v740, %v736
      %v922 = vpack.c.bf16 %v750, %v746
      %v923 = vpack.c.bf16 %v760, %v756
      %v924 = vpack.c.bf16 %v770, %v766
      %v925 = vpack.c.bf16 %v780, %v776
      %v926 = vpack.c.bf16 %v790, %v786
      %v927 = vpack.c.bf16 %v800, %v796
      %v928 = vpack.c.bf16 %v810, %v806
      %v929 = vpack.c.bf16 %v850, %v847
      %v930 = vpack.c.bf16 %v858, %v855
      %v931 = vpack.c.bf16 %v866, %v863
      %v932 = vpack.c.bf16 %v874, %v871
      %v933 = vpack.c.bf16 %v882, %v879
      %v934 = vpack.c.bf16 %v890, %v887
      %v935 = vpack.c.bf16 %v898, %v895
      %v936 = vpack.c.bf16 %v906, %v903
      %vm937 = vcmask 261120
      %v939 = vsel %vm937, %v913, 0
      %v942 = vsel %vm937, %v914, 0
      %v945 = vsel %vm937, %v915, 0
      %v948 = vsel %vm937, %v916, 0
      %v951 = vsel %vm937, %v917, 0
      %v954 = vsel %vm937, %v918, 0
      %v957 = vsel %vm937, %v919, 0
      %v960 = vsel %vm937, %v920, 0
      %v963 = vsel %vm937, %v921, 0
      %v966 = vsel %vm937, %v922, 0
      %v969 = vsel %vm937, %v923, 0
      %v972 = vsel %vm937, %v924, 0
      %v975 = vsel %vm937, %v925, 0
      %v978 = vsel %vm937, %v926, 0
      %v981 = vsel %vm937, %v927, 0
      %v984 = vsel %vm937, %v928, 0
      %986 = vmatprep.subr.bf16.mxu0 0
      %987 = vmatpush1.bf16.xpose.msra.mxu0 %v963
      %988 = vmatprep.subr.bf16.mxu0 0
      %989 = vmatpush1.bf16.xpose.msra.mxu0 %v966
      %990 = vmatprep.subr.bf16.mxu0 0
      %991 = vmatpush1.bf16.xpose.msra.mxu0 %v969
      %992 = vmatprep.subr.bf16.mxu0 0
      %993 = vmatpush1.bf16.xpose.msra.mxu0 %v972
      %994 = vmatprep.subr.bf16.mxu0 0
      %995 = vmatpush1.bf16.xpose.msra.mxu0 %v975
      %996 = vmatprep.subr.bf16.mxu0 0
      %997 = vmatpush1.bf16.xpose.msra.mxu0 %v978
      %998 = vmatprep.subr.bf16.mxu0 0
      %999 = vmatpush1.bf16.xpose.msra.mxu0 %v981
      %1000 = vmatprep.subr.bf16.mxu0 0
      %1001 = vmatpush1.bf16.xpose.msra.mxu0 %v984
      %1002 = vmatprep.subr.bf16.mxu0 0
      %1003 = vmatpush1.bf16.xpose.msra.mxu0 0
      %1004 = vmatprep.subr.bf16.mxu0 0
      %1005 = vmatpush1.bf16.xpose.msra.mxu0 0
      %1006 = vmatprep.subr.bf16.mxu0 0
      %1007 = vmatpush1.bf16.xpose.msra.mxu0 0
      %1008 = vmatprep.subr.bf16.mxu0 0
      %1009 = vmatpush1.bf16.xpose.msra.mxu0 0
      %1010 = vmatprep.subr.bf16.mxu0 0
      %1011 = vmatpush1.bf16.xpose.msra.mxu0 0
      %1012 = vmatprep.subr.bf16.mxu0 0
      %1013 = vmatpush1.bf16.xpose.msra.mxu0 0
      %1014 = vmatprep.subr.bf16.mxu0 0
      %1015 = vmatpush1.bf16.xpose.msra.mxu0 0
      %1016 = vmatprep.subr.bf16.mxu0 0
      %1017 = vmatpush1.bf16.xpose.msra.mxu0 0
      %1018 = vmatprep.mubr.bf16.mxu0 0
      %1019 = vmatmul.mubr.bf16.gmra.mrb[0].mxu0 %v939
      %v1020 = vpop.f32.mrb[0].mxu0
      %v1021 = vadd.f32 %v912, %v1020
      %v1022 = vpop.f32.mrb[0].mxu0
      %v1023 = vpop.f32.mrb[0].mxu0
      %v1024 = vadd.f32 %v912, %v1023
      %v1025 = vpop.f32.mrb[0].mxu0
      %1026 = vmatprep.mubr.bf16.mxu0 0
      %1027 = vmatmul.mubr.bf16.gmra.mrb[0].mxu0 %v942
      %v1028 = vpop.f32.mrb[0].mxu0
      %v1029 = vadd.f32 %v912, %v1028
      %v1030 = vpop.f32.mrb[0].mxu0
      %v1031 = vpop.f32.mrb[0].mxu0
      %v1032 = vadd.f32 %v912, %v1031
      %v1033 = vpop.f32.mrb[0].mxu0
      %1034 = vmatprep.mubr.bf16.mxu0 0
      %1035 = vmatmul.mubr.bf16.gmra.mrb[0].mxu0 %v945
      %v1036 = vpop.f32.mrb[0].mxu0
      %v1037 = vadd.f32 %v912, %v1036
      %v1038 = vpop.f32.mrb[0].mxu0
      %v1039 = vpop.f32.mrb[0].mxu0
      %v1040 = vadd.f32 %v912, %v1039
      %v1041 = vpop.f32.mrb[0].mxu0
      %1042 = vmatprep.mubr.bf16.mxu0 0
      %1043 = vmatmul.mubr.bf16.gmra.mrb[0].mxu0 %v948
      %v1044 = vpop.f32.mrb[0].mxu0
      %v1045 = vadd.f32 %v912, %v1044
      %v1046 = vpop.f32.mrb[0].mxu0
      %v1047 = vpop.f32.mrb[0].mxu0
      %v1048 = vadd.f32 %v912, %v1047
      %v1049 = vpop.f32.mrb[0].mxu0
      %1050 = vmatprep.mubr.bf16.mxu0 0
      %1051 = vmatmul.mubr.bf16.gmra.mrb[0].mxu0 %v951
      %v1052 = vpop.f32.mrb[0].mxu0
      %v1053 = vadd.f32 %v912, %v1052
      %v1054 = vpop.f32.mrb[0].mxu0
      %v1055 = vpop.f32.mrb[0].mxu0
      %v1056 = vadd.f32 %v912, %v1055
      %v1057 = vpop.f32.mrb[0].mxu0
      %1058 = vmatprep.mubr.bf16.mxu0 0
      %1059 = vmatmul.mubr.bf16.gmra.mrb[0].mxu0 %v954
      %v1060 = vpop.f32.mrb[0].mxu0
      %v1061 = vadd.f32 %v912, %v1060
      %v1062 = vpop.f32.mrb[0].mxu0
      %v1063 = vpop.f32.mrb[0].mxu0
      %v1064 = vadd.f32 %v912, %v1063
      %v1065 = vpop.f32.mrb[0].mxu0
      %1066 = vmatprep.mubr.bf16.mxu0 0
      %1067 = vmatmul.mubr.bf16.gmra.mrb[0].mxu0 %v957
      %v1068 = vpop.f32.mrb[0].mxu0
      %v1069 = vadd.f32 %v912, %v1068
      %v1070 = vpop.f32.mrb[0].mxu0
      %v1071 = vpop.f32.mrb[0].mxu0
      %v1072 = vadd.f32 %v912, %v1071
      %v1073 = vpop.f32.mrb[0].mxu0
      %1074 = vmatprep.mubr.bf16.mxu0 0
      %1075 = vmatmul.mubr.bf16.gmra.mrb[0].mxu0 %v960
      %v1076 = vpop.f32.mrb[0].mxu0
      %v1077 = vadd.f32 %v912, %v1076
      %v1078 = vpop.f32.mrb[0].mxu0
      %v1079 = vpop.f32.mrb[0].mxu0
      %v1080 = vadd.f32 %v912, %v1079
      %v1081 = vpop.f32.mrb[0].mxu0
      %1082 = vdwg.mxu0
      %1083 = vmax.xlane.f32.xlu0 %v1021
      %v1084 = vpop.xlane.xlu0 %1083
      %1085 = vmax.xlane.f32.xlu0 %v1024
      %v1086 = vpop.xlane.xlu0 %1085
      %1087 = vmax.xlane.f32.xlu0 %v1029
      %v1088 = vpop.xlane.xlu0 %1087
      %1089 = vmax.xlane.f32.xlu0 %v1032
      %v1090 = vpop.xlane.xlu0 %1089
      %1091 = vmax.xlane.f32.xlu0 %v1037
      %v1092 = vpop.xlane.xlu0 %1091
      %1093 = vmax.xlane.f32.xlu0 %v1040
      %v1094 = vpop.xlane.xlu0 %1093
      %1095 = vmax.xlane.f32.xlu0 %v1045
      %v1096 = vpop.xlane.xlu0 %1095
      %1097 = vmax.xlane.f32.xlu0 %v1048
      %v1098 = vpop.xlane.xlu0 %1097
      %1099 = vmax.xlane.f32.xlu0 %v1053
      %v1100 = vpop.xlane.xlu0 %1099
      %1101 = vmax.xlane.f32.xlu0 %v1056
      %v1102 = vpop.xlane.xlu0 %1101
      %1103 = vmax.xlane.f32.xlu0 %v1061
      %v1104 = vpop.xlane.xlu0 %1103
      %1105 = vmax.xlane.f32.xlu0 %v1064
      %v1106 = vpop.xlane.xlu0 %1105
      %1107 = vmax.xlane.f32.xlu0 %v1069
      %v1108 = vpop.xlane.xlu0 %1107
      %1109 = vmax.xlane.f32.xlu0 %v1072
      %v1110 = vpop.xlane.xlu0 %1109
      %1111 = vmax.xlane.f32.xlu0 %v1077
      %v1112 = vpop.xlane.xlu0 %1111
      %1113 = vmax.xlane.f32.xlu0 %v1080
      %v1114 = vpop.xlane.xlu0 %1113
      %v1115 = vsub.f32 %v1021, %v1084
      %v1116 = vsub.f32 %v1024, %v1086
      %v1117 = vsub.f32 %v1029, %v1088
      %v1118 = vsub.f32 %v1032, %v1090
      %v1119 = vsub.f32 %v1037, %v1092
      %v1120 = vsub.f32 %v1040, %v1094
      %v1121 = vsub.f32 %v1045, %v1096
      %v1122 = vsub.f32 %v1048, %v1098
      %v1123 = vsub.f32 %v1053, %v1100
      %v1124 = vsub.f32 %v1056, %v1102
      %v1125 = vsub.f32 %v1061, %v1104
      %v1126 = vsub.f32 %v1064, %v1106
      %v1127 = vsub.f32 %v1069, %v1108
      %v1128 = vsub.f32 %v1072, %v1110
      %v1129 = vsub.f32 %v1077, %v1112
      %v1130 = vsub.f32 %v1080, %v1114
      %v1131 = vmul.f32 %v1115, 1.442695
      %v1132 = vpow.pop %v1131
      %v1133 = vmul.f32 %v1116, 1.442695
      %v1134 = vpow.pop %v1133
      %v1135 = vmul.f32 %v1117, 1.442695
      %v1136 = vpow.pop %v1135
      %v1137 = vmul.f32 %v1118, 1.442695
      %v1138 = vpow.pop %v1137
      %v1139 = vmul.f32 %v1119, 1.442695
      %v1140 = vpow.pop %v1139
      %v1141 = vmul.f32 %v1120, 1.442695
      %v1142 = vpow.pop %v1141
      %v1143 = vmul.f32 %v1121, 1.442695
      %v1144 = vpow.pop %v1143
      %v1145 = vmul.f32 %v1122, 1.442695
      %v1146 = vpow.pop %v1145
      %v1147 = vmul.f32 %v1123, 1.442695
      %v1148 = vpow.pop %v1147
      %v1149 = vmul.f32 %v1124, 1.442695
      %v1150 = vpow.pop %v1149
      %v1151 = vmul.f32 %v1125, 1.442695
      %v1152 = vpow.pop %v1151
      %v1153 = vmul.f32 %v1126, 1.442695
      %v1154 = vpow.pop %v1153
      %v1155 = vmul.f32 %v1127, 1.442695
      %v1156 = vpow.pop %v1155
      %v1157 = vmul.f32 %v1128, 1.442695
      %v1158 = vpow.pop %v1157
      %v1159 = vmul.f32 %v1129, 1.442695
      %v1160 = vpow.pop %v1159
      %v1161 = vmul.f32 %v1130, 1.442695
      %v1162 = vpow.pop %v1161
      %1163 = vadd.xlane.f32.xlu0 %v1132
      %v1164 = vpop.xlane.xlu0 %1163
      %1165 = vadd.xlane.f32.xlu0 %v1134
      %v1166 = vpop.xlane.xlu0 %1165
      %1167 = vadd.xlane.f32.xlu0 %v1136
      %v1168 = vpop.xlane.xlu0 %1167
      %1169 = vadd.xlane.f32.xlu0 %v1138
      %v1170 = vpop.xlane.xlu0 %1169
      %1171 = vadd.xlane.f32.xlu0 %v1140
      %v1172 = vpop.xlane.xlu0 %1171
      %1173 = vadd.xlane.f32.xlu0 %v1142
      %v1174 = vpop.xlane.xlu0 %1173
      %1175 = vadd.xlane.f32.xlu0 %v1144
      %v1176 = vpop.xlane.xlu0 %1175
      %1177 = vadd.xlane.f32.xlu0 %v1146
      %v1178 = vpop.xlane.xlu0 %1177
      %1179 = vadd.xlane.f32.xlu0 %v1148
      %v1180 = vpop.xlane.xlu0 %1179
      %1181 = vadd.xlane.f32.xlu0 %v1150
      %v1182 = vpop.xlane.xlu0 %1181
      %1183 = vadd.xlane.f32.xlu0 %v1152
      %v1184 = vpop.xlane.xlu0 %1183
      %1185 = vadd.xlane.f32.xlu0 %v1154
      %v1186 = vpop.xlane.xlu0 %1185
      %1187 = vadd.xlane.f32.xlu0 %v1156
      %v1188 = vpop.xlane.xlu0 %1187
      %1189 = vadd.xlane.f32.xlu0 %v1158
      %v1190 = vpop.xlane.xlu0 %1189
      %1191 = vadd.xlane.f32.xlu0 %v1160
      %v1192 = vpop.xlane.xlu0 %1191
      %1193 = vadd.xlane.f32.xlu0 %v1162
      %v1194 = vpop.xlane.xlu0 %1193
      %v1195 = vrcp.pop %v1164
      %v1196 = vrcp.pop %v1166
      %v1197 = vrcp.pop %v1168
      %v1198 = vrcp.pop %v1170
      %v1199 = vrcp.pop %v1172
      %v1200 = vrcp.pop %v1174
      %v1201 = vrcp.pop %v1176
      %v1202 = vrcp.pop %v1178
      %v1203 = vrcp.pop %v1180
      %v1204 = vrcp.pop %v1182
      %v1205 = vrcp.pop %v1184
      %v1206 = vrcp.pop %v1186
      %v1207 = vrcp.pop %v1188
      %v1208 = vrcp.pop %v1190
      %v1209 = vrcp.pop %v1192
      %v1210 = vrcp.pop %v1194
      %v1211 = vmul.f32 %v1132, %v1195
      %v1212 = vmul.f32 %v1134, %v1196
      %v1213 = vmul.f32 %v1136, %v1197
      %v1214 = vmul.f32 %v1138, %v1198
      %v1215 = vmul.f32 %v1140, %v1199
      %v1216 = vmul.f32 %v1142, %v1200
      %v1217 = vmul.f32 %v1144, %v1201
      %v1218 = vmul.f32 %v1146, %v1202
      %v1219 = vmul.f32 %v1148, %v1203
      %v1220 = vmul.f32 %v1150, %v1204
      %v1221 = vmul.f32 %v1152, %v1205
      %v1222 = vmul.f32 %v1154, %v1206
      %v1223 = vmul.f32 %v1156, %v1207
      %v1224 = vmul.f32 %v1158, %v1208
      %v1225 = vmul.f32 %v1160, %v1209
      %v1226 = vmul.f32 %v1162, %v1210
      %v1227 = vpack.c.bf16 %v1212, %v1211
      %v1228 = vpack.c.bf16 %v1214, %v1213
      %v1229 = vpack.c.bf16 %v1216, %v1215
      %v1230 = vpack.c.bf16 %v1218, %v1217
      %v1231 = vpack.c.bf16 %v1220, %v1219
      %v1232 = vpack.c.bf16 %v1222, %v1221
      %v1233 = vpack.c.bf16 %v1224, %v1223
      %v1234 = vpack.c.bf16 %v1226, %v1225
      %1235 = vmatprep.subr.bf16.mxu0 0
      %1236 = vmatpush1.bf16.msra.mxu0 %v929
      %1237 = vmatprep.subr.bf16.mxu0 0
      %1238 = vmatpush1.bf16.msra.mxu0 %v930
      %1239 = vmatprep.subr.bf16.mxu0 0
      %1240 = vmatpush1.bf16.msra.mxu0 %v931
      %1241 = vmatprep.subr.bf16.mxu0 0
      %1242 = vmatpush1.bf16.msra.mxu0 %v932
      %1243 = vmatprep.subr.bf16.mxu0 0
      %1244 = vmatpush1.bf16.msra.mxu0 %v933
      %1245 = vmatprep.subr.bf16.mxu0 0
      %1246 = vmatpush1.bf16.msra.mxu0 %v934
      %1247 = vmatprep.subr.bf16.mxu0 0
      %1248 = vmatpush1.bf16.msra.mxu0 %v935
      %1249 = vmatprep.subr.bf16.mxu0 0
      %1250 = vmatpush1.bf16.msra.mxu0 %v936
      %1251 = vmatprep.subr.bf16.mxu0 0
      %1252 = vmatpush1.bf16.msra.mxu0 0
      %1253 = vmatprep.subr.bf16.mxu0 0
      %1254 = vmatpush1.bf16.msra.mxu0 0
      %1255 = vmatprep.subr.bf16.mxu0 0
      %1256 = vmatpush1.bf16.msra.mxu0 0
      %1257 = vmatprep.subr.bf16.mxu0 0
      %1258 = vmatpush1.bf16.msra.mxu0 0
      %1259 = vmatprep.subr.bf16.mxu0 0
      %1260 = vmatpush1.bf16.msra.mxu0 0
      %1261 = vmatprep.subr.bf16.mxu0 0
      %1262 = vmatpush1.bf16.msra.mxu0 0
      %1263 = vmatprep.subr.bf16.mxu0 0
      %1264 = vmatpush1.bf16.msra.mxu0 0
      %1265 = vmatprep.subr.bf16.mxu0 0
      %1266 = vmatpush1.bf16.msra.mxu0 0
      %1267 = vmatprep.mubr.bf16.mxu0 0
      %1268 = vmatmul.mubr.bf16.gmra.mrb[0].mxu0 %v1227
      %v1269 = vpop.f32.mrb[0].mxu0
      %v1270 = vadd.f32 0.0, %v1269
      %v1271 = vpop.f32.mrb[0].mxu0
      %v1272 = vpop.f32.mrb[0].mxu0
      %v1273 = vadd.f32 0.0, %v1272
      %v1274 = vpop.f32.mrb[0].mxu0
      %1275 = vmatprep.mubr.bf16.mxu0 0
      %1276 = vmatmul.mubr.bf16.gmra.mrb[0].mxu0 %v1228
      %v1277 = vpop.f32.mrb[0].mxu0
      %v1278 = vadd.f32 0.0, %v1277
      %v1279 = vpop.f32.mrb[0].mxu0
      %v1280 = vpop.f32.mrb[0].mxu0
      %v1281 = vadd.f32 0.0, %v1280
      %v1282 = vpop.f32.mrb[0].mxu0
      %1283 = vmatprep.mubr.bf16.mxu0 0
      %1284 = vmatmul.mubr.bf16.gmra.mrb[0].mxu0 %v1229
      %v1285 = vpop.f32.mrb[0].mxu0
      %v1286 = vadd.f32 0.0, %v1285
      %v1287 = vpop.f32.mrb[0].mxu0
      %v1288 = vpop.f32.mrb[0].mxu0
      %v1289 = vadd.f32 0.0, %v1288
      %v1290 = vpop.f32.mrb[0].mxu0
      %1291 = vmatprep.mubr.bf16.mxu0 0
      %1292 = vmatmul.mubr.bf16.gmra.mrb[0].mxu0 %v1230
      %v1293 = vpop.f32.mrb[0].mxu0
      %v1294 = vadd.f32 0.0, %v1293
      %v1295 = vpop.f32.mrb[0].mxu0
      %v1296 = vpop.f32.mrb[0].mxu0
      %v1297 = vadd.f32 0.0, %v1296
      %v1298 = vpop.f32.mrb[0].mxu0
      %1299 = vmatprep.mubr.bf16.mxu0 0
      %1300 = vmatmul.mubr.bf16.gmra.mrb[0].mxu0 %v1231
      %v1301 = vpop.f32.mrb[0].mxu0
      %v1302 = vadd.f32 0.0, %v1301
      %v1303 = vpop.f32.mrb[0].mxu0
      %v1304 = vpop.f32.mrb[0].mxu0
      %v1305 = vadd.f32 0.0, %v1304
      %v1306 = vpop.f32.mrb[0].mxu0
      %1307 = vmatprep.mubr.bf16.mxu0 0
      %1308 = vmatmul.mubr.bf16.gmra.mrb[0].mxu0 %v1232
      %v1309 = vpop.f32.mrb[0].mxu0
      %v1310 = vadd.f32 0.0, %v1309
      %v1311 = vpop.f32.mrb[0].mxu0
      %v1312 = vpop.f32.mrb[0].mxu0
      %v1313 = vadd.f32 0.0, %v1312
      %v1314 = vpop.f32.mrb[0].mxu0
      %1315 = vmatprep.mubr.bf16.mxu0 0
      %1316 = vmatmul.mubr.bf16.gmra.mrb[0].mxu0 %v1233
      %v1317 = vpop.f32.mrb[0].mxu0
      %v1318 = vadd.f32 0.0, %v1317
      %v1319 = vpop.f32.mrb[0].mxu0
      %v1320 = vpop.f32.mrb[0].mxu0
      %v1321 = vadd.f32 0.0, %v1320
      %v1322 = vpop.f32.mrb[0].mxu0
      %1323 = vmatprep.mubr.bf16.mxu0 0
      %1324 = vmatmul.mubr.bf16.gmra.mrb[0].mxu0 %v1234
      %v1325 = vpop.f32.mrb[0].mxu0
      %v1326 = vadd.f32 0.0, %v1325
      %v1327 = vpop.f32.mrb[0].mxu0
      %v1328 = vpop.f32.mrb[0].mxu0
      %v1329 = vadd.f32 0.0, %v1328
      %v1330 = vpop.f32.mrb[0].mxu0
      %1331 = vdwg.mxu0
      %v1332 = vpack.c.bf16 %v1273, %v1270
      %v1333 = vpack.c.bf16 %v1281, %v1278
      %v1334 = vpack.c.bf16 %v1289, %v1286
      %v1335 = vpack.c.bf16 %v1297, %v1294
      %v1336 = vpack.c.bf16 %v1305, %v1302
      %v1337 = vpack.c.bf16 %v1313, %v1310
      %v1338 = vpack.c.bf16 %v1321, %v1318
      %v1339 = vpack.c.bf16 %v1329, %v1326
      %v1340 = vld [vmem:[%s3] sm:$0xf]
      %v1341 = vld [vmem:[%s3 + $0x4] sm:$0xf]
      %v1342 = vld [vmem:[%s3 + $0x8] sm:$0xf]
      %v1343 = vld [vmem:[%s3 + $0xc] sm:$0xf]
      %1352 = vrot.lane.b32.xlu0 %v913, 96
      %v1353 = vpop.permute.xlu0 %1352
      %1354 = vrot.lane.b32.xlu0 %v914, 96
      %v1355 = vpop.permute.xlu0 %1354
      %1356 = vrot.lane.b32.xlu0 %v915, 96
      %v1357 = vpop.permute.xlu0 %1356
      %1358 = vrot.lane.b32.xlu0 %v916, 96
      %v1359 = vpop.permute.xlu0 %1358
      %1360 = vrot.lane.b32.xlu0 %v917, 96
      %v1361 = vpop.permute.xlu0 %1360
      %1362 = vrot.lane.b32.xlu0 %v918, 96
      %v1363 = vpop.permute.xlu0 %1362
      %1364 = vrot.lane.b32.xlu0 %v919, 96
      %v1365 = vpop.permute.xlu0 %1364
      %1366 = vrot.lane.b32.xlu0 %v920, 96
      %v1367 = vpop.permute.xlu0 %1366
      %1376 = vrot.lane.b32.xlu0 %v921, 96
      %v1377 = vpop.permute.xlu0 %1376
      %1378 = vrot.lane.b32.xlu0 %v922, 96
      %v1379 = vpop.permute.xlu0 %1378
      %1380 = vrot.lane.b32.xlu0 %v923, 96
      %v1381 = vpop.permute.xlu0 %1380
      %1382 = vrot.lane.b32.xlu0 %v924, 96
      %v1383 = vpop.permute.xlu0 %1382
      %1384 = vrot.lane.b32.xlu0 %v925, 96
      %v1385 = vpop.permute.xlu0 %1384
      %1386 = vrot.lane.b32.xlu0 %v926, 96
      %v1387 = vpop.permute.xlu0 %1386
      %1388 = vrot.lane.b32.xlu0 %v927, 96
      %v1389 = vpop.permute.xlu0 %1388
      %1390 = vrot.lane.b32.xlu0 %v928, 96
      %v1391 = vpop.permute.xlu0 %1390
      %v1393 = vsel %vm937, %v1353, 0
      %v1396 = vsel %vm937, %v1355, 0
      %v1399 = vsel %vm937, %v1357, 0
      %v1402 = vsel %vm937, %v1359, 0
      %v1405 = vsel %vm937, %v1361, 0
      %v1408 = vsel %vm937, %v1363, 0
      %v1411 = vsel %vm937, %v1365, 0
      %v1414 = vsel %vm937, %v1367, 0
      %v1417 = vsel %vm937, %v1377, 0
      %v1420 = vsel %vm937, %v1379, 0
      %v1423 = vsel %vm937, %v1381, 0
      %v1426 = vsel %vm937, %v1383, 0
      %v1429 = vsel %vm937, %v1385, 0
      %v1432 = vsel %vm937, %v1387, 0
      %v1435 = vsel %vm937, %v1389, 0
      %v1438 = vsel %vm937, %v1391, 0
      %1440 = vmatprep.subr.bf16.mxu0 0
      %1441 = vmatpush1.bf16.xpose.msra.mxu0 %v1417
      %1442 = vmatprep.subr.bf16.mxu0 0
      %1443 = vmatpush1.bf16.xpose.msra.mxu0 %v1420
      %1444 = vmatprep.subr.bf16.mxu0 0
      %1445 = vmatpush1.bf16.xpose.msra.mxu0 %v1423
      %1446 = vmatprep.subr.bf16.mxu0 0
      %1447 = vmatpush1.bf16.xpose.msra.mxu0 %v1426
      %1448 = vmatprep.subr.bf16.mxu0 0
      %1449 = vmatpush1.bf16.xpose.msra.mxu0 %v1429
      %1450 = vmatprep.subr.bf16.mxu0 0
      %1451 = vmatpush1.bf16.xpose.msra.mxu0 %v1432
      %1452 = vmatprep.subr.bf16.mxu0 0
      %1453 = vmatpush1.bf16.xpose.msra.mxu0 %v1435
      %1454 = vmatprep.subr.bf16.mxu0 0
      %1455 = vmatpush1.bf16.xpose.msra.mxu0 %v1438
      %1456 = vmatprep.subr.bf16.mxu0 0
      %1457 = vmatpush1.bf16.xpose.msra.mxu0 0
      %1458 = vmatprep.subr.bf16.mxu0 0
      %1459 = vmatpush1.bf16.xpose.msra.mxu0 0
      %1460 = vmatprep.subr.bf16.mxu0 0
      %1461 = vmatpush1.bf16.xpose.msra.mxu0 0
      %1462 = vmatprep.subr.bf16.mxu0 0
      %1463 = vmatpush1.bf16.xpose.msra.mxu0 0
      %1464 = vmatprep.subr.bf16.mxu0 0
      %1465 = vmatpush1.bf16.xpose.msra.mxu0 0
      %1466 = vmatprep.subr.bf16.mxu0 0
      %1467 = vmatpush1.bf16.xpose.msra.mxu0 0
      %1468 = vmatprep.subr.bf16.mxu0 0
      %1469 = vmatpush1.bf16.xpose.msra.mxu0 0
      %1470 = vmatprep.subr.bf16.mxu0 0
      %1471 = vmatpush1.bf16.xpose.msra.mxu0 0
      %1472 = vmatprep.mubr.bf16.mxu0 0
      %1473 = vmatmul.mubr.bf16.gmra.mrb[0].mxu0 %v1393
      %v1474 = vpop.f32.mrb[0].mxu0
      %v1475 = vadd.f32 %v912, %v1474
      %v1476 = vpop.f32.mrb[0].mxu0
      %v1477 = vpop.f32.mrb[0].mxu0
      %v1478 = vadd.f32 %v912, %v1477
      %v1479 = vpop.f32.mrb[0].mxu0
      %1480 = vmatprep.mubr.bf16.mxu0 0
      %1481 = vmatmul.mubr.bf16.gmra.mrb[0].mxu0 %v1396
      %v1482 = vpop.f32.mrb[0].mxu0
      %v1483 = vadd.f32 %v912, %v1482
      %v1484 = vpop.f32.mrb[0].mxu0
      %v1485 = vpop.f32.mrb[0].mxu0
      %v1486 = vadd.f32 %v912, %v1485
      %v1487 = vpop.f32.mrb[0].mxu0
      %1488 = vmatprep.mubr.bf16.mxu0 0
      %1489 = vmatmul.mubr.bf16.gmra.mrb[0].mxu0 %v1399
      %v1490 = vpop.f32.mrb[0].mxu0
      %v1491 = vadd.f32 %v912, %v1490
      %v1492 = vpop.f32.mrb[0].mxu0
      %v1493 = vpop.f32.mrb[0].mxu0
      %v1494 = vadd.f32 %v912, %v1493
      %v1495 = vpop.f32.mrb[0].mxu0
      %1496 = vmatprep.mubr.bf16.mxu0 0
      %1497 = vmatmul.mubr.bf16.gmra.mrb[0].mxu0 %v1402
      %v1498 = vpop.f32.mrb[0].mxu0
      %v1499 = vadd.f32 %v912, %v1498
      %v1500 = vpop.f32.mrb[0].mxu0
      %v1501 = vpop.f32.mrb[0].mxu0
      %v1502 = vadd.f32 %v912, %v1501
      %v1503 = vpop.f32.mrb[0].mxu0
      %1504 = vmatprep.mubr.bf16.mxu0 0
      %1505 = vmatmul.mubr.bf16.gmra.mrb[0].mxu0 %v1405
      %v1506 = vpop.f32.mrb[0].mxu0
      %v1507 = vadd.f32 %v912, %v1506
      %v1508 = vpop.f32.mrb[0].mxu0
      %v1509 = vpop.f32.mrb[0].mxu0
      %v1510 = vadd.f32 %v912, %v1509
      %v1511 = vpop.f32.mrb[0].mxu0
      %1512 = vmatprep.mubr.bf16.mxu0 0
      %1513 = vmatmul.mubr.bf16.gmra.mrb[0].mxu0 %v1408
      %v1514 = vpop.f32.mrb[0].mxu0
      %v1515 = vadd.f32 %v912, %v1514
      %v1516 = vpop.f32.mrb[0].mxu0
      %v1517 = vpop.f32.mrb[0].mxu0
      %v1518 = vadd.f32 %v912, %v1517
      %v1519 = vpop.f32.mrb[0].mxu0
      %1520 = vmatprep.mubr.bf16.mxu0 0
      %1521 = vmatmul.mubr.bf16.gmra.mrb[0].mxu0 %v1411
      %v1522 = vpop.f32.mrb[0].mxu0
      %v1523 = vadd.f32 %v912, %v1522
      %v1524 = vpop.f32.mrb[0].mxu0
      %v1525 = vpop.f32.mrb[0].mxu0
      %v1526 = vadd.f32 %v912, %v1525
      %v1527 = vpop.f32.mrb[0].mxu0
      %1528 = vmatprep.mubr.bf16.mxu0 0
      %1529 = vmatmul.mubr.bf16.gmra.mrb[0].mxu0 %v1414
      %v1530 = vpop.f32.mrb[0].mxu0
      %v1531 = vadd.f32 %v912, %v1530
      %v1532 = vpop.f32.mrb[0].mxu0
      %v1533 = vpop.f32.mrb[0].mxu0
      %v1534 = vadd.f32 %v912, %v1533
      %v1535 = vpop.f32.mrb[0].mxu0
      %1536 = vdwg.mxu0
      %1537 = vmax.xlane.f32.xlu0 %v1475
      %v1538 = vpop.xlane.xlu0 %1537
      %1539 = vmax.xlane.f32.xlu0 %v1478
      %v1540 = vpop.xlane.xlu0 %1539
      %1541 = vmax.xlane.f32.xlu0 %v1483
      %v1542 = vpop.xlane.xlu0 %1541
      %1543 = vmax.xlane.f32.xlu0 %v1486
      %v1544 = vpop.xlane.xlu0 %1543
      %1545 = vmax.xlane.f32.xlu0 %v1491
      %v1546 = vpop.xlane.xlu0 %1545
      %1547 = vmax.xlane.f32.xlu0 %v1494
      %v1548 = vpop.xlane.xlu0 %1547
      %1549 = vmax.xlane.f32.xlu0 %v1499
      %v1550 = vpop.xlane.xlu0 %1549
      %1551 = vmax.xlane.f32.xlu0 %v1502
      %v1552 = vpop.xlane.xlu0 %1551
      %1553 = vmax.xlane.f32.xlu0 %v1507
      %v1554 = vpop.xlane.xlu0 %1553
      %1555 = vmax.xlane.f32.xlu0 %v1510
      %v1556 = vpop.xlane.xlu0 %1555
      %1557 = vmax.xlane.f32.xlu0 %v1515
      %v1558 = vpop.xlane.xlu0 %1557
      %1559 = vmax.xlane.f32.xlu0 %v1518
      %v1560 = vpop.xlane.xlu0 %1559
      %1561 = vmax.xlane.f32.xlu0 %v1523
      %v1562 = vpop.xlane.xlu0 %1561
      %1563 = vmax.xlane.f32.xlu0 %v1526
      %v1564 = vpop.xlane.xlu0 %1563
      %1565 = vmax.xlane.f32.xlu0 %v1531
      %v1566 = vpop.xlane.xlu0 %1565
      %1567 = vmax.xlane.f32.xlu0 %v1534
      %v1568 = vpop.xlane.xlu0 %1567
      %v1569 = vsub.f32 %v1475, %v1538
      %v1570 = vsub.f32 %v1478, %v1540
      %v1571 = vsub.f32 %v1483, %v1542
      %v1572 = vsub.f32 %v1486, %v1544
      %v1573 = vsub.f32 %v1491, %v1546
      %v1574 = vsub.f32 %v1494, %v1548
      %v1575 = vsub.f32 %v1499, %v1550
      %v1576 = vsub.f32 %v1502, %v1552
      %v1577 = vsub.f32 %v1507, %v1554
      %v1578 = vsub.f32 %v1510, %v1556
      %v1579 = vsub.f32 %v1515, %v1558
      %v1580 = vsub.f32 %v1518, %v1560
      %v1581 = vsub.f32 %v1523, %v1562
      %v1582 = vsub.f32 %v1526, %v1564
      %v1583 = vsub.f32 %v1531, %v1566
      %v1584 = vsub.f32 %v1534, %v1568
      %v1585 = vmul.f32 %v1569, 1.442695
      %v1586 = vpow.pop %v1585
      %v1587 = vmul.f32 %v1570, 1.442695
      %v1588 = vpow.pop %v1587
      %v1589 = vmul.f32 %v1571, 1.442695
      %v1590 = vpow.pop %v1589
      %v1591 = vmul.f32 %v1572, 1.442695
      %v1592 = vpow.pop %v1591
      %v1593 = vmul.f32 %v1573, 1.442695
      %v1594 = vpow.pop %v1593
      %v1595 = vmul.f32 %v1574, 1.442695
      %v1596 = vpow.pop %v1595
      %v1597 = vmul.f32 %v1575, 1.442695
      %v1598 = vpow.pop %v1597
      %v1599 = vmul.f32 %v1576, 1.442695
      %v1600 = vpow.pop %v1599
      %v1601 = vmul.f32 %v1577, 1.442695
      %v1602 = vpow.pop %v1601
      %v1603 = vmul.f32 %v1578, 1.442695
      %v1604 = vpow.pop %v1603
      %v1605 = vmul.f32 %v1579, 1.442695
      %v1606 = vpow.pop %v1605
      %v1607 = vmul.f32 %v1580, 1.442695
      %v1608 = vpow.pop %v1607
      %v1609 = vmul.f32 %v1581, 1.442695
      %v1610 = vpow.pop %v1609
      %v1611 = vmul.f32 %v1582, 1.442695
      %v1612 = vpow.pop %v1611
      %v1613 = vmul.f32 %v1583, 1.442695
      %v1614 = vpow.pop %v1613
      %v1615 = vmul.f32 %v1584, 1.442695
      %v1616 = vpow.pop %v1615
      %1617 = vadd.xlane.f32.xlu0 %v1586
      %v1618 = vpop.xlane.xlu0 %1617
      %1619 = vadd.xlane.f32.xlu0 %v1588
      %v1620 = vpop.xlane.xlu0 %1619
      %1621 = vadd.xlane.f32.xlu0 %v1590
      %v1622 = vpop.xlane.xlu0 %1621
      %1623 = vadd.xlane.f32.xlu0 %v1592
      %v1624 = vpop.xlane.xlu0 %1623
      %1625 = vadd.xlane.f32.xlu0 %v1594
      %v1626 = vpop.xlane.xlu0 %1625
      %1627 = vadd.xlane.f32.xlu0 %v1596
      %v1628 = vpop.xlane.xlu0 %1627
      %1629 = vadd.xlane.f32.xlu0 %v1598
      %v1630 = vpop.xlane.xlu0 %1629
      %1631 = vadd.xlane.f32.xlu0 %v1600
      %v1632 = vpop.xlane.xlu0 %1631
      %1633 = vadd.xlane.f32.xlu0 %v1602
      %v1634 = vpop.xlane.xlu0 %1633
      %1635 = vadd.xlane.f32.xlu0 %v1604
      %v1636 = vpop.xlane.xlu0 %1635
      %1637 = vadd.xlane.f32.xlu0 %v1606
      %v1638 = vpop.xlane.xlu0 %1637
      %1639 = vadd.xlane.f32.xlu0 %v1608
      %v1640 = vpop.xlane.xlu0 %1639
      %1641 = vadd.xlane.f32.xlu0 %v1610
      %v1642 = vpop.xlane.xlu0 %1641
      %1643 = vadd.xlane.f32.xlu0 %v1612
      %v1644 = vpop.xlane.xlu0 %1643
      %1645 = vadd.xlane.f32.xlu0 %v1614
      %v1646 = vpop.xlane.xlu0 %1645
      %1647 = vadd.xlane.f32.xlu0 %v1616
      %v1648 = vpop.xlane.xlu0 %1647
      %v1649 = vrcp.pop %v1618
      %v1650 = vrcp.pop %v1620
      %v1651 = vrcp.pop %v1622
      %v1652 = vrcp.pop %v1624
      %v1653 = vrcp.pop %v1626
      %v1654 = vrcp.pop %v1628
      %v1655 = vrcp.pop %v1630
      %v1656 = vrcp.pop %v1632
      %v1657 = vrcp.pop %v1634
      %v1658 = vrcp.pop %v1636
      %v1659 = vrcp.pop %v1638
      %v1660 = vrcp.pop %v1640
      %v1661 = vrcp.pop %v1642
      %v1662 = vrcp.pop %v1644
      %v1663 = vrcp.pop %v1646
      %v1664 = vrcp.pop %v1648
      %v1665 = vmul.f32 %v1586, %v1649
      %v1666 = vmul.f32 %v1588, %v1650
      %v1667 = vmul.f32 %v1590, %v1651
      %v1668 = vmul.f32 %v1592, %v1652
      %v1669 = vmul.f32 %v1594, %v1653
      %v1670 = vmul.f32 %v1596, %v1654
      %v1671 = vmul.f32 %v1598, %v1655
      %v1672 = vmul.f32 %v1600, %v1656
      %v1673 = vmul.f32 %v1602, %v1657
      %v1674 = vmul.f32 %v1604, %v1658
      %v1675 = vmul.f32 %v1606, %v1659
      %v1676 = vmul.f32 %v1608, %v1660
      %v1677 = vmul.f32 %v1610, %v1661
      %v1678 = vmul.f32 %v1612, %v1662
      %v1679 = vmul.f32 %v1614, %v1663
      %v1680 = vmul.f32 %v1616, %v1664
      %v1681 = vpack.c.bf16 %v1666, %v1665
      %v1682 = vpack.c.bf16 %v1668, %v1667
      %v1683 = vpack.c.bf16 %v1670, %v1669
      %v1684 = vpack.c.bf16 %v1672, %v1671
      %v1685 = vpack.c.bf16 %v1674, %v1673
      %v1686 = vpack.c.bf16 %v1676, %v1675
      %v1687 = vpack.c.bf16 %v1678, %v1677
      %v1688 = vpack.c.bf16 %v1680, %v1679
      %1697 = vrot.lane.b32.xlu0 %v929, 96
      %v1698 = vpop.permute.xlu0 %1697
      %1699 = vrot.lane.b32.xlu0 %v930, 96
      %v1700 = vpop.permute.xlu0 %1699
      %1701 = vrot.lane.b32.xlu0 %v931, 96
      %v1702 = vpop.permute.xlu0 %1701
      %1703 = vrot.lane.b32.xlu0 %v932, 96
      %v1704 = vpop.permute.xlu0 %1703
      %1705 = vrot.lane.b32.xlu0 %v933, 96
      %v1706 = vpop.permute.xlu0 %1705
      %1707 = vrot.lane.b32.xlu0 %v934, 96
      %v1708 = vpop.permute.xlu0 %1707
      %1709 = vrot.lane.b32.xlu0 %v935, 96
      %v1710 = vpop.permute.xlu0 %1709
      %1711 = vrot.lane.b32.xlu0 %v936, 96
      %v1712 = vpop.permute.xlu0 %1711
      %1721 = vmatprep.subr.bf16.mxu0 0
      %1722 = vmatpush1.bf16.msra.mxu0 %v1698
      %1723 = vmatprep.subr.bf16.mxu0 0
      %1724 = vmatpush1.bf16.msra.mxu0 %v1700
      %1725 = vmatprep.subr.bf16.mxu0 0
      %1726 = vmatpush1.bf16.msra.mxu0 %v1702
      %1727 = vmatprep.subr.bf16.mxu0 0
      %1728 = vmatpush1.bf16.msra.mxu0 %v1704
      %1729 = vmatprep.subr.bf16.mxu0 0
      %1730 = vmatpush1.bf16.msra.mxu0 %v1706
      %1731 = vmatprep.subr.bf16.mxu0 0
      %1732 = vmatpush1.bf16.msra.mxu0 %v1708
      %1733 = vmatprep.subr.bf16.mxu0 0
      %1734 = vmatpush1.bf16.msra.mxu0 %v1710
      %1735 = vmatprep.subr.bf16.mxu0 0
      %1736 = vmatpush1.bf16.msra.mxu0 %v1712
      %1737 = vmatprep.subr.bf16.mxu0 0
      %1738 = vmatpush1.bf16.msra.mxu0 0
      %1739 = vmatprep.subr.bf16.mxu0 0
      %1740 = vmatpush1.bf16.msra.mxu0 0
      %1741 = vmatprep.subr.bf16.mxu0 0
      %1742 = vmatpush1.bf16.msra.mxu0 0
      %1743 = vmatprep.subr.bf16.mxu0 0
      %1744 = vmatpush1.bf16.msra.mxu0 0
      %1745 = vmatprep.subr.bf16.mxu0 0
      %1746 = vmatpush1.bf16.msra.mxu0 0
      %1747 = vmatprep.subr.bf16.mxu0 0
      %1748 = vmatpush1.bf16.msra.mxu0 0
      %1749 = vmatprep.subr.bf16.mxu0 0
      %1750 = vmatpush1.bf16.msra.mxu0 0
      %1751 = vmatprep.subr.bf16.mxu0 0
      %1752 = vmatpush1.bf16.msra.mxu0 0
      %1753 = vmatprep.mubr.bf16.mxu0 0
      %1754 = vmatmul.mubr.bf16.gmra.mrb[0].mxu0 %v1681
      %v1755 = vpop.f32.mrb[0].mxu0
      %v1756 = vadd.f32 0.0, %v1755
      %v1757 = vpop.f32.mrb[0].mxu0
      %v1758 = vpop.f32.mrb[0].mxu0
      %v1759 = vadd.f32 0.0, %v1758
      %v1760 = vpop.f32.mrb[0].mxu0
      %1761 = vmatprep.mubr.bf16.mxu0 0
      %1762 = vmatmul.mubr.bf16.gmra.mrb[0].mxu0 %v1682
      %v1763 = vpop.f32.mrb[0].mxu0
      %v1764 = vadd.f32 0.0, %v1763
      %v1765 = vpop.f32.mrb[0].mxu0
      %v1766 = vpop.f32.mrb[0].mxu0
      %v1767 = vadd.f32 0.0, %v1766
      %v1768 = vpop.f32.mrb[0].mxu0
      %1769 = vmatprep.mubr.bf16.mxu0 0
      %1770 = vmatmul.mubr.bf16.gmra.mrb[0].mxu0 %v1683
      %v1771 = vpop.f32.mrb[0].mxu0
      %v1772 = vadd.f32 0.0, %v1771
      %v1773 = vpop.f32.mrb[0].mxu0
      %v1774 = vpop.f32.mrb[0].mxu0
      %v1775 = vadd.f32 0.0, %v1774
      %v1776 = vpop.f32.mrb[0].mxu0
      %1777 = vmatprep.mubr.bf16.mxu0 0
      %1778 = vmatmul.mubr.bf16.gmra.mrb[0].mxu0 %v1684
      %v1779 = vpop.f32.mrb[0].mxu0
      %v1780 = vadd.f32 0.0, %v1779
      %v1781 = vpop.f32.mrb[0].mxu0
      %v1782 = vpop.f32.mrb[0].mxu0
      %v1783 = vadd.f32 0.0, %v1782
      %v1784 = vpop.f32.mrb[0].mxu0
      %1785 = vmatprep.mubr.bf16.mxu0 0
      %1786 = vmatmul.mubr.bf16.gmra.mrb[0].mxu0 %v1685
      %v1787 = vpop.f32.mrb[0].mxu0
      %v1788 = vadd.f32 0.0, %v1787
      %v1789 = vpop.f32.mrb[0].mxu0
      %v1790 = vpop.f32.mrb[0].mxu0
      %v1791 = vadd.f32 0.0, %v1790
      %v1792 = vpop.f32.mrb[0].mxu0
      %1793 = vmatprep.mubr.bf16.mxu0 0
      %1794 = vmatmul.mubr.bf16.gmra.mrb[0].mxu0 %v1686
      %v1795 = vpop.f32.mrb[0].mxu0
      %v1796 = vadd.f32 0.0, %v1795
      %v1797 = vpop.f32.mrb[0].mxu0
      %v1798 = vpop.f32.mrb[0].mxu0
      %v1799 = vadd.f32 0.0, %v1798
      %v1800 = vpop.f32.mrb[0].mxu0
      %1801 = vmatprep.mubr.bf16.mxu0 0
      %1802 = vmatmul.mubr.bf16.gmra.mrb[0].mxu0 %v1687
      %v1803 = vpop.f32.mrb[0].mxu0
      %v1804 = vadd.f32 0.0, %v1803
      %v1805 = vpop.f32.mrb[0].mxu0
      %v1806 = vpop.f32.mrb[0].mxu0
      %v1807 = vadd.f32 0.0, %v1806
      %v1808 = vpop.f32.mrb[0].mxu0
      %1809 = vmatprep.mubr.bf16.mxu0 0
      %1810 = vmatmul.mubr.bf16.gmra.mrb[0].mxu0 %v1688
      %v1811 = vpop.f32.mrb[0].mxu0
      %v1812 = vadd.f32 0.0, %v1811
      %v1813 = vpop.f32.mrb[0].mxu0
      %v1814 = vpop.f32.mrb[0].mxu0
      %v1815 = vadd.f32 0.0, %v1814
      %v1816 = vpop.f32.mrb[0].mxu0
      %1817 = vdwg.mxu0
      %v1818 = vpack.c.bf16 %v1759, %v1756
      %v1819 = vpack.c.bf16 %v1767, %v1764
      %v1820 = vpack.c.bf16 %v1775, %v1772
      %v1821 = vpack.c.bf16 %v1783, %v1780
      %v1822 = vpack.c.bf16 %v1791, %v1788
      %v1823 = vpack.c.bf16 %v1799, %v1796
      %v1824 = vpack.c.bf16 %v1807, %v1804
      %v1825 = vpack.c.bf16 %v1815, %v1812
      %s1826 = scalar_lea.vmem %s3, 16
      %v1827 = vld [vmem:[%s1826] sm:$0xf]
      %v1828 = vld [vmem:[%s1826 + $0x4] sm:$0xf]
      %v1829 = vld [vmem:[%s1826 + $0x8] sm:$0xf]
      %v1830 = vld [vmem:[%s1826 + $0xc] sm:$0xf]
      %v1835 = vunpack.c.l.b16 %v1827
      %v1836 = vunpack.c.l.b16 %v1828
      %v1837 = vunpack.c.l.b16 %v1829
      %v1838 = vunpack.c.l.b16 %v1830
      %v1839 = vpack.c.b16 %v1836, %v1835
      %v1840 = vpack.c.b16 %v1838, %v1837
      %v1844 = vsel %vm937, %v1818, 0
      %v1847 = vsel %vm937, %v1819, 0
      %v1850 = vsel %vm937, %v1820, 0
      %v1853 = vsel %vm937, %v1821, 0
      %v1856 = vsel %vm937, %v1822, 0
      %v1859 = vsel %vm937, %v1823, 0
      %v1862 = vsel %vm937, %v1824, 0
      %v1865 = vsel %vm937, %v1825, 0
      %1867 = vmatprep.subr.bf16.mxu0 0
      %1868 = vmatpush1.bf16.msra.mxu0 %v1839
      %1869 = vmatprep.subr.bf16.mxu0 0
      %1870 = vmatpush1.bf16.msra.mxu0 %v1840
      %1871 = vmatprep.subr.bf16.mxu0 0
      %1872 = vmatpush1.bf16.msra.mxu0 0
      %1873 = vmatprep.subr.bf16.mxu0 0
      %1874 = vmatpush1.bf16.msra.mxu0 0
      %1875 = vmatprep.subr.bf16.mxu0 0
      %1876 = vmatpush1.bf16.msra.mxu0 0
      %1877 = vmatprep.subr.bf16.mxu0 0
      %1878 = vmatpush1.bf16.msra.mxu0 0
      %1879 = vmatprep.subr.bf16.mxu0 0
      %1880 = vmatpush1.bf16.msra.mxu0 0
      %1881 = vmatprep.subr.bf16.mxu0 0
      %1882 = vmatpush1.bf16.msra.mxu0 0
      %1883 = vmatprep.subr.bf16.mxu0 0
      %1884 = vmatpush1.bf16.msra.mxu0 0
      %1885 = vmatprep.subr.bf16.mxu0 0
      %1886 = vmatpush1.bf16.msra.mxu0 0
      %1887 = vmatprep.subr.bf16.mxu0 0
      %1888 = vmatpush1.bf16.msra.mxu0 0
      %1889 = vmatprep.subr.bf16.mxu0 0
      %1890 = vmatpush1.bf16.msra.mxu0 0
      %1891 = vmatprep.subr.bf16.mxu0 0
      %1892 = vmatpush1.bf16.msra.mxu0 0
      %1893 = vmatprep.subr.bf16.mxu0 0
      %1894 = vmatpush1.bf16.msra.mxu0 0
      %1895 = vmatprep.subr.bf16.mxu0 0
      %1896 = vmatpush1.bf16.msra.mxu0 0
      %1897 = vmatprep.subr.bf16.mxu0 0
      %1898 = vmatpush1.bf16.msra.mxu0 0
      %1899 = vmatprep.mubr.bf16.mxu0 0
      %1900 = vmatmul.mubr.bf16.gmra.mrb[0].mxu0 %v1844
      %v1901 = vpop.f32.mrb[0].mxu0
      %v1902 = vadd.f32 0.0, %v1901
      %v1903 = vpop.f32.mrb[0].mxu0
      %v1904 = vpop.f32.mrb[0].mxu0
      %v1905 = vadd.f32 0.0, %v1904
      %v1906 = vpop.f32.mrb[0].mxu0
      %1907 = vmatprep.mubr.bf16.mxu0 0
      %1908 = vmatmul.mubr.bf16.gmra.mrb[0].mxu0 %v1847
      %v1909 = vpop.f32.mrb[0].mxu0
      %v1910 = vadd.f32 0.0, %v1909
      %v1911 = vpop.f32.mrb[0].mxu0
      %v1912 = vpop.f32.mrb[0].mxu0
      %v1913 = vadd.f32 0.0, %v1912
      %v1914 = vpop.f32.mrb[0].mxu0
      %1915 = vmatprep.mubr.bf16.mxu0 0
      %1916 = vmatmul.mubr.bf16.gmra.mrb[0].mxu0 %v1850
      %v1917 = vpop.f32.mrb[0].mxu0
      %v1918 = vadd.f32 0.0, %v1917
      %v1919 = vpop.f32.mrb[0].mxu0
      %v1920 = vpop.f32.mrb[0].mxu0
      %v1921 = vadd.f32 0.0, %v1920
      %v1922 = vpop.f32.mrb[0].mxu0
      %1923 = vmatprep.mubr.bf16.mxu0 0
      %1924 = vmatmul.mubr.bf16.gmra.mrb[0].mxu0 %v1853
      %v1925 = vpop.f32.mrb[0].mxu0
      %v1926 = vadd.f32 0.0, %v1925
      %v1927 = vpop.f32.mrb[0].mxu0
      %v1928 = vpop.f32.mrb[0].mxu0
      %v1929 = vadd.f32 0.0, %v1928
      %v1930 = vpop.f32.mrb[0].mxu0
      %1931 = vmatprep.mubr.bf16.mxu0 0
      %1932 = vmatmul.mubr.bf16.gmra.mrb[0].mxu0 %v1856
      %v1933 = vpop.f32.mrb[0].mxu0
      %v1934 = vadd.f32 0.0, %v1933
      %v1935 = vpop.f32.mrb[0].mxu0
      %v1936 = vpop.f32.mrb[0].mxu0
      %v1937 = vadd.f32 0.0, %v1936
      %v1938 = vpop.f32.mrb[0].mxu0
      %1939 = vmatprep.mubr.bf16.mxu0 0
      %1940 = vmatmul.mubr.bf16.gmra.mrb[0].mxu0 %v1859
      %v1941 = vpop.f32.mrb[0].mxu0
      %v1942 = vadd.f32 0.0, %v1941
      %v1943 = vpop.f32.mrb[0].mxu0
      %v1944 = vpop.f32.mrb[0].mxu0
      %v1945 = vadd.f32 0.0, %v1944
      %v1946 = vpop.f32.mrb[0].mxu0
      %1947 = vmatprep.mubr.bf16.mxu0 0
      %1948 = vmatmul.mubr.bf16.gmra.mrb[0].mxu0 %v1862
      %v1949 = vpop.f32.mrb[0].mxu0
      %v1950 = vadd.f32 0.0, %v1949
      %v1951 = vpop.f32.mrb[0].mxu0
      %v1952 = vpop.f32.mrb[0].mxu0
      %v1953 = vadd.f32 0.0, %v1952
      %v1954 = vpop.f32.mrb[0].mxu0
      %1955 = vmatprep.mubr.bf16.mxu0 0
      %1956 = vmatmul.mubr.bf16.gmra.mrb[0].mxu0 %v1865
      %v1957 = vpop.f32.mrb[0].mxu0
      %v1958 = vadd.f32 0.0, %v1957
      %v1959 = vpop.f32.mrb[0].mxu0
      %v1960 = vpop.f32.mrb[0].mxu0
      %v1961 = vadd.f32 0.0, %v1960
      %v1962 = vpop.f32.mrb[0].mxu0
      %1963 = vdwg.mxu0
      %v1968 = vunpack.c.l.b16 %v1340
      %v1969 = vunpack.c.l.b16 %v1341
      %v1970 = vunpack.c.l.b16 %v1342
      %v1971 = vunpack.c.l.b16 %v1343
      %v1972 = vpack.c.b16 %v1969, %v1968
      %v1973 = vpack.c.b16 %v1971, %v1970
      %v1977 = vsel %vm937, %v1332, 0
      %v1980 = vsel %vm937, %v1333, 0
      %v1983 = vsel %vm937, %v1334, 0
      %v1986 = vsel %vm937, %v1335, 0
      %v1989 = vsel %vm937, %v1336, 0
      %v1992 = vsel %vm937, %v1337, 0
      %v1995 = vsel %vm937, %v1338, 0
      %v1998 = vsel %vm937, %v1339, 0
      %2000 = vmatprep.subr.bf16.mxu0 0
      %2001 = vmatpush1.bf16.msra.mxu0 %v1972
      %2002 = vmatprep.subr.bf16.mxu0 0
      %2003 = vmatpush1.bf16.msra.mxu0 %v1973
      %2004 = vmatprep.subr.bf16.mxu0 0
      %2005 = vmatpush1.bf16.msra.mxu0 0
      %2006 = vmatprep.subr.bf16.mxu0 0
      %2007 = vmatpush1.bf16.msra.mxu0 0
      %2008 = vmatprep.subr.bf16.mxu0 0
      %2009 = vmatpush1.bf16.msra.mxu0 0
      %2010 = vmatprep.subr.bf16.mxu0 0
      %2011 = vmatpush1.bf16.msra.mxu0 0
      %2012 = vmatprep.subr.bf16.mxu0 0
      %2013 = vmatpush1.bf16.msra.mxu0 0
      %2014 = vmatprep.subr.bf16.mxu0 0
      %2015 = vmatpush1.bf16.msra.mxu0 0
      %2016 = vmatprep.subr.bf16.mxu0 0
      %2017 = vmatpush1.bf16.msra.mxu0 0
      %2018 = vmatprep.subr.bf16.mxu0 0
      %2019 = vmatpush1.bf16.msra.mxu0 0
      %2020 = vmatprep.subr.bf16.mxu0 0
      %2021 = vmatpush1.bf16.msra.mxu0 0
      %2022 = vmatprep.subr.bf16.mxu0 0
      %2023 = vmatpush1.bf16.msra.mxu0 0
      %2024 = vmatprep.subr.bf16.mxu0 0
      %2025 = vmatpush1.bf16.msra.mxu0 0
      %2026 = vmatprep.subr.bf16.mxu0 0
      %2027 = vmatpush1.bf16.msra.mxu0 0
      %2028 = vmatprep.subr.bf16.mxu0 0
      %2029 = vmatpush1.bf16.msra.mxu0 0
      %2030 = vmatprep.subr.bf16.mxu0 0
      %2031 = vmatpush1.bf16.msra.mxu0 0
      %2032 = vmatprep.mubr.bf16.mxu0 0
      %2033 = vmatmul.mubr.bf16.gmra.mrb[0].mxu0 %v1977
      %v2034 = vpop.f32.mrb[0].mxu0
      %v2035 = vadd.f32 %v1902, %v2034
      %v2036 = vpop.f32.mrb[0].mxu0
      %v2037 = vpop.f32.mrb[0].mxu0
      %v2038 = vadd.f32 %v1905, %v2037
      %v2039 = vpop.f32.mrb[0].mxu0
      %2040 = vmatprep.mubr.bf16.mxu0 0
      %2041 = vmatmul.mubr.bf16.gmra.mrb[0].mxu0 %v1980
      %v2042 = vpop.f32.mrb[0].mxu0
      %v2043 = vadd.f32 %v1910, %v2042
      %v2044 = vpop.f32.mrb[0].mxu0
      %v2045 = vpop.f32.mrb[0].mxu0
      %v2046 = vadd.f32 %v1913, %v2045
      %v2047 = vpop.f32.mrb[0].mxu0
      %2048 = vmatprep.mubr.bf16.mxu0 0
      %2049 = vmatmul.mubr.bf16.gmra.mrb[0].mxu0 %v1983
      %v2050 = vpop.f32.mrb[0].mxu0
      %v2051 = vadd.f32 %v1918, %v2050
      %v2052 = vpop.f32.mrb[0].mxu0
      %v2053 = vpop.f32.mrb[0].mxu0
      %v2054 = vadd.f32 %v1921, %v2053
      %v2055 = vpop.f32.mrb[0].mxu0
      %2056 = vmatprep.mubr.bf16.mxu0 0
      %2057 = vmatmul.mubr.bf16.gmra.mrb[0].mxu0 %v1986
      %v2058 = vpop.f32.mrb[0].mxu0
      %v2059 = vadd.f32 %v1926, %v2058
      %v2060 = vpop.f32.mrb[0].mxu0
      %v2061 = vpop.f32.mrb[0].mxu0
      %v2062 = vadd.f32 %v1929, %v2061
      %v2063 = vpop.f32.mrb[0].mxu0
      %2064 = vmatprep.mubr.bf16.mxu0 0
      %2065 = vmatmul.mubr.bf16.gmra.mrb[0].mxu0 %v1989
      %v2066 = vpop.f32.mrb[0].mxu0
      %v2067 = vadd.f32 %v1934, %v2066
      %v2068 = vpop.f32.mrb[0].mxu0
      %v2069 = vpop.f32.mrb[0].mxu0
      %v2070 = vadd.f32 %v1937, %v2069
      %v2071 = vpop.f32.mrb[0].mxu0
      %2072 = vmatprep.mubr.bf16.mxu0 0
      %2073 = vmatmul.mubr.bf16.gmra.mrb[0].mxu0 %v1992
      %v2074 = vpop.f32.mrb[0].mxu0
      %v2075 = vadd.f32 %v1942, %v2074
      %v2076 = vpop.f32.mrb[0].mxu0
      %v2077 = vpop.f32.mrb[0].mxu0
      %v2078 = vadd.f32 %v1945, %v2077
      %v2079 = vpop.f32.mrb[0].mxu0
      %2080 = vmatprep.mubr.bf16.mxu0 0
      %2081 = vmatmul.mubr.bf16.gmra.mrb[0].mxu0 %v1995
      %v2082 = vpop.f32.mrb[0].mxu0
      %v2083 = vadd.f32 %v1950, %v2082
      %v2084 = vpop.f32.mrb[0].mxu0
      %v2085 = vpop.f32.mrb[0].mxu0
      %v2086 = vadd.f32 %v1953, %v2085
      %v2087 = vpop.f32.mrb[0].mxu0
      %2088 = vmatprep.mubr.bf16.mxu0 0
      %2089 = vmatmul.mubr.bf16.gmra.mrb[0].mxu0 %v1998
      %v2090 = vpop.f32.mrb[0].mxu0
      %v2091 = vadd.f32 %v1958, %v2090
      %v2092 = vpop.f32.mrb[0].mxu0
      %v2093 = vpop.f32.mrb[0].mxu0
      %v2094 = vadd.f32 %v1961, %v2093
      %v2095 = vpop.f32.mrb[0].mxu0
      %2096 = vdwg.mxu0
      %2097 = vrot.lane.b32.xlu0 %v913, 64
      %v2098 = vpop.permute.xlu0 %2097
      %2099 = vrot.lane.b32.xlu0 %v914, 64
      %v2100 = vpop.permute.xlu0 %2099
      %2101 = vrot.lane.b32.xlu0 %v915, 64
      %v2102 = vpop.permute.xlu0 %2101
      %2103 = vrot.lane.b32.xlu0 %v916, 64
      %v2104 = vpop.permute.xlu0 %2103
      %2105 = vrot.lane.b32.xlu0 %v917, 64
      %v2106 = vpop.permute.xlu0 %2105
      %2107 = vrot.lane.b32.xlu0 %v918, 64
      %v2108 = vpop.permute.xlu0 %2107
      %2109 = vrot.lane.b32.xlu0 %v919, 64
      %v2110 = vpop.permute.xlu0 %2109
      %2111 = vrot.lane.b32.xlu0 %v920, 64
      %v2112 = vpop.permute.xlu0 %2111
      %2113 = vrot.lane.b32.xlu0 %v921, 64
      %v2114 = vpop.permute.xlu0 %2113
      %2115 = vrot.lane.b32.xlu0 %v922, 64
      %v2116 = vpop.permute.xlu0 %2115
      %2117 = vrot.lane.b32.xlu0 %v923, 64
      %v2118 = vpop.permute.xlu0 %2117
      %2119 = vrot.lane.b32.xlu0 %v924, 64
      %v2120 = vpop.permute.xlu0 %2119
      %2121 = vrot.lane.b32.xlu0 %v925, 64
      %v2122 = vpop.permute.xlu0 %2121
      %2123 = vrot.lane.b32.xlu0 %v926, 64
      %v2124 = vpop.permute.xlu0 %2123
      %2125 = vrot.lane.b32.xlu0 %v927, 64
      %v2126 = vpop.permute.xlu0 %2125
      %2127 = vrot.lane.b32.xlu0 %v928, 64
      %v2128 = vpop.permute.xlu0 %2127
      %v2130 = vsel %vm937, %v2098, 0
      %v2133 = vsel %vm937, %v2100, 0
      %v2136 = vsel %vm937, %v2102, 0
      %v2139 = vsel %vm937, %v2104, 0
      %v2142 = vsel %vm937, %v2106, 0
      %v2145 = vsel %vm937, %v2108, 0
      %v2148 = vsel %vm937, %v2110, 0
      %v2151 = vsel %vm937, %v2112, 0
      %v2154 = vsel %vm937, %v2114, 0
      %v2157 = vsel %vm937, %v2116, 0
      %v2160 = vsel %vm937, %v2118, 0
      %v2163 = vsel %vm937, %v2120, 0
      %v2166 = vsel %vm937, %v2122, 0
      %v2169 = vsel %vm937, %v2124, 0
      %v2172 = vsel %vm937, %v2126, 0
      %v2175 = vsel %vm937, %v2128, 0
      %2177 = vmatprep.subr.bf16.mxu0 0
      %2178 = vmatpush1.bf16.xpose.msra.mxu0 %v2154
      %2179 = vmatprep.subr.bf16.mxu0 0
      %2180 = vmatpush1.bf16.xpose.msra.mxu0 %v2157
      %2181 = vmatprep.subr.bf16.mxu0 0
      %2182 = vmatpush1.bf16.xpose.msra.mxu0 %v2160
      %2183 = vmatprep.subr.bf16.mxu0 0
      %2184 = vmatpush1.bf16.xpose.msra.mxu0 %v2163
      %2185 = vmatprep.subr.bf16.mxu0 0
      %2186 = vmatpush1.bf16.xpose.msra.mxu0 %v2166
      %2187 = vmatprep.subr.bf16.mxu0 0
      %2188 = vmatpush1.bf16.xpose.msra.mxu0 %v2169
      %2189 = vmatprep.subr.bf16.mxu0 0
      %2190 = vmatpush1.bf16.xpose.msra.mxu0 %v2172
      %2191 = vmatprep.subr.bf16.mxu0 0
      %2192 = vmatpush1.bf16.xpose.msra.mxu0 %v2175
      %2193 = vmatprep.subr.bf16.mxu0 0
      %2194 = vmatpush1.bf16.xpose.msra.mxu0 0
      %2195 = vmatprep.subr.bf16.mxu0 0
      %2196 = vmatpush1.bf16.xpose.msra.mxu0 0
      %2197 = vmatprep.subr.bf16.mxu0 0
      %2198 = vmatpush1.bf16.xpose.msra.mxu0 0
      %2199 = vmatprep.subr.bf16.mxu0 0
      %2200 = vmatpush1.bf16.xpose.msra.mxu0 0
      %2201 = vmatprep.subr.bf16.mxu0 0
      %2202 = vmatpush1.bf16.xpose.msra.mxu0 0
      %2203 = vmatprep.subr.bf16.mxu0 0
      %2204 = vmatpush1.bf16.xpose.msra.mxu0 0
      %2205 = vmatprep.subr.bf16.mxu0 0
      %2206 = vmatpush1.bf16.xpose.msra.mxu0 0
      %2207 = vmatprep.subr.bf16.mxu0 0
      %2208 = vmatpush1.bf16.xpose.msra.mxu0 0
      %2209 = vmatprep.mubr.bf16.mxu0 0
      %2210 = vmatmul.mubr.bf16.gmra.mrb[0].mxu0 %v2130
      %v2211 = vpop.f32.mrb[0].mxu0
      %v2212 = vadd.f32 %v912, %v2211
      %v2213 = vpop.f32.mrb[0].mxu0
      %v2214 = vpop.f32.mrb[0].mxu0
      %v2215 = vadd.f32 %v912, %v2214
      %v2216 = vpop.f32.mrb[0].mxu0
      %2217 = vmatprep.mubr.bf16.mxu0 0
      %2218 = vmatmul.mubr.bf16.gmra.mrb[0].mxu0 %v2133
      %v2219 = vpop.f32.mrb[0].mxu0
      %v2220 = vadd.f32 %v912, %v2219
      %v2221 = vpop.f32.mrb[0].mxu0
      %v2222 = vpop.f32.mrb[0].mxu0
      %v2223 = vadd.f32 %v912, %v2222
      %v2224 = vpop.f32.mrb[0].mxu0
      %2225 = vmatprep.mubr.bf16.mxu0 0
      %2226 = vmatmul.mubr.bf16.gmra.mrb[0].mxu0 %v2136
      %v2227 = vpop.f32.mrb[0].mxu0
      %v2228 = vadd.f32 %v912, %v2227
      %v2229 = vpop.f32.mrb[0].mxu0
      %v2230 = vpop.f32.mrb[0].mxu0
      %v2231 = vadd.f32 %v912, %v2230
      %v2232 = vpop.f32.mrb[0].mxu0
      %2233 = vmatprep.mubr.bf16.mxu0 0
      %2234 = vmatmul.mubr.bf16.gmra.mrb[0].mxu0 %v2139
      %v2235 = vpop.f32.mrb[0].mxu0
      %v2236 = vadd.f32 %v912, %v2235
      %v2237 = vpop.f32.mrb[0].mxu0
      %v2238 = vpop.f32.mrb[0].mxu0
      %v2239 = vadd.f32 %v912, %v2238
      %v2240 = vpop.f32.mrb[0].mxu0
      %2241 = vmatprep.mubr.bf16.mxu0 0
      %2242 = vmatmul.mubr.bf16.gmra.mrb[0].mxu0 %v2142
      %v2243 = vpop.f32.mrb[0].mxu0
      %v2244 = vadd.f32 %v912, %v2243
      %v2245 = vpop.f32.mrb[0].mxu0
      %v2246 = vpop.f32.mrb[0].mxu0
      %v2247 = vadd.f32 %v912, %v2246
      %v2248 = vpop.f32.mrb[0].mxu0
      %2249 = vmatprep.mubr.bf16.mxu0 0
      %2250 = vmatmul.mubr.bf16.gmra.mrb[0].mxu0 %v2145
      %v2251 = vpop.f32.mrb[0].mxu0
      %v2252 = vadd.f32 %v912, %v2251
      %v2253 = vpop.f32.mrb[0].mxu0
      %v2254 = vpop.f32.mrb[0].mxu0
      %v2255 = vadd.f32 %v912, %v2254
      %v2256 = vpop.f32.mrb[0].mxu0
      %2257 = vmatprep.mubr.bf16.mxu0 0
      %2258 = vmatmul.mubr.bf16.gmra.mrb[0].mxu0 %v2148
      %v2259 = vpop.f32.mrb[0].mxu0
      %v2260 = vadd.f32 %v912, %v2259
      %v2261 = vpop.f32.mrb[0].mxu0
      %v2262 = vpop.f32.mrb[0].mxu0
      %v2263 = vadd.f32 %v912, %v2262
      %v2264 = vpop.f32.mrb[0].mxu0
      %2265 = vmatprep.mubr.bf16.mxu0 0
      %2266 = vmatmul.mubr.bf16.gmra.mrb[0].mxu0 %v2151
      %v2267 = vpop.f32.mrb[0].mxu0
      %v2268 = vadd.f32 %v912, %v2267
      %v2269 = vpop.f32.mrb[0].mxu0
      %v2270 = vpop.f32.mrb[0].mxu0
      %v2271 = vadd.f32 %v912, %v2270
      %v2272 = vpop.f32.mrb[0].mxu0
      %2273 = vdwg.mxu0
      %2274 = vmax.xlane.f32.xlu0 %v2212
      %v2275 = vpop.xlane.xlu0 %2274
      %2276 = vmax.xlane.f32.xlu0 %v2215
      %v2277 = vpop.xlane.xlu0 %2276
      %2278 = vmax.xlane.f32.xlu0 %v2220
      %v2279 = vpop.xlane.xlu0 %2278
      %2280 = vmax.xlane.f32.xlu0 %v2223
      %v2281 = vpop.xlane.xlu0 %2280
      %2282 = vmax.xlane.f32.xlu0 %v2228
      %v2283 = vpop.xlane.xlu0 %2282
      %2284 = vmax.xlane.f32.xlu0 %v2231
      %v2285 = vpop.xlane.xlu0 %2284
      %2286 = vmax.xlane.f32.xlu0 %v2236
      %v2287 = vpop.xlane.xlu0 %2286
      %2288 = vmax.xlane.f32.xlu0 %v2239
      %v2289 = vpop.xlane.xlu0 %2288
      %2290 = vmax.xlane.f32.xlu0 %v2244
      %v2291 = vpop.xlane.xlu0 %2290
      %2292 = vmax.xlane.f32.xlu0 %v2247
      %v2293 = vpop.xlane.xlu0 %2292
      %2294 = vmax.xlane.f32.xlu0 %v2252
      %v2295 = vpop.xlane.xlu0 %2294
      %2296 = vmax.xlane.f32.xlu0 %v2255
      %v2297 = vpop.xlane.xlu0 %2296
      %2298 = vmax.xlane.f32.xlu0 %v2260
      %v2299 = vpop.xlane.xlu0 %2298
      %2300 = vmax.xlane.f32.xlu0 %v2263
      %v2301 = vpop.xlane.xlu0 %2300
      %2302 = vmax.xlane.f32.xlu0 %v2268
      %v2303 = vpop.xlane.xlu0 %2302
      %2304 = vmax.xlane.f32.xlu0 %v2271
      %v2305 = vpop.xlane.xlu0 %2304
      %v2306 = vsub.f32 %v2212, %v2275
      %v2307 = vsub.f32 %v2215, %v2277
      %v2308 = vsub.f32 %v2220, %v2279
      %v2309 = vsub.f32 %v2223, %v2281
      %v2310 = vsub.f32 %v2228, %v2283
      %v2311 = vsub.f32 %v2231, %v2285
      %v2312 = vsub.f32 %v2236, %v2287
      %v2313 = vsub.f32 %v2239, %v2289
      %v2314 = vsub.f32 %v2244, %v2291
      %v2315 = vsub.f32 %v2247, %v2293
      %v2316 = vsub.f32 %v2252, %v2295
      %v2317 = vsub.f32 %v2255, %v2297
      %v2318 = vsub.f32 %v2260, %v2299
      %v2319 = vsub.f32 %v2263, %v2301
      %v2320 = vsub.f32 %v2268, %v2303
      %v2321 = vsub.f32 %v2271, %v2305
      %v2322 = vmul.f32 %v2306, 1.442695
      %v2323 = vpow.pop %v2322
      %v2324 = vmul.f32 %v2307, 1.442695
      %v2325 = vpow.pop %v2324
      %v2326 = vmul.f32 %v2308, 1.442695
      %v2327 = vpow.pop %v2326
      %v2328 = vmul.f32 %v2309, 1.442695
      %v2329 = vpow.pop %v2328
      %v2330 = vmul.f32 %v2310, 1.442695
      %v2331 = vpow.pop %v2330
      %v2332 = vmul.f32 %v2311, 1.442695
      %v2333 = vpow.pop %v2332
      %v2334 = vmul.f32 %v2312, 1.442695
      %v2335 = vpow.pop %v2334
      %v2336 = vmul.f32 %v2313, 1.442695
      %v2337 = vpow.pop %v2336
      %v2338 = vmul.f32 %v2314, 1.442695
      %v2339 = vpow.pop %v2338
      %v2340 = vmul.f32 %v2315, 1.442695
      %v2341 = vpow.pop %v2340
      %v2342 = vmul.f32 %v2316, 1.442695
      %v2343 = vpow.pop %v2342
      %v2344 = vmul.f32 %v2317, 1.442695
      %v2345 = vpow.pop %v2344
      %v2346 = vmul.f32 %v2318, 1.442695
      %v2347 = vpow.pop %v2346
      %v2348 = vmul.f32 %v2319, 1.442695
      %v2349 = vpow.pop %v2348
      %v2350 = vmul.f32 %v2320, 1.442695
      %v2351 = vpow.pop %v2350
      %v2352 = vmul.f32 %v2321, 1.442695
      %v2353 = vpow.pop %v2352
      %2354 = vadd.xlane.f32.xlu0 %v2323
      %v2355 = vpop.xlane.xlu0 %2354
      %2356 = vadd.xlane.f32.xlu0 %v2325
      %v2357 = vpop.xlane.xlu0 %2356
      %2358 = vadd.xlane.f32.xlu0 %v2327
      %v2359 = vpop.xlane.xlu0 %2358
      %2360 = vadd.xlane.f32.xlu0 %v2329
      %v2361 = vpop.xlane.xlu0 %2360
      %2362 = vadd.xlane.f32.xlu0 %v2331
      %v2363 = vpop.xlane.xlu0 %2362
      %2364 = vadd.xlane.f32.xlu0 %v2333
      %v2365 = vpop.xlane.xlu0 %2364
      %2366 = vadd.xlane.f32.xlu0 %v2335
      %v2367 = vpop.xlane.xlu0 %2366
      %2368 = vadd.xlane.f32.xlu0 %v2337
      %v2369 = vpop.xlane.xlu0 %2368
      %2370 = vadd.xlane.f32.xlu0 %v2339
      %v2371 = vpop.xlane.xlu0 %2370
      %2372 = vadd.xlane.f32.xlu0 %v2341
      %v2373 = vpop.xlane.xlu0 %2372
      %2374 = vadd.xlane.f32.xlu0 %v2343
      %v2375 = vpop.xlane.xlu0 %2374
      %2376 = vadd.xlane.f32.xlu0 %v2345
      %v2377 = vpop.xlane.xlu0 %2376
      %2378 = vadd.xlane.f32.xlu0 %v2347
      %v2379 = vpop.xlane.xlu0 %2378
      %2380 = vadd.xlane.f32.xlu0 %v2349
      %v2381 = vpop.xlane.xlu0 %2380
      %2382 = vadd.xlane.f32.xlu0 %v2351
      %v2383 = vpop.xlane.xlu0 %2382
      %2384 = vadd.xlane.f32.xlu0 %v2353
      %v2385 = vpop.xlane.xlu0 %2384
      %v2386 = vrcp.pop %v2355
      %v2387 = vrcp.pop %v2357
      %v2388 = vrcp.pop %v2359
      %v2389 = vrcp.pop %v2361
      %v2390 = vrcp.pop %v2363
      %v2391 = vrcp.pop %v2365
      %v2392 = vrcp.pop %v2367
      %v2393 = vrcp.pop %v2369
      %v2394 = vrcp.pop %v2371
      %v2395 = vrcp.pop %v2373
      %v2396 = vrcp.pop %v2375
      %v2397 = vrcp.pop %v2377
      %v2398 = vrcp.pop %v2379
      %v2399 = vrcp.pop %v2381
      %v2400 = vrcp.pop %v2383
      %v2401 = vrcp.pop %v2385
      %v2402 = vmul.f32 %v2323, %v2386
      %v2403 = vmul.f32 %v2325, %v2387
      %v2404 = vmul.f32 %v2327, %v2388
      %v2405 = vmul.f32 %v2329, %v2389
      %v2406 = vmul.f32 %v2331, %v2390
      %v2407 = vmul.f32 %v2333, %v2391
      %v2408 = vmul.f32 %v2335, %v2392
      %v2409 = vmul.f32 %v2337, %v2393
      %v2410 = vmul.f32 %v2339, %v2394
      %v2411 = vmul.f32 %v2341, %v2395
      %v2412 = vmul.f32 %v2343, %v2396
      %v2413 = vmul.f32 %v2345, %v2397
      %v2414 = vmul.f32 %v2347, %v2398
      %v2415 = vmul.f32 %v2349, %v2399
      %v2416 = vmul.f32 %v2351, %v2400
      %v2417 = vmul.f32 %v2353, %v2401
      %v2418 = vpack.c.bf16 %v2403, %v2402
      %v2419 = vpack.c.bf16 %v2405, %v2404
      %v2420 = vpack.c.bf16 %v2407, %v2406
      %v2421 = vpack.c.bf16 %v2409, %v2408
      %v2422 = vpack.c.bf16 %v2411, %v2410
      %v2423 = vpack.c.bf16 %v2413, %v2412
      %v2424 = vpack.c.bf16 %v2415, %v2414
      %v2425 = vpack.c.bf16 %v2417, %v2416
      %2426 = vrot.lane.b32.xlu0 %v929, 64
      %v2427 = vpop.permute.xlu0 %2426
      %2428 = vrot.lane.b32.xlu0 %v930, 64
      %v2429 = vpop.permute.xlu0 %2428
      %2430 = vrot.lane.b32.xlu0 %v931, 64
      %v2431 = vpop.permute.xlu0 %2430
      %2432 = vrot.lane.b32.xlu0 %v932, 64
      %v2433 = vpop.permute.xlu0 %2432
      %2434 = vrot.lane.b32.xlu0 %v933, 64
      %v2435 = vpop.permute.xlu0 %2434
      %2436 = vrot.lane.b32.xlu0 %v934, 64
      %v2437 = vpop.permute.xlu0 %2436
      %2438 = vrot.lane.b32.xlu0 %v935, 64
      %v2439 = vpop.permute.xlu0 %2438
      %2440 = vrot.lane.b32.xlu0 %v936, 64
      %v2441 = vpop.permute.xlu0 %2440
      %2450 = vmatprep.subr.bf16.mxu0 0
      %2451 = vmatpush1.bf16.msra.mxu0 %v2427
      %2452 = vmatprep.subr.bf16.mxu0 0
      %2453 = vmatpush1.bf16.msra.mxu0 %v2429
      %2454 = vmatprep.subr.bf16.mxu0 0
      %2455 = vmatpush1.bf16.msra.mxu0 %v2431
      %2456 = vmatprep.subr.bf16.mxu0 0
      %2457 = vmatpush1.bf16.msra.mxu0 %v2433
      %2458 = vmatprep.subr.bf16.mxu0 0
      %2459 = vmatpush1.bf16.msra.mxu0 %v2435
      %2460 = vmatprep.subr.bf16.mxu0 0
      %2461 = vmatpush1.bf16.msra.mxu0 %v2437
      %2462 = vmatprep.subr.bf16.mxu0 0
      %2463 = vmatpush1.bf16.msra.mxu0 %v2439
      %2464 = vmatprep.subr.bf16.mxu0 0
      %2465 = vmatpush1.bf16.msra.mxu0 %v2441
      %2466 = vmatprep.subr.bf16.mxu0 0
      %2467 = vmatpush1.bf16.msra.mxu0 0
      %2468 = vmatprep.subr.bf16.mxu0 0
      %2469 = vmatpush1.bf16.msra.mxu0 0
      %2470 = vmatprep.subr.bf16.mxu0 0
      %2471 = vmatpush1.bf16.msra.mxu0 0
      %2472 = vmatprep.subr.bf16.mxu0 0
      %2473 = vmatpush1.bf16.msra.mxu0 0
      %2474 = vmatprep.subr.bf16.mxu0 0
      %2475 = vmatpush1.bf16.msra.mxu0 0
      %2476 = vmatprep.subr.bf16.mxu0 0
      %2477 = vmatpush1.bf16.msra.mxu0 0
      %2478 = vmatprep.subr.bf16.mxu0 0
      %2479 = vmatpush1.bf16.msra.mxu0 0
      %2480 = vmatprep.subr.bf16.mxu0 0
      %2481 = vmatpush1.bf16.msra.mxu0 0
      %2482 = vmatprep.mubr.bf16.mxu0 0
      %2483 = vmatmul.mubr.bf16.gmra.mrb[0].mxu0 %v2418
      %v2484 = vpop.f32.mrb[0].mxu0
      %v2485 = vadd.f32 0.0, %v2484
      %v2486 = vpop.f32.mrb[0].mxu0
      %v2487 = vpop.f32.mrb[0].mxu0
      %v2488 = vadd.f32 0.0, %v2487
      %v2489 = vpop.f32.mrb[0].mxu0
      %2490 = vmatprep.mubr.bf16.mxu0 0
      %2491 = vmatmul.mubr.bf16.gmra.mrb[0].mxu0 %v2419
      %v2492 = vpop.f32.mrb[0].mxu0
      %v2493 = vadd.f32 0.0, %v2492
      %v2494 = vpop.f32.mrb[0].mxu0
      %v2495 = vpop.f32.mrb[0].mxu0
      %v2496 = vadd.f32 0.0, %v2495
      %v2497 = vpop.f32.mrb[0].mxu0
      %2498 = vmatprep.mubr.bf16.mxu0 0
      %2499 = vmatmul.mubr.bf16.gmra.mrb[0].mxu0 %v2420
      %v2500 = vpop.f32.mrb[0].mxu0
      %v2501 = vadd.f32 0.0, %v2500
      %v2502 = vpop.f32.mrb[0].mxu0
      %v2503 = vpop.f32.mrb[0].mxu0
      %v2504 = vadd.f32 0.0, %v2503
      %v2505 = vpop.f32.mrb[0].mxu0
      %2506 = vmatprep.mubr.bf16.mxu0 0
      %2507 = vmatmul.mubr.bf16.gmra.mrb[0].mxu0 %v2421
      %v2508 = vpop.f32.mrb[0].mxu0
      %v2509 = vadd.f32 0.0, %v2508
      %v2510 = vpop.f32.mrb[0].mxu0
      %v2511 = vpop.f32.mrb[0].mxu0
      %v2512 = vadd.f32 0.0, %v2511
      %v2513 = vpop.f32.mrb[0].mxu0
      %2514 = vmatprep.mubr.bf16.mxu0 0
      %2515 = vmatmul.mubr.bf16.gmra.mrb[0].mxu0 %v2422
      %v2516 = vpop.f32.mrb[0].mxu0
      %v2517 = vadd.f32 0.0, %v2516
      %v2518 = vpop.f32.mrb[0].mxu0
      %v2519 = vpop.f32.mrb[0].mxu0
      %v2520 = vadd.f32 0.0, %v2519
      %v2521 = vpop.f32.mrb[0].mxu0
      %2522 = vmatprep.mubr.bf16.mxu0 0
      %2523 = vmatmul.mubr.bf16.gmra.mrb[0].mxu0 %v2423
      %v2524 = vpop.f32.mrb[0].mxu0
      %v2525 = vadd.f32 0.0, %v2524
      %v2526 = vpop.f32.mrb[0].mxu0
      %v2527 = vpop.f32.mrb[0].mxu0
      %v2528 = vadd.f32 0.0, %v2527
      %v2529 = vpop.f32.mrb[0].mxu0
      %2530 = vmatprep.mubr.bf16.mxu0 0
      %2531 = vmatmul.mubr.bf16.gmra.mrb[0].mxu0 %v2424
      %v2532 = vpop.f32.mrb[0].mxu0
      %v2533 = vadd.f32 0.0, %v2532
      %v2534 = vpop.f32.mrb[0].mxu0
      %v2535 = vpop.f32.mrb[0].mxu0
      %v2536 = vadd.f32 0.0, %v2535
      %v2537 = vpop.f32.mrb[0].mxu0
      %2538 = vmatprep.mubr.bf16.mxu0 0
      %2539 = vmatmul.mubr.bf16.gmra.mrb[0].mxu0 %v2425
      %v2540 = vpop.f32.mrb[0].mxu0
      %v2541 = vadd.f32 0.0, %v2540
      %v2542 = vpop.f32.mrb[0].mxu0
      %v2543 = vpop.f32.mrb[0].mxu0
      %v2544 = vadd.f32 0.0, %v2543
      %v2545 = vpop.f32.mrb[0].mxu0
      %2546 = vdwg.mxu0
      %v2547 = vpack.c.bf16 %v2488, %v2485
      %v2548 = vpack.c.bf16 %v2496, %v2493
      %v2549 = vpack.c.bf16 %v2504, %v2501
      %v2550 = vpack.c.bf16 %v2512, %v2509
      %v2551 = vpack.c.bf16 %v2520, %v2517
      %v2552 = vpack.c.bf16 %v2528, %v2525
      %v2553 = vpack.c.bf16 %v2536, %v2533
      %v2554 = vpack.c.bf16 %v2544, %v2541
      %s2555 = scalar_lea.vmem %s3, 32
      %v2556 = vld [vmem:[%s2555] sm:$0xf]
      %v2557 = vld [vmem:[%s2555 + $0x4] sm:$0xf]
      %v2558 = vld [vmem:[%s2555 + $0x8] sm:$0xf]
      %v2559 = vld [vmem:[%s2555 + $0xc] sm:$0xf]
      %v2564 = vunpack.c.l.b16 %v2556
      %v2565 = vunpack.c.l.b16 %v2557
      %v2566 = vunpack.c.l.b16 %v2558
      %v2567 = vunpack.c.l.b16 %v2559
      %v2568 = vpack.c.b16 %v2565, %v2564
      %v2569 = vpack.c.b16 %v2567, %v2566
      %v2573 = vsel %vm937, %v2547, 0
      %v2576 = vsel %vm937, %v2548, 0
      %v2579 = vsel %vm937, %v2549, 0
      %v2582 = vsel %vm937, %v2550, 0
      %v2585 = vsel %vm937, %v2551, 0
      %v2588 = vsel %vm937, %v2552, 0
      %v2591 = vsel %vm937, %v2553, 0
      %v2594 = vsel %vm937, %v2554, 0
      %2596 = vmatprep.subr.bf16.mxu0 0
      %2597 = vmatpush1.bf16.msra.mxu0 %v2568
      %2598 = vmatprep.subr.bf16.mxu0 0
      %2599 = vmatpush1.bf16.msra.mxu0 %v2569
      %2600 = vmatprep.subr.bf16.mxu0 0
      %2601 = vmatpush1.bf16.msra.mxu0 0
      %2602 = vmatprep.subr.bf16.mxu0 0
      %2603 = vmatpush1.bf16.msra.mxu0 0
      %2604 = vmatprep.subr.bf16.mxu0 0
      %2605 = vmatpush1.bf16.msra.mxu0 0
      %2606 = vmatprep.subr.bf16.mxu0 0
      %2607 = vmatpush1.bf16.msra.mxu0 0
      %2608 = vmatprep.subr.bf16.mxu0 0
      %2609 = vmatpush1.bf16.msra.mxu0 0
      %2610 = vmatprep.subr.bf16.mxu0 0
      %2611 = vmatpush1.bf16.msra.mxu0 0
      %2612 = vmatprep.subr.bf16.mxu0 0
      %2613 = vmatpush1.bf16.msra.mxu0 0
      %2614 = vmatprep.subr.bf16.mxu0 0
      %2615 = vmatpush1.bf16.msra.mxu0 0
      %2616 = vmatprep.subr.bf16.mxu0 0
      %2617 = vmatpush1.bf16.msra.mxu0 0
      %2618 = vmatprep.subr.bf16.mxu0 0
      %2619 = vmatpush1.bf16.msra.mxu0 0
      %2620 = vmatprep.subr.bf16.mxu0 0
      %2621 = vmatpush1.bf16.msra.mxu0 0
      %2622 = vmatprep.subr.bf16.mxu0 0
      %2623 = vmatpush1.bf16.msra.mxu0 0
      %2624 = vmatprep.subr.bf16.mxu0 0
      %2625 = vmatpush1.bf16.msra.mxu0 0
      %2626 = vmatprep.subr.bf16.mxu0 0
      %2627 = vmatpush1.bf16.msra.mxu0 0
      %2628 = vmatprep.mubr.bf16.mxu0 0
      %2629 = vmatmul.mubr.bf16.gmra.mrb[0].mxu0 %v2573
      %v2630 = vpop.f32.mrb[0].mxu0
      %v2631 = vadd.f32 0.0, %v2630
      %v2632 = vpop.f32.mrb[0].mxu0
      %v2633 = vpop.f32.mrb[0].mxu0
      %v2634 = vadd.f32 0.0, %v2633
      %v2635 = vpop.f32.mrb[0].mxu0
      %2636 = vmatprep.mubr.bf16.mxu0 0
      %2637 = vmatmul.mubr.bf16.gmra.mrb[0].mxu0 %v2576
      %v2638 = vpop.f32.mrb[0].mxu0
      %v2639 = vadd.f32 0.0, %v2638
      %v2640 = vpop.f32.mrb[0].mxu0
      %v2641 = vpop.f32.mrb[0].mxu0
      %v2642 = vadd.f32 0.0, %v2641
      %v2643 = vpop.f32.mrb[0].mxu0
      %2644 = vmatprep.mubr.bf16.mxu0 0
      %2645 = vmatmul.mubr.bf16.gmra.mrb[0].mxu0 %v2579
      %v2646 = vpop.f32.mrb[0].mxu0
      %v2647 = vadd.f32 0.0, %v2646
      %v2648 = vpop.f32.mrb[0].mxu0
      %v2649 = vpop.f32.mrb[0].mxu0
      %v2650 = vadd.f32 0.0, %v2649
      %v2651 = vpop.f32.mrb[0].mxu0
      %2652 = vmatprep.mubr.bf16.mxu0 0
      %2653 = vmatmul.mubr.bf16.gmra.mrb[0].mxu0 %v2582
      %v2654 = vpop.f32.mrb[0].mxu0
      %v2655 = vadd.f32 0.0, %v2654
      %v2656 = vpop.f32.mrb[0].mxu0
      %v2657 = vpop.f32.mrb[0].mxu0
      %v2658 = vadd.f32 0.0, %v2657
      %v2659 = vpop.f32.mrb[0].mxu0
      %2660 = vmatprep.mubr.bf16.mxu0 0
      %2661 = vmatmul.mubr.bf16.gmra.mrb[0].mxu0 %v2585
      %v2662 = vpop.f32.mrb[0].mxu0
      %v2663 = vadd.f32 0.0, %v2662
      %v2664 = vpop.f32.mrb[0].mxu0
      %v2665 = vpop.f32.mrb[0].mxu0
      %v2666 = vadd.f32 0.0, %v2665
      %v2667 = vpop.f32.mrb[0].mxu0
      %2668 = vmatprep.mubr.bf16.mxu0 0
      %2669 = vmatmul.mubr.bf16.gmra.mrb[0].mxu0 %v2588
      %v2670 = vpop.f32.mrb[0].mxu0
      %v2671 = vadd.f32 0.0, %v2670
      %v2672 = vpop.f32.mrb[0].mxu0
      %v2673 = vpop.f32.mrb[0].mxu0
      %v2674 = vadd.f32 0.0, %v2673
      %v2675 = vpop.f32.mrb[0].mxu0
      %2676 = vmatprep.mubr.bf16.mxu0 0
      %2677 = vmatmul.mubr.bf16.gmra.mrb[0].mxu0 %v2591
      %v2678 = vpop.f32.mrb[0].mxu0
      %v2679 = vadd.f32 0.0, %v2678
      %v2680 = vpop.f32.mrb[0].mxu0
      %v2681 = vpop.f32.mrb[0].mxu0
      %v2682 = vadd.f32 0.0, %v2681
      %v2683 = vpop.f32.mrb[0].mxu0
      %2684 = vmatprep.mubr.bf16.mxu0 0
      %2685 = vmatmul.mubr.bf16.gmra.mrb[0].mxu0 %v2594
      %v2686 = vpop.f32.mrb[0].mxu0
      %v2687 = vadd.f32 0.0, %v2686
      %v2688 = vpop.f32.mrb[0].mxu0
      %v2689 = vpop.f32.mrb[0].mxu0
      %v2690 = vadd.f32 0.0, %v2689
      %v2691 = vpop.f32.mrb[0].mxu0
      %2692 = vdwg.mxu0
      %v2693 = vadd.f32 %v2035, %v2631
      %v2694 = vadd.f32 %v2038, %v2634
      %v2695 = vadd.f32 %v2043, %v2639
      %v2696 = vadd.f32 %v2046, %v2642
      %v2697 = vadd.f32 %v2051, %v2647
      %v2698 = vadd.f32 %v2054, %v2650
      %v2699 = vadd.f32 %v2059, %v2655
      %v2700 = vadd.f32 %v2062, %v2658
      %v2701 = vadd.f32 %v2067, %v2663
      %v2702 = vadd.f32 %v2070, %v2666
      %v2703 = vadd.f32 %v2075, %v2671
      %v2704 = vadd.f32 %v2078, %v2674
      %v2705 = vadd.f32 %v2083, %v2679
      %v2706 = vadd.f32 %v2086, %v2682
      %v2707 = vadd.f32 %v2091, %v2687
      %v2708 = vadd.f32 %v2094, %v2690
      %2709 = vrot.lane.b32.xlu0 %v913, 32
      %v2710 = vpop.permute.xlu0 %2709
      %2711 = vrot.lane.b32.xlu0 %v914, 32
      %v2712 = vpop.permute.xlu0 %2711
      %2713 = vrot.lane.b32.xlu0 %v915, 32
      %v2714 = vpop.permute.xlu0 %2713
      %2715 = vrot.lane.b32.xlu0 %v916, 32
      %v2716 = vpop.permute.xlu0 %2715
      %2717 = vrot.lane.b32.xlu0 %v917, 32
      %v2718 = vpop.permute.xlu0 %2717
      %2719 = vrot.lane.b32.xlu0 %v918, 32
      %v2720 = vpop.permute.xlu0 %2719
      %2721 = vrot.lane.b32.xlu0 %v919, 32
      %v2722 = vpop.permute.xlu0 %2721
      %2723 = vrot.lane.b32.xlu0 %v920, 32
      %v2724 = vpop.permute.xlu0 %2723
      %2725 = vrot.lane.b32.xlu0 %v921, 32
      %v2726 = vpop.permute.xlu0 %2725
      %2727 = vrot.lane.b32.xlu0 %v922, 32
      %v2728 = vpop.permute.xlu0 %2727
      %2729 = vrot.lane.b32.xlu0 %v923, 32
      %v2730 = vpop.permute.xlu0 %2729
      %2731 = vrot.lane.b32.xlu0 %v924, 32
      %v2732 = vpop.permute.xlu0 %2731
      %2733 = vrot.lane.b32.xlu0 %v925, 32
      %v2734 = vpop.permute.xlu0 %2733
      %2735 = vrot.lane.b32.xlu0 %v926, 32
      %v2736 = vpop.permute.xlu0 %2735
      %2737 = vrot.lane.b32.xlu0 %v927, 32
      %v2738 = vpop.permute.xlu0 %2737
      %2739 = vrot.lane.b32.xlu0 %v928, 32
      %v2740 = vpop.permute.xlu0 %2739
      %v2742 = vsel %vm937, %v2710, 0
      %v2745 = vsel %vm937, %v2712, 0
      %v2748 = vsel %vm937, %v2714, 0
      %v2751 = vsel %vm937, %v2716, 0
      %v2754 = vsel %vm937, %v2718, 0
      %v2757 = vsel %vm937, %v2720, 0
      %v2760 = vsel %vm937, %v2722, 0
      %v2763 = vsel %vm937, %v2724, 0
      %v2766 = vsel %vm937, %v2726, 0
      %v2769 = vsel %vm937, %v2728, 0
      %v2772 = vsel %vm937, %v2730, 0
      %v2775 = vsel %vm937, %v2732, 0
      %v2778 = vsel %vm937, %v2734, 0
      %v2781 = vsel %vm937, %v2736, 0
      %v2784 = vsel %vm937, %v2738, 0
      %v2787 = vsel %vm937, %v2740, 0
      %2789 = vmatprep.subr.bf16.mxu0 0
      %2790 = vmatpush1.bf16.xpose.msra.mxu0 %v2766
      %2791 = vmatprep.subr.bf16.mxu0 0
      %2792 = vmatpush1.bf16.xpose.msra.mxu0 %v2769
      %2793 = vmatprep.subr.bf16.mxu0 0
      %2794 = vmatpush1.bf16.xpose.msra.mxu0 %v2772
      %2795 = vmatprep.subr.bf16.mxu0 0
      %2796 = vmatpush1.bf16.xpose.msra.mxu0 %v2775
      %2797 = vmatprep.subr.bf16.mxu0 0
      %2798 = vmatpush1.bf16.xpose.msra.mxu0 %v2778
      %2799 = vmatprep.subr.bf16.mxu0 0
      %2800 = vmatpush1.bf16.xpose.msra.mxu0 %v2781
      %2801 = vmatprep.subr.bf16.mxu0 0
      %2802 = vmatpush1.bf16.xpose.msra.mxu0 %v2784
      %2803 = vmatprep.subr.bf16.mxu0 0
      %2804 = vmatpush1.bf16.xpose.msra.mxu0 %v2787
      %2805 = vmatprep.subr.bf16.mxu0 0
      %2806 = vmatpush1.bf16.xpose.msra.mxu0 0
      %2807 = vmatprep.subr.bf16.mxu0 0
      %2808 = vmatpush1.bf16.xpose.msra.mxu0 0
      %2809 = vmatprep.subr.bf16.mxu0 0
      %2810 = vmatpush1.bf16.xpose.msra.mxu0 0
      %2811 = vmatprep.subr.bf16.mxu0 0
      %2812 = vmatpush1.bf16.xpose.msra.mxu0 0
      %2813 = vmatprep.subr.bf16.mxu0 0
      %2814 = vmatpush1.bf16.xpose.msra.mxu0 0
      %2815 = vmatprep.subr.bf16.mxu0 0
      %2816 = vmatpush1.bf16.xpose.msra.mxu0 0
      %2817 = vmatprep.subr.bf16.mxu0 0
      %2818 = vmatpush1.bf16.xpose.msra.mxu0 0
      %2819 = vmatprep.subr.bf16.mxu0 0
      %2820 = vmatpush1.bf16.xpose.msra.mxu0 0
      %2821 = vmatprep.mubr.bf16.mxu0 0
      %2822 = vmatmul.mubr.bf16.gmra.mrb[0].mxu0 %v2742
      %v2823 = vpop.f32.mrb[0].mxu0
      %v2824 = vadd.f32 %v912, %v2823
      %v2825 = vpop.f32.mrb[0].mxu0
      %v2826 = vpop.f32.mrb[0].mxu0
      %v2827 = vadd.f32 %v912, %v2826
      %v2828 = vpop.f32.mrb[0].mxu0
      %2829 = vmatprep.mubr.bf16.mxu0 0
      %2830 = vmatmul.mubr.bf16.gmra.mrb[0].mxu0 %v2745
      %v2831 = vpop.f32.mrb[0].mxu0
      %v2832 = vadd.f32 %v912, %v2831
      %v2833 = vpop.f32.mrb[0].mxu0
      %v2834 = vpop.f32.mrb[0].mxu0
      %v2835 = vadd.f32 %v912, %v2834
      %v2836 = vpop.f32.mrb[0].mxu0
      %2837 = vmatprep.mubr.bf16.mxu0 0
      %2838 = vmatmul.mubr.bf16.gmra.mrb[0].mxu0 %v2748
      %v2839 = vpop.f32.mrb[0].mxu0
      %v2840 = vadd.f32 %v912, %v2839
      %v2841 = vpop.f32.mrb[0].mxu0
      %v2842 = vpop.f32.mrb[0].mxu0
      %v2843 = vadd.f32 %v912, %v2842
      %v2844 = vpop.f32.mrb[0].mxu0
      %2845 = vmatprep.mubr.bf16.mxu0 0
      %2846 = vmatmul.mubr.bf16.gmra.mrb[0].mxu0 %v2751
      %v2847 = vpop.f32.mrb[0].mxu0
      %v2848 = vadd.f32 %v912, %v2847
      %v2849 = vpop.f32.mrb[0].mxu0
      %v2850 = vpop.f32.mrb[0].mxu0
      %v2851 = vadd.f32 %v912, %v2850
      %v2852 = vpop.f32.mrb[0].mxu0
      %2853 = vmatprep.mubr.bf16.mxu0 0
      %2854 = vmatmul.mubr.bf16.gmra.mrb[0].mxu0 %v2754
      %v2855 = vpop.f32.mrb[0].mxu0
      %v2856 = vadd.f32 %v912, %v2855
      %v2857 = vpop.f32.mrb[0].mxu0
      %v2858 = vpop.f32.mrb[0].mxu0
      %v2859 = vadd.f32 %v912, %v2858
      %v2860 = vpop.f32.mrb[0].mxu0
      %2861 = vmatprep.mubr.bf16.mxu0 0
      %2862 = vmatmul.mubr.bf16.gmra.mrb[0].mxu0 %v2757
      %v2863 = vpop.f32.mrb[0].mxu0
      %v2864 = vadd.f32 %v912, %v2863
      %v2865 = vpop.f32.mrb[0].mxu0
      %v2866 = vpop.f32.mrb[0].mxu0
      %v2867 = vadd.f32 %v912, %v2866
      %v2868 = vpop.f32.mrb[0].mxu0
      %2869 = vmatprep.mubr.bf16.mxu0 0
      %2870 = vmatmul.mubr.bf16.gmra.mrb[0].mxu0 %v2760
      %v2871 = vpop.f32.mrb[0].mxu0
      %v2872 = vadd.f32 %v912, %v2871
      %v2873 = vpop.f32.mrb[0].mxu0
      %v2874 = vpop.f32.mrb[0].mxu0
      %v2875 = vadd.f32 %v912, %v2874
      %v2876 = vpop.f32.mrb[0].mxu0
      %2877 = vmatprep.mubr.bf16.mxu0 0
      %2878 = vmatmul.mubr.bf16.gmra.mrb[0].mxu0 %v2763
      %v2879 = vpop.f32.mrb[0].mxu0
      %v2880 = vadd.f32 %v912, %v2879
      %v2881 = vpop.f32.mrb[0].mxu0
      %v2882 = vpop.f32.mrb[0].mxu0
      %v2883 = vadd.f32 %v912, %v2882
      %v2884 = vpop.f32.mrb[0].mxu0
      %2885 = vdwg.mxu0
      %2886 = vmax.xlane.f32.xlu0 %v2824
      %v2887 = vpop.xlane.xlu0 %2886
      %2888 = vmax.xlane.f32.xlu0 %v2827
      %v2889 = vpop.xlane.xlu0 %2888
      %2890 = vmax.xlane.f32.xlu0 %v2832
      %v2891 = vpop.xlane.xlu0 %2890
      %2892 = vmax.xlane.f32.xlu0 %v2835
      %v2893 = vpop.xlane.xlu0 %2892
      %2894 = vmax.xlane.f32.xlu0 %v2840
      %v2895 = vpop.xlane.xlu0 %2894
      %2896 = vmax.xlane.f32.xlu0 %v2843
      %v2897 = vpop.xlane.xlu0 %2896
      %2898 = vmax.xlane.f32.xlu0 %v2848
      %v2899 = vpop.xlane.xlu0 %2898
      %2900 = vmax.xlane.f32.xlu0 %v2851
      %v2901 = vpop.xlane.xlu0 %2900
      %2902 = vmax.xlane.f32.xlu0 %v2856
      %v2903 = vpop.xlane.xlu0 %2902
      %2904 = vmax.xlane.f32.xlu0 %v2859
      %v2905 = vpop.xlane.xlu0 %2904
      %2906 = vmax.xlane.f32.xlu0 %v2864
      %v2907 = vpop.xlane.xlu0 %2906
      %2908 = vmax.xlane.f32.xlu0 %v2867
      %v2909 = vpop.xlane.xlu0 %2908
      %2910 = vmax.xlane.f32.xlu0 %v2872
      %v2911 = vpop.xlane.xlu0 %2910
      %2912 = vmax.xlane.f32.xlu0 %v2875
      %v2913 = vpop.xlane.xlu0 %2912
      %2914 = vmax.xlane.f32.xlu0 %v2880
      %v2915 = vpop.xlane.xlu0 %2914
      %2916 = vmax.xlane.f32.xlu0 %v2883
      %v2917 = vpop.xlane.xlu0 %2916
      %v2918 = vsub.f32 %v2824, %v2887
      %v2919 = vsub.f32 %v2827, %v2889
      %v2920 = vsub.f32 %v2832, %v2891
      %v2921 = vsub.f32 %v2835, %v2893
      %v2922 = vsub.f32 %v2840, %v2895
      %v2923 = vsub.f32 %v2843, %v2897
      %v2924 = vsub.f32 %v2848, %v2899
      %v2925 = vsub.f32 %v2851, %v2901
      %v2926 = vsub.f32 %v2856, %v2903
      %v2927 = vsub.f32 %v2859, %v2905
      %v2928 = vsub.f32 %v2864, %v2907
      %v2929 = vsub.f32 %v2867, %v2909
      %v2930 = vsub.f32 %v2872, %v2911
      %v2931 = vsub.f32 %v2875, %v2913
      %v2932 = vsub.f32 %v2880, %v2915
      %v2933 = vsub.f32 %v2883, %v2917
      %v2934 = vmul.f32 %v2918, 1.442695
      %v2935 = vpow.pop %v2934
      %v2936 = vmul.f32 %v2919, 1.442695
      %v2937 = vpow.pop %v2936
      %v2938 = vmul.f32 %v2920, 1.442695
      %v2939 = vpow.pop %v2938
      %v2940 = vmul.f32 %v2921, 1.442695
      %v2941 = vpow.pop %v2940
      %v2942 = vmul.f32 %v2922, 1.442695
      %v2943 = vpow.pop %v2942
      %v2944 = vmul.f32 %v2923, 1.442695
      %v2945 = vpow.pop %v2944
      %v2946 = vmul.f32 %v2924, 1.442695
      %v2947 = vpow.pop %v2946
      %v2948 = vmul.f32 %v2925, 1.442695
      %v2949 = vpow.pop %v2948
      %v2950 = vmul.f32 %v2926, 1.442695
      %v2951 = vpow.pop %v2950
      %v2952 = vmul.f32 %v2927, 1.442695
      %v2953 = vpow.pop %v2952
      %v2954 = vmul.f32 %v2928, 1.442695
      %v2955 = vpow.pop %v2954
      %v2956 = vmul.f32 %v2929, 1.442695
      %v2957 = vpow.pop %v2956
      %v2958 = vmul.f32 %v2930, 1.442695
      %v2959 = vpow.pop %v2958
      %v2960 = vmul.f32 %v2931, 1.442695
      %v2961 = vpow.pop %v2960
      %v2962 = vmul.f32 %v2932, 1.442695
      %v2963 = vpow.pop %v2962
      %v2964 = vmul.f32 %v2933, 1.442695
      %v2965 = vpow.pop %v2964
      %2966 = vadd.xlane.f32.xlu0 %v2935
      %v2967 = vpop.xlane.xlu0 %2966
      %2968 = vadd.xlane.f32.xlu0 %v2937
      %v2969 = vpop.xlane.xlu0 %2968
      %2970 = vadd.xlane.f32.xlu0 %v2939
      %v2971 = vpop.xlane.xlu0 %2970
      %2972 = vadd.xlane.f32.xlu0 %v2941
      %v2973 = vpop.xlane.xlu0 %2972
      %2974 = vadd.xlane.f32.xlu0 %v2943
      %v2975 = vpop.xlane.xlu0 %2974
      %2976 = vadd.xlane.f32.xlu0 %v2945
      %v2977 = vpop.xlane.xlu0 %2976
      %2978 = vadd.xlane.f32.xlu0 %v2947
      %v2979 = vpop.xlane.xlu0 %2978
      %2980 = vadd.xlane.f32.xlu0 %v2949
      %v2981 = vpop.xlane.xlu0 %2980
      %2982 = vadd.xlane.f32.xlu0 %v2951
      %v2983 = vpop.xlane.xlu0 %2982
      %2984 = vadd.xlane.f32.xlu0 %v2953
      %v2985 = vpop.xlane.xlu0 %2984
      %2986 = vadd.xlane.f32.xlu0 %v2955
      %v2987 = vpop.xlane.xlu0 %2986
      %2988 = vadd.xlane.f32.xlu0 %v2957
      %v2989 = vpop.xlane.xlu0 %2988
      %2990 = vadd.xlane.f32.xlu0 %v2959
      %v2991 = vpop.xlane.xlu0 %2990
      %2992 = vadd.xlane.f32.xlu0 %v2961
      %v2993 = vpop.xlane.xlu0 %2992
      %2994 = vadd.xlane.f32.xlu0 %v2963
      %v2995 = vpop.xlane.xlu0 %2994
      %2996 = vadd.xlane.f32.xlu0 %v2965
      %v2997 = vpop.xlane.xlu0 %2996
      %v2998 = vrcp.pop %v2967
      %v2999 = vrcp.pop %v2969
      %v3000 = vrcp.pop %v2971
      %v3001 = vrcp.pop %v2973
      %v3002 = vrcp.pop %v2975
      %v3003 = vrcp.pop %v2977
      %v3004 = vrcp.pop %v2979
      %v3005 = vrcp.pop %v2981
      %v3006 = vrcp.pop %v2983
      %v3007 = vrcp.pop %v2985
      %v3008 = vrcp.pop %v2987
      %v3009 = vrcp.pop %v2989
      %v3010 = vrcp.pop %v2991
      %v3011 = vrcp.pop %v2993
      %v3012 = vrcp.pop %v2995
      %v3013 = vrcp.pop %v2997
      %v3014 = vmul.f32 %v2935, %v2998
      %v3015 = vmul.f32 %v2937, %v2999
      %v3016 = vmul.f32 %v2939, %v3000
      %v3017 = vmul.f32 %v2941, %v3001
      %v3018 = vmul.f32 %v2943, %v3002
      %v3019 = vmul.f32 %v2945, %v3003
      %v3020 = vmul.f32 %v2947, %v3004
      %v3021 = vmul.f32 %v2949, %v3005
      %v3022 = vmul.f32 %v2951, %v3006
      %v3023 = vmul.f32 %v2953, %v3007
      %v3024 = vmul.f32 %v2955, %v3008
      %v3025 = vmul.f32 %v2957, %v3009
      %v3026 = vmul.f32 %v2959, %v3010
      %v3027 = vmul.f32 %v2961, %v3011
      %v3028 = vmul.f32 %v2963, %v3012
      %v3029 = vmul.f32 %v2965, %v3013
      %v3030 = vpack.c.bf16 %v3015, %v3014
      %v3031 = vpack.c.bf16 %v3017, %v3016
      %v3032 = vpack.c.bf16 %v3019, %v3018
      %v3033 = vpack.c.bf16 %v3021, %v3020
      %v3034 = vpack.c.bf16 %v3023, %v3022
      %v3035 = vpack.c.bf16 %v3025, %v3024
      %v3036 = vpack.c.bf16 %v3027, %v3026
      %v3037 = vpack.c.bf16 %v3029, %v3028
      %3038 = vrot.lane.b32.xlu0 %v929, 32
      %v3039 = vpop.permute.xlu0 %3038
      %3040 = vrot.lane.b32.xlu0 %v930, 32
      %v3041 = vpop.permute.xlu0 %3040
      %3042 = vrot.lane.b32.xlu0 %v931, 32
      %v3043 = vpop.permute.xlu0 %3042
      %3044 = vrot.lane.b32.xlu0 %v932, 32
      %v3045 = vpop.permute.xlu0 %3044
      %3046 = vrot.lane.b32.xlu0 %v933, 32
      %v3047 = vpop.permute.xlu0 %3046
      %3048 = vrot.lane.b32.xlu0 %v934, 32
      %v3049 = vpop.permute.xlu0 %3048
      %3050 = vrot.lane.b32.xlu0 %v935, 32
      %v3051 = vpop.permute.xlu0 %3050
      %3052 = vrot.lane.b32.xlu0 %v936, 32
      %v3053 = vpop.permute.xlu0 %3052
      %3062 = vmatprep.subr.bf16.mxu0 0
      %3063 = vmatpush1.bf16.msra.mxu0 %v3039
      %3064 = vmatprep.subr.bf16.mxu0 0
      %3065 = vmatpush1.bf16.msra.mxu0 %v3041
      %3066 = vmatprep.subr.bf16.mxu0 0
      %3067 = vmatpush1.bf16.msra.mxu0 %v3043
      %3068 = vmatprep.subr.bf16.mxu0 0
      %3069 = vmatpush1.bf16.msra.mxu0 %v3045
      %3070 = vmatprep.subr.bf16.mxu0 0
      %3071 = vmatpush1.bf16.msra.mxu0 %v3047
      %3072 = vmatprep.subr.bf16.mxu0 0
      %3073 = vmatpush1.bf16.msra.mxu0 %v3049
      %3074 = vmatprep.subr.bf16.mxu0 0
      %3075 = vmatpush1.bf16.msra.mxu0 %v3051
      %3076 = vmatprep.subr.bf16.mxu0 0
      %3077 = vmatpush1.bf16.msra.mxu0 %v3053
      %3078 = vmatprep.subr.bf16.mxu0 0
      %3079 = vmatpush1.bf16.msra.mxu0 0
      %3080 = vmatprep.subr.bf16.mxu0 0
      %3081 = vmatpush1.bf16.msra.mxu0 0
      %3082 = vmatprep.subr.bf16.mxu0 0
      %3083 = vmatpush1.bf16.msra.mxu0 0
      %3084 = vmatprep.subr.bf16.mxu0 0
      %3085 = vmatpush1.bf16.msra.mxu0 0
      %3086 = vmatprep.subr.bf16.mxu0 0
      %3087 = vmatpush1.bf16.msra.mxu0 0
      %3088 = vmatprep.subr.bf16.mxu0 0
      %3089 = vmatpush1.bf16.msra.mxu0 0
      %3090 = vmatprep.subr.bf16.mxu0 0
      %3091 = vmatpush1.bf16.msra.mxu0 0
      %3092 = vmatprep.subr.bf16.mxu0 0
      %3093 = vmatpush1.bf16.msra.mxu0 0
      %3094 = vmatprep.mubr.bf16.mxu0 0
      %3095 = vmatmul.mubr.bf16.gmra.mrb[0].mxu0 %v3030
      %v3096 = vpop.f32.mrb[0].mxu0
      %v3097 = vadd.f32 0.0, %v3096
      %v3098 = vpop.f32.mrb[0].mxu0
      %v3099 = vpop.f32.mrb[0].mxu0
      %v3100 = vadd.f32 0.0, %v3099
      %v3101 = vpop.f32.mrb[0].mxu0
      %3102 = vmatprep.mubr.bf16.mxu0 0
      %3103 = vmatmul.mubr.bf16.gmra.mrb[0].mxu0 %v3031
      %v3104 = vpop.f32.mrb[0].mxu0
      %v3105 = vadd.f32 0.0, %v3104
      %v3106 = vpop.f32.mrb[0].mxu0
      %v3107 = vpop.f32.mrb[0].mxu0
      %v3108 = vadd.f32 0.0, %v3107
      %v3109 = vpop.f32.mrb[0].mxu0
      %3110 = vmatprep.mubr.bf16.mxu0 0
      %3111 = vmatmul.mubr.bf16.gmra.mrb[0].mxu0 %v3032
      %v3112 = vpop.f32.mrb[0].mxu0
      %v3113 = vadd.f32 0.0, %v3112
      %v3114 = vpop.f32.mrb[0].mxu0
      %v3115 = vpop.f32.mrb[0].mxu0
      %v3116 = vadd.f32 0.0, %v3115
      %v3117 = vpop.f32.mrb[0].mxu0
      %3118 = vmatprep.mubr.bf16.mxu0 0
      %3119 = vmatmul.mubr.bf16.gmra.mrb[0].mxu0 %v3033
      %v3120 = vpop.f32.mrb[0].mxu0
      %v3121 = vadd.f32 0.0, %v3120
      %v3122 = vpop.f32.mrb[0].mxu0
      %v3123 = vpop.f32.mrb[0].mxu0
      %v3124 = vadd.f32 0.0, %v3123
      %v3125 = vpop.f32.mrb[0].mxu0
      %3126 = vmatprep.mubr.bf16.mxu0 0
      %3127 = vmatmul.mubr.bf16.gmra.mrb[0].mxu0 %v3034
      %v3128 = vpop.f32.mrb[0].mxu0
      %v3129 = vadd.f32 0.0, %v3128
      %v3130 = vpop.f32.mrb[0].mxu0
      %v3131 = vpop.f32.mrb[0].mxu0
      %v3132 = vadd.f32 0.0, %v3131
      %v3133 = vpop.f32.mrb[0].mxu0
      %3134 = vmatprep.mubr.bf16.mxu0 0
      %3135 = vmatmul.mubr.bf16.gmra.mrb[0].mxu0 %v3035
      %v3136 = vpop.f32.mrb[0].mxu0
      %v3137 = vadd.f32 0.0, %v3136
      %v3138 = vpop.f32.mrb[0].mxu0
      %v3139 = vpop.f32.mrb[0].mxu0
      %v3140 = vadd.f32 0.0, %v3139
      %v3141 = vpop.f32.mrb[0].mxu0
      %3142 = vmatprep.mubr.bf16.mxu0 0
      %3143 = vmatmul.mubr.bf16.gmra.mrb[0].mxu0 %v3036
      %v3144 = vpop.f32.mrb[0].mxu0
      %v3145 = vadd.f32 0.0, %v3144
      %v3146 = vpop.f32.mrb[0].mxu0
      %v3147 = vpop.f32.mrb[0].mxu0
      %v3148 = vadd.f32 0.0, %v3147
      %v3149 = vpop.f32.mrb[0].mxu0
      %3150 = vmatprep.mubr.bf16.mxu0 0
      %3151 = vmatmul.mubr.bf16.gmra.mrb[0].mxu0 %v3037
      %v3152 = vpop.f32.mrb[0].mxu0
      %v3153 = vadd.f32 0.0, %v3152
      %v3154 = vpop.f32.mrb[0].mxu0
      %v3155 = vpop.f32.mrb[0].mxu0
      %v3156 = vadd.f32 0.0, %v3155
      %v3157 = vpop.f32.mrb[0].mxu0
      %3158 = vdwg.mxu0
      %v3159 = vpack.c.bf16 %v3100, %v3097
      %v3160 = vpack.c.bf16 %v3108, %v3105
      %v3161 = vpack.c.bf16 %v3116, %v3113
      %v3162 = vpack.c.bf16 %v3124, %v3121
      %v3163 = vpack.c.bf16 %v3132, %v3129
      %v3164 = vpack.c.bf16 %v3140, %v3137
      %v3165 = vpack.c.bf16 %v3148, %v3145
      %v3166 = vpack.c.bf16 %v3156, %v3153
      %s3167 = scalar_lea.vmem %s3, 48
      %v3168 = vld [vmem:[%s3167] sm:$0xf]
      %v3169 = vld [vmem:[%s3167 + $0x4] sm:$0xf]
      %v3170 = vld [vmem:[%s3167 + $0x8] sm:$0xf]
      %v3171 = vld [vmem:[%s3167 + $0xc] sm:$0xf]
      %v3176 = vunpack.c.l.b16 %v3168
      %v3177 = vunpack.c.l.b16 %v3169
      %v3178 = vunpack.c.l.b16 %v3170
      %v3179 = vunpack.c.l.b16 %v3171
      %v3180 = vpack.c.b16 %v3177, %v3176
      %v3181 = vpack.c.b16 %v3179, %v3178
      %v3185 = vsel %vm937, %v3159, 0
      %v3188 = vsel %vm937, %v3160, 0
      %v3191 = vsel %vm937, %v3161, 0
      %v3194 = vsel %vm937, %v3162, 0
      %v3197 = vsel %vm937, %v3163, 0
      %v3200 = vsel %vm937, %v3164, 0
      %v3203 = vsel %vm937, %v3165, 0
      %v3206 = vsel %vm937, %v3166, 0
      %3208 = vmatprep.subr.bf16.mxu0 0
      %3209 = vmatpush1.bf16.msra.mxu0 %v3180
      %3210 = vmatprep.subr.bf16.mxu0 0
      %3211 = vmatpush1.bf16.msra.mxu0 %v3181
      %3212 = vmatprep.subr.bf16.mxu0 0
      %3213 = vmatpush1.bf16.msra.mxu0 0
      %3214 = vmatprep.subr.bf16.mxu0 0
      %3215 = vmatpush1.bf16.msra.mxu0 0
      %3216 = vmatprep.subr.bf16.mxu0 0
      %3217 = vmatpush1.bf16.msra.mxu0 0
      %3218 = vmatprep.subr.bf16.mxu0 0
      %3219 = vmatpush1.bf16.msra.mxu0 0
      %3220 = vmatprep.subr.bf16.mxu0 0
      %3221 = vmatpush1.bf16.msra.mxu0 0
      %3222 = vmatprep.subr.bf16.mxu0 0
      %3223 = vmatpush1.bf16.msra.mxu0 0
      %3224 = vmatprep.subr.bf16.mxu0 0
      %3225 = vmatpush1.bf16.msra.mxu0 0
      %3226 = vmatprep.subr.bf16.mxu0 0
      %3227 = vmatpush1.bf16.msra.mxu0 0
      %3228 = vmatprep.subr.bf16.mxu0 0
      %3229 = vmatpush1.bf16.msra.mxu0 0
      %3230 = vmatprep.subr.bf16.mxu0 0
      %3231 = vmatpush1.bf16.msra.mxu0 0
      %3232 = vmatprep.subr.bf16.mxu0 0
      %3233 = vmatpush1.bf16.msra.mxu0 0
      %3234 = vmatprep.subr.bf16.mxu0 0
      %3235 = vmatpush1.bf16.msra.mxu0 0
      %3236 = vmatprep.subr.bf16.mxu0 0
      %3237 = vmatpush1.bf16.msra.mxu0 0
      %3238 = vmatprep.subr.bf16.mxu0 0
      %3239 = vmatpush1.bf16.msra.mxu0 0
      %3240 = vmatprep.mubr.bf16.mxu0 0
      %3241 = vmatmul.mubr.bf16.gmra.mrb[0].mxu0 %v3185
      %v3242 = vpop.f32.mrb[0].mxu0
      %v3243 = vadd.f32 0.0, %v3242
      %v3244 = vpop.f32.mrb[0].mxu0
      %v3245 = vpop.f32.mrb[0].mxu0
      %v3246 = vadd.f32 0.0, %v3245
      %v3247 = vpop.f32.mrb[0].mxu0
      %3248 = vmatprep.mubr.bf16.mxu0 0
      %3249 = vmatmul.mubr.bf16.gmra.mrb[0].mxu0 %v3188
      %v3250 = vpop.f32.mrb[0].mxu0
      %v3251 = vadd.f32 0.0, %v3250
      %v3252 = vpop.f32.mrb[0].mxu0
      %v3253 = vpop.f32.mrb[0].mxu0
      %v3254 = vadd.f32 0.0, %v3253
      %v3255 = vpop.f32.mrb[0].mxu0
      %3256 = vmatprep.mubr.bf16.mxu0 0
      %3257 = vmatmul.mubr.bf16.gmra.mrb[0].mxu0 %v3191
      %v3258 = vpop.f32.mrb[0].mxu0
      %v3259 = vadd.f32 0.0, %v3258
      %v3260 = vpop.f32.mrb[0].mxu0
      %v3261 = vpop.f32.mrb[0].mxu0
      %v3262 = vadd.f32 0.0, %v3261
      %v3263 = vpop.f32.mrb[0].mxu0
      %3264 = vmatprep.mubr.bf16.mxu0 0
      %3265 = vmatmul.mubr.bf16.gmra.mrb[0].mxu0 %v3194
      %v3266 = vpop.f32.mrb[0].mxu0
      %v3267 = vadd.f32 0.0, %v3266
      %v3268 = vpop.f32.mrb[0].mxu0
      %v3269 = vpop.f32.mrb[0].mxu0
      %v3270 = vadd.f32 0.0, %v3269
      %v3271 = vpop.f32.mrb[0].mxu0
      %3272 = vmatprep.mubr.bf16.mxu0 0
      %3273 = vmatmul.mubr.bf16.gmra.mrb[0].mxu0 %v3197
      %v3274 = vpop.f32.mrb[0].mxu0
      %v3275 = vadd.f32 0.0, %v3274
      %v3276 = vpop.f32.mrb[0].mxu0
      %v3277 = vpop.f32.mrb[0].mxu0
      %v3278 = vadd.f32 0.0, %v3277
      %v3279 = vpop.f32.mrb[0].mxu0
      %3280 = vmatprep.mubr.bf16.mxu0 0
      %3281 = vmatmul.mubr.bf16.gmra.mrb[0].mxu0 %v3200
      %v3282 = vpop.f32.mrb[0].mxu0
      %v3283 = vadd.f32 0.0, %v3282
      %v3284 = vpop.f32.mrb[0].mxu0
      %v3285 = vpop.f32.mrb[0].mxu0
      %v3286 = vadd.f32 0.0, %v3285
      %v3287 = vpop.f32.mrb[0].mxu0
      %3288 = vmatprep.mubr.bf16.mxu0 0
      %3289 = vmatmul.mubr.bf16.gmra.mrb[0].mxu0 %v3203
      %v3290 = vpop.f32.mrb[0].mxu0
      %v3291 = vadd.f32 0.0, %v3290
      %v3292 = vpop.f32.mrb[0].mxu0
      %v3293 = vpop.f32.mrb[0].mxu0
      %v3294 = vadd.f32 0.0, %v3293
      %v3295 = vpop.f32.mrb[0].mxu0
      %3296 = vmatprep.mubr.bf16.mxu0 0
      %3297 = vmatmul.mubr.bf16.gmra.mrb[0].mxu0 %v3206
      %v3298 = vpop.f32.mrb[0].mxu0
      %v3299 = vadd.f32 0.0, %v3298
      %v3300 = vpop.f32.mrb[0].mxu0
      %v3301 = vpop.f32.mrb[0].mxu0
      %v3302 = vadd.f32 0.0, %v3301
      %v3303 = vpop.f32.mrb[0].mxu0
      %3304 = vdwg.mxu0
      %v3305 = vadd.f32 %v2693, %v3243
      %v3306 = vadd.f32 %v2694, %v3246
      %v3307 = vadd.f32 %v2695, %v3251
      %v3308 = vadd.f32 %v2696, %v3254
      %v3309 = vadd.f32 %v2697, %v3259
      %v3310 = vadd.f32 %v2698, %v3262
      %v3311 = vadd.f32 %v2699, %v3267
      %v3312 = vadd.f32 %v2700, %v3270
      %v3313 = vadd.f32 %v2701, %v3275
      %v3314 = vadd.f32 %v2702, %v3278
      %v3315 = vadd.f32 %v2703, %v3283
      %v3316 = vadd.f32 %v2704, %v3286
      %v3317 = vadd.f32 %v2705, %v3291
      %v3318 = vadd.f32 %v2706, %v3294
      %v3319 = vadd.f32 %v2707, %v3299
      %v3320 = vadd.f32 %v2708, %v3302
      %v3321 = vadd.f32 %v458, %v3305
      %v3322 = vadd.f32 %v459, %v3306
      %v3323 = vadd.f32 %v460, %v3307
      %v3324 = vadd.f32 %v461, %v3308
      %v3325 = vadd.f32 %v462, %v3309
      %v3326 = vadd.f32 %v463, %v3310
      %v3327 = vadd.f32 %v464, %v3311
      %v3328 = vadd.f32 %v465, %v3312
      %v3329 = vadd.f32 %v466, %v3313
      %v3330 = vadd.f32 %v467, %v3314
      %v3331 = vadd.f32 %v468, %v3315
      %v3332 = vadd.f32 %v469, %v3316
      %v3333 = vadd.f32 %v470, %v3317
      %v3334 = vadd.f32 %v471, %v3318
      %v3335 = vadd.f32 %v472, %v3319
      %v3336 = vadd.f32 %v473, %v3320
      %v3337 = vld [vmem:[%s4] sm:$0x1]
      %v3339 = vlaneseq
      %v3340 = vshrl.u32 %v3339, 7
      %v3341 = vsub.s32 0, %v3340
      %v3342 = vrot.slane %v3337, %v3341
      %v3344 = vadd.f32 %v3321, %v3342
      %v3345 = vadd.f32 %v3322, %v3342
      %v3346 = vadd.f32 %v3323, %v3342
      %v3347 = vadd.f32 %v3324, %v3342
      %v3348 = vadd.f32 %v3325, %v3342
      %v3349 = vadd.f32 %v3326, %v3342
      %v3350 = vadd.f32 %v3327, %v3342
      %v3351 = vadd.f32 %v3328, %v3342
      %v3352 = vadd.f32 %v3329, %v3342
      %v3353 = vadd.f32 %v3330, %v3342
      %v3354 = vadd.f32 %v3331, %v3342
      %v3355 = vadd.f32 %v3332, %v3342
      %v3356 = vadd.f32 %v3333, %v3342
      %v3357 = vadd.f32 %v3334, %v3342
      %v3358 = vadd.f32 %v3335, %v3342
      %v3359 = vadd.f32 %v3336, %v3342
      %v3360 = vld [vmem:[%s5] sm:$0x1]
      %v3361 = vld [vmem:[%s6] sm:$0x1]
      %3362 = vadd.xlane.f32.xlu0 %v3344
      %v3363 = vpop.xlane.xlu0 %3362
      %3364 = vadd.xlane.f32.xlu0 %v3345
      %v3365 = vpop.xlane.xlu0 %3364
      %3366 = vadd.xlane.f32.xlu0 %v3346
      %v3367 = vpop.xlane.xlu0 %3366
      %3368 = vadd.xlane.f32.xlu0 %v3347
      %v3369 = vpop.xlane.xlu0 %3368
      %3370 = vadd.xlane.f32.xlu0 %v3348
      %v3371 = vpop.xlane.xlu0 %3370
      %3372 = vadd.xlane.f32.xlu0 %v3349
      %v3373 = vpop.xlane.xlu0 %3372
      %3374 = vadd.xlane.f32.xlu0 %v3350
      %v3375 = vpop.xlane.xlu0 %3374
      %3376 = vadd.xlane.f32.xlu0 %v3351
      %v3377 = vpop.xlane.xlu0 %3376
      %3378 = vadd.xlane.f32.xlu0 %v3352
      %v3379 = vpop.xlane.xlu0 %3378
      %3380 = vadd.xlane.f32.xlu0 %v3353
      %v3381 = vpop.xlane.xlu0 %3380
      %3382 = vadd.xlane.f32.xlu0 %v3354
      %v3383 = vpop.xlane.xlu0 %3382
      %3384 = vadd.xlane.f32.xlu0 %v3355
      %v3385 = vpop.xlane.xlu0 %3384
      %3386 = vadd.xlane.f32.xlu0 %v3356
      %v3387 = vpop.xlane.xlu0 %3386
      %3388 = vadd.xlane.f32.xlu0 %v3357
      %v3389 = vpop.xlane.xlu0 %3388
      %3390 = vadd.xlane.f32.xlu0 %v3358
      %v3391 = vpop.xlane.xlu0 %3390
      %3392 = vadd.xlane.f32.xlu0 %v3359
      %v3393 = vpop.xlane.xlu0 %3392
      %v3394 = vrcp.pop 128.0
      %v3395 = vmul.f32 %v3363, %v3394
      %v3396 = vmul.f32 %v3365, %v3394
      %v3397 = vmul.f32 %v3367, %v3394
      %v3398 = vmul.f32 %v3369, %v3394
      %v3399 = vmul.f32 %v3371, %v3394
      %v3400 = vmul.f32 %v3373, %v3394
      %v3401 = vmul.f32 %v3375, %v3394
      %v3402 = vmul.f32 %v3377, %v3394
      %v3403 = vmul.f32 %v3379, %v3394
      %v3404 = vmul.f32 %v3381, %v3394
      %v3405 = vmul.f32 %v3383, %v3394
      %v3406 = vmul.f32 %v3385, %v3394
      %v3407 = vmul.f32 %v3387, %v3394
      %v3408 = vmul.f32 %v3389, %v3394
      %v3409 = vmul.f32 %v3391, %v3394
      %v3410 = vmul.f32 %v3393, %v3394
      %v3411 = vsub.f32 %v3344, %v3395
      %v3412 = vsub.f32 %v3345, %v3396
      %v3413 = vsub.f32 %v3346, %v3397
      %v3414 = vsub.f32 %v3347, %v3398
      %v3415 = vsub.f32 %v3348, %v3399
      %v3416 = vsub.f32 %v3349, %v3400
      %v3417 = vsub.f32 %v3350, %v3401
      %v3418 = vsub.f32 %v3351, %v3402
      %v3419 = vsub.f32 %v3352, %v3403
      %v3420 = vsub.f32 %v3353, %v3404
      %v3421 = vsub.f32 %v3354, %v3405
      %v3422 = vsub.f32 %v3355, %v3406
      %v3423 = vsub.f32 %v3356, %v3407
      %v3424 = vsub.f32 %v3357, %v3408
      %v3425 = vsub.f32 %v3358, %v3409
      %v3426 = vsub.f32 %v3359, %v3410
      %v3427 = vmul.f32 %v3411, %v3411
      %v3428 = vmul.f32 %v3412, %v3412
      %v3429 = vmul.f32 %v3413, %v3413
      %v3430 = vmul.f32 %v3414, %v3414
      %v3431 = vmul.f32 %v3415, %v3415
      %v3432 = vmul.f32 %v3416, %v3416
      %v3433 = vmul.f32 %v3417, %v3417
      %v3434 = vmul.f32 %v3418, %v3418
      %v3435 = vmul.f32 %v3419, %v3419
      %v3436 = vmul.f32 %v3420, %v3420
      %v3437 = vmul.f32 %v3421, %v3421
      %v3438 = vmul.f32 %v3422, %v3422
      %v3439 = vmul.f32 %v3423, %v3423
      %v3440 = vmul.f32 %v3424, %v3424
      %v3441 = vmul.f32 %v3425, %v3425
      %v3442 = vmul.f32 %v3426, %v3426
      %3443 = vadd.xlane.f32.xlu0 %v3427
      %v3444 = vpop.xlane.xlu0 %3443
      %3445 = vadd.xlane.f32.xlu0 %v3428
      %v3446 = vpop.xlane.xlu0 %3445
      %3447 = vadd.xlane.f32.xlu0 %v3429
      %v3448 = vpop.xlane.xlu0 %3447
      %3449 = vadd.xlane.f32.xlu0 %v3430
      %v3450 = vpop.xlane.xlu0 %3449
      %3451 = vadd.xlane.f32.xlu0 %v3431
      %v3452 = vpop.xlane.xlu0 %3451
      %3453 = vadd.xlane.f32.xlu0 %v3432
      %v3454 = vpop.xlane.xlu0 %3453
      %3455 = vadd.xlane.f32.xlu0 %v3433
      %v3456 = vpop.xlane.xlu0 %3455
      %3457 = vadd.xlane.f32.xlu0 %v3434
      %v3458 = vpop.xlane.xlu0 %3457
      %3459 = vadd.xlane.f32.xlu0 %v3435
      %v3460 = vpop.xlane.xlu0 %3459
      %3461 = vadd.xlane.f32.xlu0 %v3436
      %v3462 = vpop.xlane.xlu0 %3461
      %3463 = vadd.xlane.f32.xlu0 %v3437
      %v3464 = vpop.xlane.xlu0 %3463
      %3465 = vadd.xlane.f32.xlu0 %v3438
      %v3466 = vpop.xlane.xlu0 %3465
      %3467 = vadd.xlane.f32.xlu0 %v3439
      %v3468 = vpop.xlane.xlu0 %3467
      %3469 = vadd.xlane.f32.xlu0 %v3440
      %v3470 = vpop.xlane.xlu0 %3469
      %3471 = vadd.xlane.f32.xlu0 %v3441
      %v3472 = vpop.xlane.xlu0 %3471
      %3473 = vadd.xlane.f32.xlu0 %v3442
      %v3474 = vpop.xlane.xlu0 %3473
      %v3475 = vmul.f32 %v3444, %v3394
      %v3476 = vmul.f32 %v3446, %v3394
      %v3477 = vmul.f32 %v3448, %v3394
      %v3478 = vmul.f32 %v3450, %v3394
      %v3479 = vmul.f32 %v3452, %v3394
      %v3480 = vmul.f32 %v3454, %v3394
      %v3481 = vmul.f32 %v3456, %v3394
      %v3482 = vmul.f32 %v3458, %v3394
      %v3483 = vmul.f32 %v3460, %v3394
      %v3484 = vmul.f32 %v3462, %v3394
      %v3485 = vmul.f32 %v3464, %v3394
      %v3486 = vmul.f32 %v3466, %v3394
      %v3487 = vmul.f32 %v3468, %v3394
      %v3488 = vmul.f32 %v3470, %v3394
      %v3489 = vmul.f32 %v3472, %v3394
      %v3490 = vmul.f32 %v3474, %v3394
      %v3491 = vadd.f32 %v3475, 1e-05
      %v3492 = vadd.f32 %v3476, 1e-05
      %v3493 = vadd.f32 %v3477, 1e-05
      %v3494 = vadd.f32 %v3478, 1e-05
      %v3495 = vadd.f32 %v3479, 1e-05
      %v3496 = vadd.f32 %v3480, 1e-05
      %v3497 = vadd.f32 %v3481, 1e-05
      %v3498 = vadd.f32 %v3482, 1e-05
      %v3499 = vadd.f32 %v3483, 1e-05
      %v3500 = vadd.f32 %v3484, 1e-05
      %v3501 = vadd.f32 %v3485, 1e-05
      %v3502 = vadd.f32 %v3486, 1e-05
      %v3503 = vadd.f32 %v3487, 1e-05
      %v3504 = vadd.f32 %v3488, 1e-05
      %v3505 = vadd.f32 %v3489, 1e-05
      %v3506 = vadd.f32 %v3490, 1e-05
      %v3507 = vrsqrt.pop %v3491
      %v3508 = vrsqrt.pop %v3492
      %v3509 = vrsqrt.pop %v3493
      %v3510 = vrsqrt.pop %v3494
      %v3511 = vrsqrt.pop %v3495
      %v3512 = vrsqrt.pop %v3496
      %v3513 = vrsqrt.pop %v3497
      %v3514 = vrsqrt.pop %v3498
      %v3515 = vrsqrt.pop %v3499
      %v3516 = vrsqrt.pop %v3500
      %v3517 = vrsqrt.pop %v3501
      %v3518 = vrsqrt.pop %v3502
      %v3519 = vrsqrt.pop %v3503
      %v3520 = vrsqrt.pop %v3504
      %v3521 = vrsqrt.pop %v3505
      %v3522 = vrsqrt.pop %v3506
      %v3523 = vmul.f32 %v3411, %v3507
      %v3524 = vmul.f32 %v3412, %v3508
      %v3525 = vmul.f32 %v3413, %v3509
      %v3526 = vmul.f32 %v3414, %v3510
      %v3527 = vmul.f32 %v3415, %v3511
      %v3528 = vmul.f32 %v3416, %v3512
      %v3529 = vmul.f32 %v3417, %v3513
      %v3530 = vmul.f32 %v3418, %v3514
      %v3531 = vmul.f32 %v3419, %v3515
      %v3532 = vmul.f32 %v3420, %v3516
      %v3533 = vmul.f32 %v3421, %v3517
      %v3534 = vmul.f32 %v3422, %v3518
      %v3535 = vmul.f32 %v3423, %v3519
      %v3536 = vmul.f32 %v3424, %v3520
      %v3537 = vmul.f32 %v3425, %v3521
      %v3538 = vmul.f32 %v3426, %v3522
      %v3540 = vlaneseq
      %v3541 = vshrl.u32 %v3540, 7
      %v3542 = vsub.s32 0, %v3541
      %v3543 = vrot.slane %v3360, %v3542
      %v3545 = vmul.f32 %v3523, %v3543
      %v3546 = vmul.f32 %v3524, %v3543
      %v3547 = vmul.f32 %v3525, %v3543
      %v3548 = vmul.f32 %v3526, %v3543
      %v3549 = vmul.f32 %v3527, %v3543
      %v3550 = vmul.f32 %v3528, %v3543
      %v3551 = vmul.f32 %v3529, %v3543
      %v3552 = vmul.f32 %v3530, %v3543
      %v3553 = vmul.f32 %v3531, %v3543
      %v3554 = vmul.f32 %v3532, %v3543
      %v3555 = vmul.f32 %v3533, %v3543
      %v3556 = vmul.f32 %v3534, %v3543
      %v3557 = vmul.f32 %v3535, %v3543
      %v3558 = vmul.f32 %v3536, %v3543
      %v3559 = vmul.f32 %v3537, %v3543
      %v3560 = vmul.f32 %v3538, %v3543
      %v3562 = vlaneseq
      %v3563 = vshrl.u32 %v3562, 7
      %v3564 = vsub.s32 0, %v3563
      %v3565 = vrot.slane %v3361, %v3564
      %v3567 = vadd.f32 %v3545, %v3565
      %v3568 = vadd.f32 %v3546, %v3565
      %v3569 = vadd.f32 %v3547, %v3565
      %v3570 = vadd.f32 %v3548, %v3565
      %v3571 = vadd.f32 %v3549, %v3565
      %v3572 = vadd.f32 %v3550, %v3565
      %v3573 = vadd.f32 %v3551, %v3565
      %v3574 = vadd.f32 %v3552, %v3565
      %v3575 = vadd.f32 %v3553, %v3565
      %v3576 = vadd.f32 %v3554, %v3565
      %v3577 = vadd.f32 %v3555, %v3565
      %v3578 = vadd.f32 %v3556, %v3565
      %v3579 = vadd.f32 %v3557, %v3565
      %v3580 = vadd.f32 %v3558, %v3565
      %v3581 = vadd.f32 %v3559, %v3565
      %v3582 = vadd.f32 %v3560, %v3565
      %v3583 = vpack.c.bf16 %v3568, %v3567
      %v3584 = vpack.c.bf16 %v3570, %v3569
      %v3585 = vpack.c.bf16 %v3572, %v3571
      %v3586 = vpack.c.bf16 %v3574, %v3573
      %v3587 = vpack.c.bf16 %v3576, %v3575
      %v3588 = vpack.c.bf16 %v3578, %v3577
      %v3589 = vpack.c.bf16 %v3580, %v3579
      %v3590 = vpack.c.bf16 %v3582, %v3581
      %v3591 = vld [vmem:[%s7] sm:$0xf]
      %v3592 = vld [vmem:[%s7 + $0x4] sm:$0xf]
      %v3593 = vld [vmem:[%s7 + $0x8] sm:$0xf]
      %v3594 = vld [vmem:[%s7 + $0xc] sm:$0xf]
      %v3595 = vld [vmem:[%s7 + $0x10] sm:$0xf]
      %v3596 = vld [vmem:[%s7 + $0x14] sm:$0xf]
      %v3597 = vld [vmem:[%s7 + $0x18] sm:$0xf]
      %v3598 = vld [vmem:[%s7 + $0x1c] sm:$0xf]
      %v3599 = vld [vmem:[%s7 + $0x20] sm:$0xf]
      %v3600 = vld [vmem:[%s7 + $0x24] sm:$0xf]
      %v3601 = vld [vmem:[%s7 + $0x28] sm:$0xf]
      %v3602 = vld [vmem:[%s7 + $0x2c] sm:$0xf]
      %v3603 = vld [vmem:[%s7 + $0x30] sm:$0xf]
      %v3604 = vld [vmem:[%s7 + $0x34] sm:$0xf]
      %v3605 = vld [vmem:[%s7 + $0x38] sm:$0xf]
      %v3606 = vld [vmem:[%s7 + $0x3c] sm:$0xf]
      %v3607 = vld [vmem:[%s8] sm:$0x1]
      %v3609 = vlaneseq
      %v3610 = vshrl.u32 %v3609, 7
      %v3611 = vsub.s32 0, %v3610
      %v3612 = vrot.slane %v3607, %v3611
      %v3630 = vunpack.c.l.b16 %v3591
      %v3631 = vunpack.c.l.b16 %v3592
      %v3632 = vunpack.c.l.b16 %v3593
      %v3633 = vunpack.c.l.b16 %v3594
      %v3634 = vunpack.c.l.b16 %v3595
      %v3635 = vunpack.c.l.b16 %v3596
      %v3636 = vunpack.c.l.b16 %v3597
      %v3637 = vunpack.c.l.b16 %v3598
      %v3638 = vunpack.c.l.b16 %v3599
      %v3639 = vunpack.c.l.b16 %v3600
      %v3640 = vunpack.c.l.b16 %v3601
      %v3641 = vunpack.c.l.b16 %v3602
      %v3642 = vunpack.c.l.b16 %v3603
      %v3643 = vunpack.c.l.b16 %v3604
      %v3644 = vunpack.c.l.b16 %v3605
      %v3645 = vunpack.c.l.b16 %v3606
      %v3646 = vpack.c.b16 %v3631, %v3630
      %v3647 = vpack.c.b16 %v3633, %v3632
      %v3648 = vpack.c.b16 %v3635, %v3634
      %v3649 = vpack.c.b16 %v3637, %v3636
      %v3650 = vpack.c.b16 %v3639, %v3638
      %v3651 = vpack.c.b16 %v3641, %v3640
      %v3652 = vpack.c.b16 %v3643, %v3642
      %v3653 = vpack.c.b16 %v3645, %v3644
      %3662 = vmatprep.subr.bf16.mxu0 0
      %3663 = vmatpush1.bf16.msra.mxu0 %v3646
      %3664 = vmatprep.subr.bf16.mxu0 0
      %3665 = vmatpush1.bf16.msra.mxu0 %v3647
      %3666 = vmatprep.subr.bf16.mxu0 0
      %3667 = vmatpush1.bf16.msra.mxu0 %v3648
      %3668 = vmatprep.subr.bf16.mxu0 0
      %3669 = vmatpush1.bf16.msra.mxu0 %v3649
      %3670 = vmatprep.subr.bf16.mxu0 0
      %3671 = vmatpush1.bf16.msra.mxu0 %v3650
      %3672 = vmatprep.subr.bf16.mxu0 0
      %3673 = vmatpush1.bf16.msra.mxu0 %v3651
      %3674 = vmatprep.subr.bf16.mxu0 0
      %3675 = vmatpush1.bf16.msra.mxu0 %v3652
      %3676 = vmatprep.subr.bf16.mxu0 0
      %3677 = vmatpush1.bf16.msra.mxu0 %v3653
      %3678 = vmatprep.subr.bf16.mxu0 0
      %3679 = vmatpush1.bf16.msra.mxu0 0
      %3680 = vmatprep.subr.bf16.mxu0 0
      %3681 = vmatpush1.bf16.msra.mxu0 0
      %3682 = vmatprep.subr.bf16.mxu0 0
      %3683 = vmatpush1.bf16.msra.mxu0 0
      %3684 = vmatprep.subr.bf16.mxu0 0
      %3685 = vmatpush1.bf16.msra.mxu0 0
      %3686 = vmatprep.subr.bf16.mxu0 0
      %3687 = vmatpush1.bf16.msra.mxu0 0
      %3688 = vmatprep.subr.bf16.mxu0 0
      %3689 = vmatpush1.bf16.msra.mxu0 0
      %3690 = vmatprep.subr.bf16.mxu0 0
      %3691 = vmatpush1.bf16.msra.mxu0 0
      %3692 = vmatprep.subr.bf16.mxu0 0
      %3693 = vmatpush1.bf16.msra.mxu0 0
      %3694 = vmatprep.mubr.bf16.mxu0 0
      %3695 = vmatmul.mubr.bf16.gmra.mrb[0].mxu0 %v3583
      %v3696 = vpop.f32.mrb[0].mxu0
      %v3697 = vadd.f32 %v3612, %v3696
      %v3698 = vpop.f32.mrb[0].mxu0
      %v3699 = vpop.f32.mrb[0].mxu0
      %v3700 = vadd.f32 %v3612, %v3699
      %v3701 = vpop.f32.mrb[0].mxu0
      %3702 = vmatprep.mubr.bf16.mxu0 0
      %3703 = vmatmul.mubr.bf16.gmra.mrb[0].mxu0 %v3584
      %v3704 = vpop.f32.mrb[0].mxu0
      %v3705 = vadd.f32 %v3612, %v3704
      %v3706 = vpop.f32.mrb[0].mxu0
      %v3707 = vpop.f32.mrb[0].mxu0
      %v3708 = vadd.f32 %v3612, %v3707
      %v3709 = vpop.f32.mrb[0].mxu0
      %3710 = vmatprep.mubr.bf16.mxu0 0
      %3711 = vmatmul.mubr.bf16.gmra.mrb[0].mxu0 %v3585
      %v3712 = vpop.f32.mrb[0].mxu0
      %v3713 = vadd.f32 %v3612, %v3712
      %v3714 = vpop.f32.mrb[0].mxu0
      %v3715 = vpop.f32.mrb[0].mxu0
      %v3716 = vadd.f32 %v3612, %v3715
      %v3717 = vpop.f32.mrb[0].mxu0
      %3718 = vmatprep.mubr.bf16.mxu0 0
      %3719 = vmatmul.mubr.bf16.gmra.mrb[0].mxu0 %v3586
      %v3720 = vpop.f32.mrb[0].mxu0
      %v3721 = vadd.f32 %v3612, %v3720
      %v3722 = vpop.f32.mrb[0].mxu0
      %v3723 = vpop.f32.mrb[0].mxu0
      %v3724 = vadd.f32 %v3612, %v3723
      %v3725 = vpop.f32.mrb[0].mxu0
      %3726 = vmatprep.mubr.bf16.mxu0 0
      %3727 = vmatmul.mubr.bf16.gmra.mrb[0].mxu0 %v3587
      %v3728 = vpop.f32.mrb[0].mxu0
      %v3729 = vadd.f32 %v3612, %v3728
      %v3730 = vpop.f32.mrb[0].mxu0
      %v3731 = vpop.f32.mrb[0].mxu0
      %v3732 = vadd.f32 %v3612, %v3731
      %v3733 = vpop.f32.mrb[0].mxu0
      %3734 = vmatprep.mubr.bf16.mxu0 0
      %3735 = vmatmul.mubr.bf16.gmra.mrb[0].mxu0 %v3588
      %v3736 = vpop.f32.mrb[0].mxu0
      %v3737 = vadd.f32 %v3612, %v3736
      %v3738 = vpop.f32.mrb[0].mxu0
      %v3739 = vpop.f32.mrb[0].mxu0
      %v3740 = vadd.f32 %v3612, %v3739
      %v3741 = vpop.f32.mrb[0].mxu0
      %3742 = vmatprep.mubr.bf16.mxu0 0
      %3743 = vmatmul.mubr.bf16.gmra.mrb[0].mxu0 %v3589
      %v3744 = vpop.f32.mrb[0].mxu0
      %v3745 = vadd.f32 %v3612, %v3744
      %v3746 = vpop.f32.mrb[0].mxu0
      %v3747 = vpop.f32.mrb[0].mxu0
      %v3748 = vadd.f32 %v3612, %v3747
      %v3749 = vpop.f32.mrb[0].mxu0
      %3750 = vmatprep.mubr.bf16.mxu0 0
      %3751 = vmatmul.mubr.bf16.gmra.mrb[0].mxu0 %v3590
      %v3752 = vpop.f32.mrb[0].mxu0
      %v3753 = vadd.f32 %v3612, %v3752
      %v3754 = vpop.f32.mrb[0].mxu0
      %v3755 = vpop.f32.mrb[0].mxu0
      %v3756 = vadd.f32 %v3612, %v3755
      %v3757 = vpop.f32.mrb[0].mxu0
      %3758 = vdwg.mxu0
      %v3759 = vmul.f32 %v3697, 0.5
      %v3760 = vmul.f32 %v3700, 0.5
      %v3761 = vmul.f32 %v3705, 0.5
      %v3762 = vmul.f32 %v3708, 0.5
      %v3763 = vmul.f32 %v3713, 0.5
      %v3764 = vmul.f32 %v3716, 0.5
      %v3765 = vmul.f32 %v3721, 0.5
      %v3766 = vmul.f32 %v3724, 0.5
      %v3767 = vmul.f32 %v3729, 0.5
      %v3768 = vmul.f32 %v3732, 0.5
      %v3769 = vmul.f32 %v3737, 0.5
      %v3770 = vmul.f32 %v3740, 0.5
      %v3771 = vmul.f32 %v3745, 0.5
      %v3772 = vmul.f32 %v3748, 0.5
      %v3773 = vmul.f32 %v3753, 0.5
      %v3774 = vmul.f32 %v3756, 0.5
      %v3775 = vmul.f32 %v3697, 0.044715
      %v3776 = vmul.f32 %v3700, 0.044715
      %v3777 = vmul.f32 %v3705, 0.044715
      %v3778 = vmul.f32 %v3708, 0.044715
      %v3779 = vmul.f32 %v3713, 0.044715
      %v3780 = vmul.f32 %v3716, 0.044715
      %v3781 = vmul.f32 %v3721, 0.044715
      %v3782 = vmul.f32 %v3724, 0.044715
      %v3783 = vmul.f32 %v3729, 0.044715
      %v3784 = vmul.f32 %v3732, 0.044715
      %v3785 = vmul.f32 %v3737, 0.044715
      %v3786 = vmul.f32 %v3740, 0.044715
      %v3787 = vmul.f32 %v3745, 0.044715
      %v3788 = vmul.f32 %v3748, 0.044715
      %v3789 = vmul.f32 %v3753, 0.044715
      %v3790 = vmul.f32 %v3756, 0.044715
      %v3791 = vmul.f32 %v3775, %v3697
      %v3792 = vmul.f32 %v3776, %v3700
      %v3793 = vmul.f32 %v3777, %v3705
      %v3794 = vmul.f32 %v3778, %v3708
      %v3795 = vmul.f32 %v3779, %v3713
      %v3796 = vmul.f32 %v3780, %v3716
      %v3797 = vmul.f32 %v3781, %v3721
      %v3798 = vmul.f32 %v3782, %v3724
      %v3799 = vmul.f32 %v3783, %v3729
      %v3800 = vmul.f32 %v3784, %v3732
      %v3801 = vmul.f32 %v3785, %v3737
      %v3802 = vmul.f32 %v3786, %v3740
      %v3803 = vmul.f32 %v3787, %v3745
      %v3804 = vmul.f32 %v3788, %v3748
      %v3805 = vmul.f32 %v3789, %v3753
      %v3806 = vmul.f32 %v3790, %v3756
      %v3807 = vmul.f32 %v3791, %v3697
      %v3808 = vmul.f32 %v3792, %v3700
      %v3809 = vmul.f32 %v3793, %v3705
      %v3810 = vmul.f32 %v3794, %v3708
      %v3811 = vmul.f32 %v3795, %v3713
      %v3812 = vmul.f32 %v3796, %v3716
      %v3813 = vmul.f32 %v3797, %v3721
      %v3814 = vmul.f32 %v3798, %v3724
      %v3815 = vmul.f32 %v3799, %v3729
      %v3816 = vmul.f32 %v3800, %v3732
      %v3817 = vmul.f32 %v3801, %v3737
      %v3818 = vmul.f32 %v3802, %v3740
      %v3819 = vmul.f32 %v3803, %v3745
      %v3820 = vmul.f32 %v3804, %v3748
      %v3821 = vmul.f32 %v3805, %v3753
      %v3822 = vmul.f32 %v3806, %v3756
      %v3823 = vadd.f32 %v3697, %v3807
      %v3824 = vadd.f32 %v3700, %v3808
      %v3825 = vadd.f32 %v3705, %v3809
      %v3826 = vadd.f32 %v3708, %v3810
      %v3827 = vadd.f32 %v3713, %v3811
      %v3828 = vadd.f32 %v3716, %v3812
      %v3829 = vadd.f32 %v3721, %v3813
      %v3830 = vadd.f32 %v3724, %v3814
      %v3831 = vadd.f32 %v3729, %v3815
      %v3832 = vadd.f32 %v3732, %v3816
      %v3833 = vadd.f32 %v3737, %v3817
      %v3834 = vadd.f32 %v3740, %v3818
      %v3835 = vadd.f32 %v3745, %v3819
      %v3836 = vadd.f32 %v3748, %v3820
      %v3837 = vadd.f32 %v3753, %v3821
      %v3838 = vadd.f32 %v3756, %v3822
      %v3839 = vmul.f32 %v3823, 0.7978846
      %v3840 = vmul.f32 %v3824, 0.7978846
      %v3841 = vmul.f32 %v3825, 0.7978846
      %v3842 = vmul.f32 %v3826, 0.7978846
      %v3843 = vmul.f32 %v3827, 0.7978846
      %v3844 = vmul.f32 %v3828, 0.7978846
      %v3845 = vmul.f32 %v3829, 0.7978846
      %v3846 = vmul.f32 %v3830, 0.7978846
      %v3847 = vmul.f32 %v3831, 0.7978846
      %v3848 = vmul.f32 %v3832, 0.7978846
      %v3849 = vmul.f32 %v3833, 0.7978846
      %v3850 = vmul.f32 %v3834, 0.7978846
      %v3851 = vmul.f32 %v3835, 0.7978846
      %v3852 = vmul.f32 %v3836, 0.7978846
      %v3853 = vmul.f32 %v3837, 0.7978846
      %v3854 = vmul.f32 %v3838, 0.7978846
      %v3855 = vtanh.pop %v3839
      %v3856 = vtanh.pop %v3840
      %v3857 = vtanh.pop %v3841
      %v3858 = vtanh.pop %v3842
      %v3859 = vtanh.pop %v3843
      %v3860 = vtanh.pop %v3844
      %v3861 = vtanh.pop %v3845
      %v3862 = vtanh.pop %v3846
      %v3863 = vtanh.pop %v3847
      %v3864 = vtanh.pop %v3848
      %v3865 = vtanh.pop %v3849
      %v3866 = vtanh.pop %v3850
      %v3867 = vtanh.pop %v3851
      %v3868 = vtanh.pop %v3852
      %v3869 = vtanh.pop %v3853
      %v3870 = vtanh.pop %v3854
      %v3871 = vadd.f32 %v3855, 1.0
      %v3872 = vadd.f32 %v3856, 1.0
      %v3873 = vadd.f32 %v3857, 1.0
      %v3874 = vadd.f32 %v3858, 1.0
      %v3875 = vadd.f32 %v3859, 1.0
      %v3876 = vadd.f32 %v3860, 1.0
      %v3877 = vadd.f32 %v3861, 1.0
      %v3878 = vadd.f32 %v3862, 1.0
      %v3879 = vadd.f32 %v3863, 1.0
      %v3880 = vadd.f32 %v3864, 1.0
      %v3881 = vadd.f32 %v3865, 1.0
      %v3882 = vadd.f32 %v3866, 1.0
      %v3883 = vadd.f32 %v3867, 1.0
      %v3884 = vadd.f32 %v3868, 1.0
      %v3885 = vadd.f32 %v3869, 1.0
      %v3886 = vadd.f32 %v3870, 1.0
      %v3887 = vmul.f32 %v3759, %v3871
      %v3888 = vmul.f32 %v3760, %v3872
      %v3889 = vmul.f32 %v3761, %v3873
      %v3890 = vmul.f32 %v3762, %v3874
      %v3891 = vmul.f32 %v3763, %v3875
      %v3892 = vmul.f32 %v3764, %v3876
      %v3893 = vmul.f32 %v3765, %v3877
      %v3894 = vmul.f32 %v3766, %v3878
      %v3895 = vmul.f32 %v3767, %v3879
      %v3896 = vmul.f32 %v3768, %v3880
      %v3897 = vmul.f32 %v3769, %v3881
      %v3898 = vmul.f32 %v3770, %v3882
      %v3899 = vmul.f32 %v3771, %v3883
      %v3900 = vmul.f32 %v3772, %v3884
      %v3901 = vmul.f32 %v3773, %v3885
      %v3902 = vmul.f32 %v3774, %v3886
      %v3903 = vpack.c.bf16 %v3888, %v3887
      %v3904 = vpack.c.bf16 %v3890, %v3889
      %v3905 = vpack.c.bf16 %v3892, %v3891
      %v3906 = vpack.c.bf16 %v3894, %v3893
      %v3907 = vpack.c.bf16 %v3896, %v3895
      %v3908 = vpack.c.bf16 %v3898, %v3897
      %v3909 = vpack.c.bf16 %v3900, %v3899
      %v3910 = vpack.c.bf16 %v3902, %v3901
      %v3911 = vld [vmem:[%s9] sm:$0xf]
      %v3912 = vld [vmem:[%s9 + $0x4] sm:$0xf]
      %v3913 = vld [vmem:[%s9 + $0x8] sm:$0xf]
      %v3914 = vld [vmem:[%s9 + $0xc] sm:$0xf]
      %v3915 = vld [vmem:[%s9 + $0x10] sm:$0xf]
      %v3916 = vld [vmem:[%s9 + $0x14] sm:$0xf]
      %v3917 = vld [vmem:[%s9 + $0x18] sm:$0xf]
      %v3918 = vld [vmem:[%s9 + $0x1c] sm:$0xf]
      %v3919 = vld [vmem:[%s9 + $0x20] sm:$0xf]
      %v3920 = vld [vmem:[%s9 + $0x24] sm:$0xf]
      %v3921 = vld [vmem:[%s9 + $0x28] sm:$0xf]
      %v3922 = vld [vmem:[%s9 + $0x2c] sm:$0xf]
      %v3923 = vld [vmem:[%s9 + $0x30] sm:$0xf]
      %v3924 = vld [vmem:[%s9 + $0x34] sm:$0xf]
      %v3925 = vld [vmem:[%s9 + $0x38] sm:$0xf]
      %v3926 = vld [vmem:[%s9 + $0x3c] sm:$0xf]
      %v3927 = vld [vmem:[%s10] sm:$0x1]
      %v3929 = vlaneseq
      %v3930 = vshrl.u32 %v3929, 7
      %v3931 = vsub.s32 0, %v3930
      %v3932 = vrot.slane %v3927, %v3931
      %v3950 = vunpack.c.l.b16 %v3911
      %v3951 = vunpack.c.l.b16 %v3912
      %v3952 = vunpack.c.l.b16 %v3913
      %v3953 = vunpack.c.l.b16 %v3914
      %v3954 = vunpack.c.l.b16 %v3915
      %v3955 = vunpack.c.l.b16 %v3916
      %v3956 = vunpack.c.l.b16 %v3917
      %v3957 = vunpack.c.l.b16 %v3918
      %v3958 = vunpack.c.l.b16 %v3919
      %v3959 = vunpack.c.l.b16 %v3920
      %v3960 = vunpack.c.l.b16 %v3921
      %v3961 = vunpack.c.l.b16 %v3922
      %v3962 = vunpack.c.l.b16 %v3923
      %v3963 = vunpack.c.l.b16 %v3924
      %v3964 = vunpack.c.l.b16 %v3925
      %v3965 = vunpack.c.l.b16 %v3926
      %v3966 = vpack.c.b16 %v3951, %v3950
      %v3967 = vpack.c.b16 %v3953, %v3952
      %v3968 = vpack.c.b16 %v3955, %v3954
      %v3969 = vpack.c.b16 %v3957, %v3956
      %v3970 = vpack.c.b16 %v3959, %v3958
      %v3971 = vpack.c.b16 %v3961, %v3960
      %v3972 = vpack.c.b16 %v3963, %v3962
      %v3973 = vpack.c.b16 %v3965, %v3964
      %3982 = vmatprep.subr.bf16.mxu0 0
      %3983 = vmatpush1.bf16.msra.mxu0 %v3966
      %3984 = vmatprep.subr.bf16.mxu0 0
      %3985 = vmatpush1.bf16.msra.mxu0 %v3967
      %3986 = vmatprep.subr.bf16.mxu0 0
      %3987 = vmatpush1.bf16.msra.mxu0 %v3968
      %3988 = vmatprep.subr.bf16.mxu0 0
      %3989 = vmatpush1.bf16.msra.mxu0 %v3969
      %3990 = vmatprep.subr.bf16.mxu0 0
      %3991 = vmatpush1.bf16.msra.mxu0 %v3970
      %3992 = vmatprep.subr.bf16.mxu0 0
      %3993 = vmatpush1.bf16.msra.mxu0 %v3971
      %3994 = vmatprep.subr.bf16.mxu0 0
      %3995 = vmatpush1.bf16.msra.mxu0 %v3972
      %3996 = vmatprep.subr.bf16.mxu0 0
      %3997 = vmatpush1.bf16.msra.mxu0 %v3973
      %3998 = vmatprep.subr.bf16.mxu0 0
      %3999 = vmatpush1.bf16.msra.mxu0 0
      %4000 = vmatprep.subr.bf16.mxu0 0
      %4001 = vmatpush1.bf16.msra.mxu0 0
      %4002 = vmatprep.subr.bf16.mxu0 0
      %4003 = vmatpush1.bf16.msra.mxu0 0
      %4004 = vmatprep.subr.bf16.mxu0 0
      %4005 = vmatpush1.bf16.msra.mxu0 0
      %4006 = vmatprep.subr.bf16.mxu0 0
      %4007 = vmatpush1.bf16.msra.mxu0 0
      %4008 = vmatprep.subr.bf16.mxu0 0
      %4009 = vmatpush1.bf16.msra.mxu0 0
      %4010 = vmatprep.subr.bf16.mxu0 0
      %4011 = vmatpush1.bf16.msra.mxu0 0
      %4012 = vmatprep.subr.bf16.mxu0 0
      %4013 = vmatpush1.bf16.msra.mxu0 0
      %4014 = vmatprep.mubr.bf16.mxu0 0
      %4015 = vmatmul.mubr.bf16.gmra.mrb[0].mxu0 %v3903
      %v4016 = vpop.f32.mrb[0].mxu0
      %v4017 = vadd.f32 %v3932, %v4016
      %v4018 = vpop.f32.mrb[0].mxu0
      %v4019 = vpop.f32.mrb[0].mxu0
      %v4020 = vadd.f32 %v3932, %v4019
      %v4021 = vpop.f32.mrb[0].mxu0
      %4022 = vmatprep.mubr.bf16.mxu0 0
      %4023 = vmatmul.mubr.bf16.gmra.mrb[0].mxu0 %v3904
      %v4024 = vpop.f32.mrb[0].mxu0
      %v4025 = vadd.f32 %v3932, %v4024
      %v4026 = vpop.f32.mrb[0].mxu0
      %v4027 = vpop.f32.mrb[0].mxu0
      %v4028 = vadd.f32 %v3932, %v4027
      %v4029 = vpop.f32.mrb[0].mxu0
      %4030 = vmatprep.mubr.bf16.mxu0 0
      %4031 = vmatmul.mubr.bf16.gmra.mrb[0].mxu0 %v3905
      %v4032 = vpop.f32.mrb[0].mxu0
      %v4033 = vadd.f32 %v3932, %v4032
      %v4034 = vpop.f32.mrb[0].mxu0
      %v4035 = vpop.f32.mrb[0].mxu0
      %v4036 = vadd.f32 %v3932, %v4035
      %v4037 = vpop.f32.mrb[0].mxu0
      %4038 = vmatprep.mubr.bf16.mxu0 0
      %4039 = vmatmul.mubr.bf16.gmra.mrb[0].mxu0 %v3906
      %v4040 = vpop.f32.mrb[0].mxu0
      %v4041 = vadd.f32 %v3932, %v4040
      %v4042 = vpop.f32.mrb[0].mxu0
      %v4043 = vpop.f32.mrb[0].mxu0
      %v4044 = vadd.f32 %v3932, %v4043
      %v4045 = vpop.f32.mrb[0].mxu0
      %4046 = vmatprep.mubr.bf16.mxu0 0
      %4047 = vmatmul.mubr.bf16.gmra.mrb[0].mxu0 %v3907
      %v4048 = vpop.f32.mrb[0].mxu0
      %v4049 = vadd.f32 %v3932, %v4048
      %v4050 = vpop.f32.mrb[0].mxu0
      %v4051 = vpop.f32.mrb[0].mxu0
      %v4052 = vadd.f32 %v3932, %v4051
      %v4053 = vpop.f32.mrb[0].mxu0
      %4054 = vmatprep.mubr.bf16.mxu0 0
      %4055 = vmatmul.mubr.bf16.gmra.mrb[0].mxu0 %v3908
      %v4056 = vpop.f32.mrb[0].mxu0
      %v4057 = vadd.f32 %v3932, %v4056
      %v4058 = vpop.f32.mrb[0].mxu0
      %v4059 = vpop.f32.mrb[0].mxu0
      %v4060 = vadd.f32 %v3932, %v4059
      %v4061 = vpop.f32.mrb[0].mxu0
      %4062 = vmatprep.mubr.bf16.mxu0 0
      %4063 = vmatmul.mubr.bf16.gmra.mrb[0].mxu0 %v3909
      %v4064 = vpop.f32.mrb[0].mxu0
      %v4065 = vadd.f32 %v3932, %v4064
      %v4066 = vpop.f32.mrb[0].mxu0
      %v4067 = vpop.f32.mrb[0].mxu0
      %v4068 = vadd.f32 %v3932, %v4067
      %v4069 = vpop.f32.mrb[0].mxu0
      %4070 = vmatprep.mubr.bf16.mxu0 0
      %4071 = vmatmul.mubr.bf16.gmra.mrb[0].mxu0 %v3910
      %v4072 = vpop.f32.mrb[0].mxu0
      %v4073 = vadd.f32 %v3932, %v4072
      %v4074 = vpop.f32.mrb[0].mxu0
      %v4075 = vpop.f32.mrb[0].mxu0
      %v4076 = vadd.f32 %v3932, %v4075
      %v4077 = vpop.f32.mrb[0].mxu0
      %4078 = vdwg.mxu0
      %v4079 = vadd.f32 %v3567, %v4017
      %v4080 = vadd.f32 %v3568, %v4020
      %v4081 = vadd.f32 %v3569, %v4025
      %v4082 = vadd.f32 %v3570, %v4028
      %v4083 = vadd.f32 %v3571, %v4033
      %v4084 = vadd.f32 %v3572, %v4036
      %v4085 = vadd.f32 %v3573, %v4041
      %v4086 = vadd.f32 %v3574, %v4044
      %v4087 = vadd.f32 %v3575, %v4049
      %v4088 = vadd.f32 %v3576, %v4052
      %v4089 = vadd.f32 %v3577, %v4057
      %v4090 = vadd.f32 %v3578, %v4060
      %v4091 = vadd.f32 %v3579, %v4065
      %v4092 = vadd.f32 %v3580, %v4068
      %v4093 = vadd.f32 %v3581, %v4073
      %v4094 = vadd.f32 %v3582, %v4076
      %v4095 = vld [vmem:[%s11] sm:$0x1]
      %v4096 = vld [vmem:[%s12] sm:$0x1]
      %4097 = vadd.xlane.f32.xlu0 %v4079
      %v4098 = vpop.xlane.xlu0 %4097
      %4099 = vadd.xlane.f32.xlu0 %v4080
      %v4100 = vpop.xlane.xlu0 %4099
      %4101 = vadd.xlane.f32.xlu0 %v4081
      %v4102 = vpop.xlane.xlu0 %4101
      %4103 = vadd.xlane.f32.xlu0 %v4082
      %v4104 = vpop.xlane.xlu0 %4103
      %4105 = vadd.xlane.f32.xlu0 %v4083
      %v4106 = vpop.xlane.xlu0 %4105
      %4107 = vadd.xlane.f32.xlu0 %v4084
      %v4108 = vpop.xlane.xlu0 %4107
      %4109 = vadd.xlane.f32.xlu0 %v4085
      %v4110 = vpop.xlane.xlu0 %4109
      %4111 = vadd.xlane.f32.xlu0 %v4086
      %v4112 = vpop.xlane.xlu0 %4111
      %4113 = vadd.xlane.f32.xlu0 %v4087
      %v4114 = vpop.xlane.xlu0 %4113
      %4115 = vadd.xlane.f32.xlu0 %v4088
      %v4116 = vpop.xlane.xlu0 %4115
      %4117 = vadd.xlane.f32.xlu0 %v4089
      %v4118 = vpop.xlane.xlu0 %4117
      %4119 = vadd.xlane.f32.xlu0 %v4090
      %v4120 = vpop.xlane.xlu0 %4119
      %4121 = vadd.xlane.f32.xlu0 %v4091
      %v4122 = vpop.xlane.xlu0 %4121
      %4123 = vadd.xlane.f32.xlu0 %v4092
      %v4124 = vpop.xlane.xlu0 %4123
      %4125 = vadd.xlane.f32.xlu0 %v4093
      %v4126 = vpop.xlane.xlu0 %4125
      %4127 = vadd.xlane.f32.xlu0 %v4094
      %v4128 = vpop.xlane.xlu0 %4127
      %v4129 = vmul.f32 %v4098, %v3394
      %v4130 = vmul.f32 %v4100, %v3394
      %v4131 = vmul.f32 %v4102, %v3394
      %v4132 = vmul.f32 %v4104, %v3394
      %v4133 = vmul.f32 %v4106, %v3394
      %v4134 = vmul.f32 %v4108, %v3394
      %v4135 = vmul.f32 %v4110, %v3394
      %v4136 = vmul.f32 %v4112, %v3394
      %v4137 = vmul.f32 %v4114, %v3394
      %v4138 = vmul.f32 %v4116, %v3394
      %v4139 = vmul.f32 %v4118, %v3394
      %v4140 = vmul.f32 %v4120, %v3394
      %v4141 = vmul.f32 %v4122, %v3394
      %v4142 = vmul.f32 %v4124, %v3394
      %v4143 = vmul.f32 %v4126, %v3394
      %v4144 = vmul.f32 %v4128, %v3394
      %v4145 = vsub.f32 %v4079, %v4129
      %v4146 = vsub.f32 %v4080, %v4130
      %v4147 = vsub.f32 %v4081, %v4131
      %v4148 = vsub.f32 %v4082, %v4132
      %v4149 = vsub.f32 %v4083, %v4133
      %v4150 = vsub.f32 %v4084, %v4134
      %v4151 = vsub.f32 %v4085, %v4135
      %v4152 = vsub.f32 %v4086, %v4136
      %v4153 = vsub.f32 %v4087, %v4137
      %v4154 = vsub.f32 %v4088, %v4138
      %v4155 = vsub.f32 %v4089, %v4139
      %v4156 = vsub.f32 %v4090, %v4140
      %v4157 = vsub.f32 %v4091, %v4141
      %v4158 = vsub.f32 %v4092, %v4142
      %v4159 = vsub.f32 %v4093, %v4143
      %v4160 = vsub.f32 %v4094, %v4144
      %v4161 = vmul.f32 %v4145, %v4145
      %v4162 = vmul.f32 %v4146, %v4146
      %v4163 = vmul.f32 %v4147, %v4147
      %v4164 = vmul.f32 %v4148, %v4148
      %v4165 = vmul.f32 %v4149, %v4149
      %v4166 = vmul.f32 %v4150, %v4150
      %v4167 = vmul.f32 %v4151, %v4151
      %v4168 = vmul.f32 %v4152, %v4152
      %v4169 = vmul.f32 %v4153, %v4153
      %v4170 = vmul.f32 %v4154, %v4154
      %v4171 = vmul.f32 %v4155, %v4155
      %v4172 = vmul.f32 %v4156, %v4156
      %v4173 = vmul.f32 %v4157, %v4157
      %v4174 = vmul.f32 %v4158, %v4158
      %v4175 = vmul.f32 %v4159, %v4159
      %v4176 = vmul.f32 %v4160, %v4160
      %4177 = vadd.xlane.f32.xlu0 %v4161
      %v4178 = vpop.xlane.xlu0 %4177
      %4179 = vadd.xlane.f32.xlu0 %v4162
      %v4180 = vpop.xlane.xlu0 %4179
      %4181 = vadd.xlane.f32.xlu0 %v4163
      %v4182 = vpop.xlane.xlu0 %4181
      %4183 = vadd.xlane.f32.xlu0 %v4164
      %v4184 = vpop.xlane.xlu0 %4183
      %4185 = vadd.xlane.f32.xlu0 %v4165
      %v4186 = vpop.xlane.xlu0 %4185
      %4187 = vadd.xlane.f32.xlu0 %v4166
      %v4188 = vpop.xlane.xlu0 %4187
      %4189 = vadd.xlane.f32.xlu0 %v4167
      %v4190 = vpop.xlane.xlu0 %4189
      %4191 = vadd.xlane.f32.xlu0 %v4168
      %v4192 = vpop.xlane.xlu0 %4191
      %4193 = vadd.xlane.f32.xlu0 %v4169
      %v4194 = vpop.xlane.xlu0 %4193
      %4195 = vadd.xlane.f32.xlu0 %v4170
      %v4196 = vpop.xlane.xlu0 %4195
      %4197 = vadd.xlane.f32.xlu0 %v4171
      %v4198 = vpop.xlane.xlu0 %4197
      %4199 = vadd.xlane.f32.xlu0 %v4172
      %v4200 = vpop.xlane.xlu0 %4199
      %4201 = vadd.xlane.f32.xlu0 %v4173
      %v4202 = vpop.xlane.xlu0 %4201
      %4203 = vadd.xlane.f32.xlu0 %v4174
      %v4204 = vpop.xlane.xlu0 %4203
      %4205 = vadd.xlane.f32.xlu0 %v4175
      %v4206 = vpop.xlane.xlu0 %4205
      %4207 = vadd.xlane.f32.xlu0 %v4176
      %v4208 = vpop.xlane.xlu0 %4207
      %v4209 = vmul.f32 %v4178, %v3394
      %v4210 = vmul.f32 %v4180, %v3394
      %v4211 = vmul.f32 %v4182, %v3394
      %v4212 = vmul.f32 %v4184, %v3394
      %v4213 = vmul.f32 %v4186, %v3394
      %v4214 = vmul.f32 %v4188, %v3394
      %v4215 = vmul.f32 %v4190, %v3394
      %v4216 = vmul.f32 %v4192, %v3394
      %v4217 = vmul.f32 %v4194, %v3394
      %v4218 = vmul.f32 %v4196, %v3394
      %v4219 = vmul.f32 %v4198, %v3394
      %v4220 = vmul.f32 %v4200, %v3394
      %v4221 = vmul.f32 %v4202, %v3394
      %v4222 = vmul.f32 %v4204, %v3394
      %v4223 = vmul.f32 %v4206, %v3394
      %v4224 = vmul.f32 %v4208, %v3394
      %v4225 = vadd.f32 %v4209, 1e-05
      %v4226 = vadd.f32 %v4210, 1e-05
      %v4227 = vadd.f32 %v4211, 1e-05
      %v4228 = vadd.f32 %v4212, 1e-05
      %v4229 = vadd.f32 %v4213, 1e-05
      %v4230 = vadd.f32 %v4214, 1e-05
      %v4231 = vadd.f32 %v4215, 1e-05
      %v4232 = vadd.f32 %v4216, 1e-05
      %v4233 = vadd.f32 %v4217, 1e-05
      %v4234 = vadd.f32 %v4218, 1e-05
      %v4235 = vadd.f32 %v4219, 1e-05
      %v4236 = vadd.f32 %v4220, 1e-05
      %v4237 = vadd.f32 %v4221, 1e-05
      %v4238 = vadd.f32 %v4222, 1e-05
      %v4239 = vadd.f32 %v4223, 1e-05
      %v4240 = vadd.f32 %v4224, 1e-05
      %v4241 = vrsqrt.pop %v4225
      %v4242 = vrsqrt.pop %v4226
      %v4243 = vrsqrt.pop %v4227
      %v4244 = vrsqrt.pop %v4228
      %v4245 = vrsqrt.pop %v4229
      %v4246 = vrsqrt.pop %v4230
      %v4247 = vrsqrt.pop %v4231
      %v4248 = vrsqrt.pop %v4232
      %v4249 = vrsqrt.pop %v4233
      %v4250 = vrsqrt.pop %v4234
      %v4251 = vrsqrt.pop %v4235
      %v4252 = vrsqrt.pop %v4236
      %v4253 = vrsqrt.pop %v4237
      %v4254 = vrsqrt.pop %v4238
      %v4255 = vrsqrt.pop %v4239
      %v4256 = vrsqrt.pop %v4240
      %v4257 = vmul.f32 %v4145, %v4241
      %v4258 = vmul.f32 %v4146, %v4242
      %v4259 = vmul.f32 %v4147, %v4243
      %v4260 = vmul.f32 %v4148, %v4244
      %v4261 = vmul.f32 %v4149, %v4245
      %v4262 = vmul.f32 %v4150, %v4246
      %v4263 = vmul.f32 %v4151, %v4247
      %v4264 = vmul.f32 %v4152, %v4248
      %v4265 = vmul.f32 %v4153, %v4249
      %v4266 = vmul.f32 %v4154, %v4250
      %v4267 = vmul.f32 %v4155, %v4251
      %v4268 = vmul.f32 %v4156, %v4252
      %v4269 = vmul.f32 %v4157, %v4253
      %v4270 = vmul.f32 %v4158, %v4254
      %v4271 = vmul.f32 %v4159, %v4255
      %v4272 = vmul.f32 %v4160, %v4256
      %v4274 = vlaneseq
      %v4275 = vshrl.u32 %v4274, 7
      %v4276 = vsub.s32 0, %v4275
      %v4277 = vrot.slane %v4095, %v4276
      %v4279 = vmul.f32 %v4257, %v4277
      %v4280 = vmul.f32 %v4258, %v4277
      %v4281 = vmul.f32 %v4259, %v4277
      %v4282 = vmul.f32 %v4260, %v4277
      %v4283 = vmul.f32 %v4261, %v4277
      %v4284 = vmul.f32 %v4262, %v4277
      %v4285 = vmul.f32 %v4263, %v4277
      %v4286 = vmul.f32 %v4264, %v4277
      %v4287 = vmul.f32 %v4265, %v4277
      %v4288 = vmul.f32 %v4266, %v4277
      %v4289 = vmul.f32 %v4267, %v4277
      %v4290 = vmul.f32 %v4268, %v4277
      %v4291 = vmul.f32 %v4269, %v4277
      %v4292 = vmul.f32 %v4270, %v4277
      %v4293 = vmul.f32 %v4271, %v4277
      %v4294 = vmul.f32 %v4272, %v4277
      %v4296 = vlaneseq
      %v4297 = vshrl.u32 %v4296, 7
      %v4298 = vsub.s32 0, %v4297
      %v4299 = vrot.slane %v4096, %v4298
      %v4301 = vadd.f32 %v4279, %v4299
      %v4302 = vadd.f32 %v4280, %v4299
      %v4303 = vadd.f32 %v4281, %v4299
      %v4304 = vadd.f32 %v4282, %v4299
      %v4305 = vadd.f32 %v4283, %v4299
      %v4306 = vadd.f32 %v4284, %v4299
      %v4307 = vadd.f32 %v4285, %v4299
      %v4308 = vadd.f32 %v4286, %v4299
      %v4309 = vadd.f32 %v4287, %v4299
      %v4310 = vadd.f32 %v4288, %v4299
      %v4311 = vadd.f32 %v4289, %v4299
      %v4312 = vadd.f32 %v4290, %v4299
      %v4313 = vadd.f32 %v4291, %v4299
      %v4314 = vadd.f32 %v4292, %v4299
      %v4315 = vadd.f32 %v4293, %v4299
      %v4316 = vadd.f32 %v4294, %v4299
      %v4317 = vpack.c.bf16 %v4302, %v4301
      %v4318 = vpack.c.bf16 %v4304, %v4303
      %v4319 = vpack.c.bf16 %v4306, %v4305
      %v4320 = vpack.c.bf16 %v4308, %v4307
      %v4321 = vpack.c.bf16 %v4310, %v4309
      %v4322 = vpack.c.bf16 %v4312, %v4311
      %v4323 = vpack.c.bf16 %v4314, %v4313
      %v4324 = vpack.c.bf16 %v4316, %v4315
      %v4333 = vunpack.c.l.b16 %v4317
      %v4334 = vunpack.c.h.b16 %v4317
      %v4335 = vunpack.c.l.b16 %v4318
      %v4336 = vunpack.c.h.b16 %v4318
      %v4337 = vunpack.c.l.b16 %v4319
      %v4338 = vunpack.c.h.b16 %v4319
      %v4339 = vunpack.c.l.b16 %v4320
      %v4340 = vunpack.c.h.b16 %v4320
      %v4341 = vunpack.c.l.b16 %v4321
      %v4342 = vunpack.c.h.b16 %v4321
      %v4343 = vunpack.c.l.b16 %v4322
      %v4344 = vunpack.c.h.b16 %v4322
      %v4345 = vunpack.c.l.b16 %v4323
      %v4346 = vunpack.c.h.b16 %v4323
      %v4347 = vunpack.c.l.b16 %v4324
      %v4348 = vunpack.c.h.b16 %v4324
      %v4349 = vpack.c.b16 %v4333, %v4333
      %v4350 = vpack.c.b16 %v4334, %v4334
      %v4351 = vpack.c.b16 %v4335, %v4335
      %v4352 = vpack.c.b16 %v4336, %v4336
      %v4353 = vpack.c.b16 %v4337, %v4337
      %v4354 = vpack.c.b16 %v4338, %v4338
      %v4355 = vpack.c.b16 %v4339, %v4339
      %v4356 = vpack.c.b16 %v4340, %v4340
      %v4357 = vpack.c.b16 %v4341, %v4341
      %v4358 = vpack.c.b16 %v4342, %v4342
      %v4359 = vpack.c.b16 %v4343, %v4343
      %v4360 = vpack.c.b16 %v4344, %v4344
      %v4361 = vpack.c.b16 %v4345, %v4345
      %v4362 = vpack.c.b16 %v4346, %v4346
      %v4363 = vpack.c.b16 %v4347, %v4347
      %v4364 = vpack.c.b16 %v4348, %v4348
      %4381 = vst [vmem:[%s440] sm:$0xf] %v4349
      %4382 = vst [vmem:[%s440 + $0x4] sm:$0xf] %v4350
      %4383 = vst [vmem:[%s440 + $0x8] sm:$0xf] %v4351
      %4384 = vst [vmem:[%s440 + $0xc] sm:$0xf] %v4352
      %4385 = vst [vmem:[%s440 + $0x10] sm:$0xf] %v4353
      %4386 = vst [vmem:[%s440 + $0x14] sm:$0xf] %v4354
      %4387 = vst [vmem:[%s440 + $0x18] sm:$0xf] %v4355
      %4388 = vst [vmem:[%s440 + $0x1c] sm:$0xf] %v4356
      %4389 = vst [vmem:[%s440 + $0x20] sm:$0xf] %v4357
      %4390 = vst [vmem:[%s440 + $0x24] sm:$0xf] %v4358
      %4391 = vst [vmem:[%s440 + $0x28] sm:$0xf] %v4359
      %4392 = vst [vmem:[%s440 + $0x2c] sm:$0xf] %v4360
      %4393 = vst [vmem:[%s440 + $0x30] sm:$0xf] %v4361
      %4394 = vst [vmem:[%s440 + $0x34] sm:$0xf] %v4362
      %4395 = vst [vmem:[%s440 + $0x38] sm:$0xf] %v4363
      %4396 = vst [vmem:[%s440 + $0x3c] sm:$0xf] %v4364
      %p4397 = scmp.lt.s32.totalorder %s24, 1
      %s4398 = scalar_select %p4397, %s24, 1
      %s4399 = smul.addr %s4398, 16
      %s4400 = smul.addr %s4399, 4
      %s4401 = scalar_lea.vmem %s13, %s4400
      // Predicated region
      $region73: #{petnet_forward.4} parent=71 // pred_check
        %p4402 = pneg %p320
      $region74: #{petnet_forward.4} parent=71 // pred_check_branch
        %4404 = sbr.rel (%p4402) target = $region76
      $region75: #{petnet_forward.4} parent=71 // pred_region
        _
      $region76: #{petnet_forward.4} parent=71 // pred_fallthru
        _
    $region72: #{petnet_forward.4} parent=5 // pred_fallthru
      _
    %p4405 = scmp.le.s32.totalorder 2, %s19
    // Predicated region
    $region77: #{petnet_forward.4} parent=5 // pred_check
      %p4406 = pneg %p4405
    $region78: #{petnet_forward.4} parent=5 // pred_check_branch
      %4408 = sbr.rel (%p4406) target = $region80
    $region79: #{petnet_forward.4} parent=5 // pred_region
      %s4409 = ssub.s32 %s19, 2
      // Predicated region
      $region81: #{petnet_forward.4} parent=79 // pred_check
        %p4410 = pneg %p326
      $region82: #{petnet_forward.4} parent=79 // pred_check_branch
        %4412 = sbr.rel (%p4410) target = $region84
      $region83: #{petnet_forward.4} parent=79 // pred_region
        %p4413 = scmp.lt.s32.totalorder %s25, 1
        %s4414 = scalar_select %p4413, %s25, 1
        %s4415 = smul.addr %s4414, 16
        %s4416 = smul.addr %s4415, 4
        %s4417 = scalar_lea.vmem %s13, %s4416
      $region84: #{petnet_forward.4} parent=79 // pred_fallthru
        _
    $region80: #{petnet_forward.4} parent=5 // pred_fallthru
      _
  $region6: #{petnet_forward.4} parent=0 // loop_footer
    %s23 = sadd.s32 1, %s19
  $region7: #{petnet_forward.4} parent=0 // loop_footer_branch
    %18 = sbr.rel target = $region3
  $region8: #{petnet_forward.4} parent=0 // loop_exit
    _

</llo_original>
